<compile_context>
chip_gen: v7x
topology: tpu7x:2x2x1
jax: 0.10.0
libtpu: 0.0.40
codegen_flags: <defaults>
</compile_context>

<pallas_src>
import numpy as np
import jax
import jax.numpy as jnp
from jax.experimental import pallas as pl
from jax.experimental.pallas import tpu as pltpu

# ----------------------------------------------------------------------------
# Static structure of the module
# ----------------------------------------------------------------------------
OFFSETS = [0, 99, 198, 270, 336]
DIMS = [(9, 11), (9, 11), (9, 8), (6, 11)]
N_CHUNKS = 9
CHUNK = 336
N_FEAT = N_CHUNKS * CHUNK          # 3024
N_PAD = 3072                       # 24 * 128 : lane-aligned compute width
PAD_W = N_PAD - N_FEAT             # 48 pad columns (unique segment ids)
SHIFTS = (1, 2, 4, 8)              # doubling offsets; 1+2+4+8+1 >= max width 11


def _build_masks():
    """Host-precomputed segment adjacency masks for the doubling scans."""
    # segment id = segment start column; pad columns keep their own unique id.
    seg = np.arange(N_PAD, dtype=np.int64)
    for i in range(N_CHUNKS):
        for j in range(4):
            rows, width = DIMS[j]
            for r in range(rows):
                s = i * CHUNK + OFFSETS[j] + r * width
                seg[s:s + width] = s
    add_rows, mul_rows = [], []
    # rows 0..3: scan A partner at lane i-d   (matches pltpu.roll(x, +d))
    # rows 4..7: scan B partner at lane i+d   (matches pltpu.roll(x, N_PAD-d))
    for sgn in (+1, -1):
        for d in SHIFTS:
            same = np.roll(seg, sgn * d) == seg
            mul_rows.append(same.astype(np.float32))
            add_rows.append(np.where(same, 0.0, -np.inf).astype(np.float32))
    return np.stack(add_rows), np.stack(mul_rows)      # each (8, N_PAD) f32


_MASK_ADD_NP, _MASK_MUL_NP = _build_masks()
_MASK_ADD = jnp.asarray(_MASK_ADD_NP)   # 0 / -inf  (max scan)
_MASK_MUL = jnp.asarray(_MASK_MUL_NP)   # 1 / 0     (sum scan)


# ----------------------------------------------------------------------------
# Pallas kernel: segmented softmax over (TB, 3024) lane-dense blocks
# ----------------------------------------------------------------------------
def _seg_softmax_kernel(add_ref, mul_ref, x_ref, o_ref, xp_ref):
    tb = x_ref.shape[0]

    # Stage the (tb, 3024) block into the 128-aligned (tb, 3072) scratch so
    # every roll below runs on fully populated lane tiles; zero the pad tail
    # so the arithmetic masks never touch non-finite data.
    xp_ref[:, pl.ds(0, N_FEAT)] = x_ref[...].astype(jnp.float32)
    xp_ref[:, pl.ds(N_FEAT, PAD_W)] = jnp.zeros((tb, PAD_W), jnp.float32)
    x = xp_ref[...]                                   # (tb, 3072) f32

    add_m = add_ref[...]                              # (8, 3072) resident
    mul_m = mul_ref[...]                              # (8, 3072) resident

    def fwd(a, d):        # lane i <- lane i-d   (np.roll convention)
        return pltpu.roll(a, shift=d, axis=1)

    def bwd(a, d):        # lane i <- lane i+d   (aligned width => same cost)
        return pltpu.roll(a, shift=N_PAD - d, axis=1)

    # --- segmented max: masked doubling scan in both directions -------------
    ma = x
    mb = x
    for t, d in enumerate(SHIFTS):
        ma = jnp.maximum(ma, fwd(ma, d) + add_m[t:t + 1, :])
        mb = jnp.maximum(mb, bwd(mb, d) + add_m[t + 4:t + 5, :])
    seg_max = jnp.maximum(ma, mb)                     # true per-segment max

    e = jnp.exp(x - seg_max)                          # in (0, 1], no overflow

    # --- segmented sum of e: same scan with 0/1 multiplicative masks --------
    sa = e
    sb = e
    for t, d in enumerate(SHIFTS):
        sa = sa + fwd(sa, d) * mul_m[t:t + 1, :]
        sb = sb + bwd(sb, d) * mul_m[t + 4:t + 5, :]
    denom = sa + sb - e                               # >= 1 (own argmax term)

    y = e / denom                                     # exact divide (tolerance)
    o_ref[...] = y[:, :N_FEAT].astype(o_ref.dtype)


def my_softmax(x, *, block_batch=None, vmem_limit_bytes=None):
    """x: (B, 3024) -> (B, 3024), matching MySoftmax.forward."""
    B, F = x.shape
    assert F == N_FEAT, F

    kind = jax.devices()[0].device_kind.lower()
    big_vmem = ("v5" in kind) or ("v6" in kind)       # 128 MiB VMEM generations
    if block_batch is None:
        block_batch = 256 if big_vmem else 128        # v7x/unknown: 64 MiB VMEM
    if vmem_limit_bytes is None:
        vmem_limit_bytes = (96 if big_vmem else 40) * 1024 * 1024

    tb = min(block_batch, B)
    # v7x megacore: make sure the "parallel" grid has >= 2 steps when worth it.
    if (not big_vmem) and B > 8 and pl.cdiv(B, tb) < 2:
        tb = min(B, max(8, ((-(-B // 2)) + 7) // 8 * 8))
    grid = (pl.cdiv(B, tb),)

    return pl.pallas_call(
        _seg_softmax_kernel,
        out_shape=jax.ShapeDtypeStruct((B, N_FEAT), x.dtype),
        grid=grid,
        in_specs=[
            # static masks: constant block index -> DMA'd once, stay resident
            pl.BlockSpec((8, N_PAD), lambda b: (0, 0)),
            pl.BlockSpec((8, N_PAD), lambda b: (0, 0)),
            pl.BlockSpec((tb, N_FEAT), lambda b: (b, 0)),
        ],
        out_specs=pl.BlockSpec((tb, N_FEAT), lambda b: (b, 0)),
        scratch_shapes=[pltpu.VMEM((tb, N_PAD), jnp.float32)],
        compiler_params=pltpu.CompilerParams(
            dimension_semantics=("parallel",),
            vmem_limit_bytes=vmem_limit_bytes,
        ),
    )(_MASK_ADD, _MASK_MUL, x)


# ----------------------------------------------------------------------------
# Pure-JAX reference (mirrors the PyTorch forward exactly)
# ----------------------------------------------------------------------------
def reference(x):
    B = x.shape[0]
    pieces = []
    for i in range(N_CHUNKS):
        for j in range(4):
            lo = i * CHUNK + OFFSETS[j]
            hi = i * CHUNK + OFFSETS[j + 1]
            a = x[:, lo:hi].reshape(B, DIMS[j][0], DIMS[j][1])
            a = jax.nn.softmax(a, axis=2)
            pieces.append(a.reshape(B, DIMS[j][0] * DIMS[j][1]))
    return jnp.concatenate(pieces, axis=1)


if __name__ == "__main__":
    key = jax.random.PRNGKey(0)
    B = 2
    x = jax.random.normal(key, (B, N_FEAT), dtype=jnp.float32)

    out = jax.block_until_ready(my_softmax(x))
    ref = reference(x)

    assert out.shape == (B, N_FEAT), out.shape
    np.testing.assert_allclose(np.asarray(out), np.asarray(ref),
                               rtol=1e-5, atol=1e-6)
    print("KERNEL_OK")
</pallas_src>

<mosaic_0001>
module attributes {stable_mosaic.version = 11 : i64} {
  func.func @_seg_softmax_kernel(%arg0: i32, %arg1: memref<8x3072xf32, #tpu.memory_space<vmem>>, %arg2: memref<8x3072xf32, #tpu.memory_space<vmem>>, %arg3: memref<2x3024xf32, #tpu.memory_space<vmem>>, %arg4: memref<2x3024xf32, #tpu.memory_space<vmem>>, %arg5: memref<2x3072xf32, #tpu.memory_space<vmem>>) attributes {dimension_semantics = [#tpu.dimension_semantics<parallel>], iteration_bounds = array<i64: 1>, scalar_prefetch = 0 : i64, scratch_operands = 1 : i64, tpu.core_type = #tpu.core_type<tc>, window_params = [{pipeline_mode = #tpu.pipeline_mode<synchronous>, transform_indices = @transform_0, window_bounds = array<i64: 8, 3072>}, {pipeline_mode = #tpu.pipeline_mode<synchronous>, transform_indices = @transform_1, window_bounds = array<i64: 8, 3072>}, {transform_indices = @transform_2, window_bounds = array<i64: 2, 3024>}, {transform_indices = @transform_3, window_bounds = array<i64: 2, 3024>}]} {
    %c0 = arith.constant 0 : index
    %c0_0 = arith.constant 0 : index
    %0 = vector.load %arg3[%c0, %c0_0] : memref<2x3024xf32, #tpu.memory_space<vmem>>, vector<2x3024xf32>
    %c0_1 = arith.constant 0 : index
    %c0_2 = arith.constant 0 : index
    %1 = vector.load %arg5[%c0_1, %c0_2] : memref<2x3072xf32, #tpu.memory_space<vmem>>, vector<2x3024xf32>
    tpu.vector_store %arg5[%c0_1, %c0_2], %0 {strides = array<i32>} : memref<2x3072xf32, #tpu.memory_space<vmem>>, vector<2x3024xf32>,
    %cst = arith.constant 0.000000e+00 : f32
    %2 = vector.broadcast %cst : f32 to vector<2x48xf32>
    %c0_3 = arith.constant 0 : index
    %c3024 = arith.constant 3024 : index
    %3 = vector.load %arg5[%c0_3, %c3024] : memref<2x3072xf32, #tpu.memory_space<vmem>>, vector<2x48xf32>
    tpu.vector_store %arg5[%c0_3, %c3024], %2 {strides = array<i32>} : memref<2x3072xf32, #tpu.memory_space<vmem>>, vector<2x48xf32>,
    %c0_4 = arith.constant 0 : index
    %c0_5 = arith.constant 0 : index
    %4 = vector.load %arg5[%c0_4, %c0_5] : memref<2x3072xf32, #tpu.memory_space<vmem>>, vector<2x3072xf32>
    %c0_6 = arith.constant 0 : index
    %c0_7 = arith.constant 0 : index
    %5 = vector.load %arg1[%c0_6, %c0_7] : memref<8x3072xf32, #tpu.memory_space<vmem>>, vector<8x3072xf32>
    %c0_8 = arith.constant 0 : index
    %c0_9 = arith.constant 0 : index
    %6 = vector.load %arg2[%c0_8, %c0_9] : memref<8x3072xf32, #tpu.memory_space<vmem>>, vector<8x3072xf32>
    %c1_i32 = arith.constant 1 : i32
    %7 = tpu.dynamic_rotate %4 by %c1_i32 dim 1 : vector<2x3072xf32>, i32 -> vector<2x3072xf32>
    %8 = vector.extract_strided_slice %5 {offsets = [0, 0], sizes = [1, 3072], strides = [1, 1]} : vector<8x3072xf32> to vector<1x3072xf32>
    %9 = vector.broadcast %8 : vector<1x3072xf32> to vector<2x3072xf32>
    %10 = arith.addf %7, %9 : vector<2x3072xf32>
    %11 = arith.maximumf %4, %10 : vector<2x3072xf32>
    %c3071_i32 = arith.constant 3071 : i32
    %12 = tpu.dynamic_rotate %4 by %c3071_i32 dim 1 : vector<2x3072xf32>, i32 -> vector<2x3072xf32>
    %13 = vector.extract_strided_slice %5 {offsets = [4, 0], sizes = [1, 3072], strides = [1, 1]} : vector<8x3072xf32> to vector<1x3072xf32>
    %14 = vector.broadcast %13 : vector<1x3072xf32> to vector<2x3072xf32>
    %15 = arith.addf %12, %14 : vector<2x3072xf32>
    %16 = arith.maximumf %4, %15 : vector<2x3072xf32>
    %c2_i32 = arith.constant 2 : i32
    %17 = tpu.dynamic_rotate %11 by %c2_i32 dim 1 : vector<2x3072xf32>, i32 -> vector<2x3072xf32>
    %18 = vector.extract_strided_slice %5 {offsets = [1, 0], sizes = [1, 3072], strides = [1, 1]} : vector<8x3072xf32> to vector<1x3072xf32>
    %19 = vector.broadcast %18 : vector<1x3072xf32> to vector<2x3072xf32>
    %20 = arith.addf %17, %19 : vector<2x3072xf32>
    %21 = arith.maximumf %11, %20 : vector<2x3072xf32>
    %c3070_i32 = arith.constant 3070 : i32
    %22 = tpu.dynamic_rotate %16 by %c3070_i32 dim 1 : vector<2x3072xf32>, i32 -> vector<2x3072xf32>
    %23 = vector.extract_strided_slice %5 {offsets = [5, 0], sizes = [1, 3072], strides = [1, 1]} : vector<8x3072xf32> to vector<1x3072xf32>
    %24 = vector.broadcast %23 : vector<1x3072xf32> to vector<2x3072xf32>
    %25 = arith.addf %22, %24 : vector<2x3072xf32>
    %26 = arith.maximumf %16, %25 : vector<2x3072xf32>
    %c4_i32 = arith.constant 4 : i32
    %27 = tpu.dynamic_rotate %21 by %c4_i32 dim 1 : vector<2x3072xf32>, i32 -> vector<2x3072xf32>
    %28 = vector.extract_strided_slice %5 {offsets = [2, 0], sizes = [1, 3072], strides = [1, 1]} : vector<8x3072xf32> to vector<1x3072xf32>
    %29 = vector.broadcast %28 : vector<1x3072xf32> to vector<2x3072xf32>
    %30 = arith.addf %27, %29 : vector<2x3072xf32>
    %31 = arith.maximumf %21, %30 : vector<2x3072xf32>
    %c3068_i32 = arith.constant 3068 : i32
    %32 = tpu.dynamic_rotate %26 by %c3068_i32 dim 1 : vector<2x3072xf32>, i32 -> vector<2x3072xf32>
    %33 = vector.extract_strided_slice %5 {offsets = [6, 0], sizes = [1, 3072], strides = [1, 1]} : vector<8x3072xf32> to vector<1x3072xf32>
    %34 = vector.broadcast %33 : vector<1x3072xf32> to vector<2x3072xf32>
    %35 = arith.addf %32, %34 : vector<2x3072xf32>
    %36 = arith.maximumf %26, %35 : vector<2x3072xf32>
    %c8_i32 = arith.constant 8 : i32
    %37 = tpu.dynamic_rotate %31 by %c8_i32 dim 1 : vector<2x3072xf32>, i32 -> vector<2x3072xf32>
    %38 = vector.extract_strided_slice %5 {offsets = [3, 0], sizes = [1, 3072], strides = [1, 1]} : vector<8x3072xf32> to vector<1x3072xf32>
    %39 = vector.broadcast %38 : vector<1x3072xf32> to vector<2x3072xf32>
    %40 = arith.addf %37, %39 : vector<2x3072xf32>
    %41 = arith.maximumf %31, %40 : vector<2x3072xf32>
    %c3064_i32 = arith.constant 3064 : i32
    %42 = tpu.dynamic_rotate %36 by %c3064_i32 dim 1 : vector<2x3072xf32>, i32 -> vector<2x3072xf32>
    %43 = vector.extract_strided_slice %5 {offsets = [7, 0], sizes = [1, 3072], strides = [1, 1]} : vector<8x3072xf32> to vector<1x3072xf32>
    %44 = vector.broadcast %43 : vector<1x3072xf32> to vector<2x3072xf32>
    %45 = arith.addf %42, %44 : vector<2x3072xf32>
    %46 = arith.maximumf %36, %45 : vector<2x3072xf32>
    %47 = arith.maximumf %41, %46 : vector<2x3072xf32>
    %48 = arith.subf %4, %47 : vector<2x3072xf32>
    %49 = math.exp %48 : vector<2x3072xf32>
    %c1_i32_10 = arith.constant 1 : i32
    %50 = tpu.dynamic_rotate %49 by %c1_i32_10 dim 1 : vector<2x3072xf32>, i32 -> vector<2x3072xf32>
    %51 = vector.extract_strided_slice %6 {offsets = [0, 0], sizes = [1, 3072], strides = [1, 1]} : vector<8x3072xf32> to vector<1x3072xf32>
    %52 = vector.broadcast %51 : vector<1x3072xf32> to vector<2x3072xf32>
    %53 = arith.mulf %50, %52 : vector<2x3072xf32>
    %54 = arith.addf %49, %53 : vector<2x3072xf32>
    %c3071_i32_11 = arith.constant 3071 : i32
    %55 = tpu.dynamic_rotate %49 by %c3071_i32_11 dim 1 : vector<2x3072xf32>, i32 -> vector<2x3072xf32>
    %56 = vector.extract_strided_slice %6 {offsets = [4, 0], sizes = [1, 3072], strides = [1, 1]} : vector<8x3072xf32> to vector<1x3072xf32>
    %57 = vector.broadcast %56 : vector<1x3072xf32> to vector<2x3072xf32>
    %58 = arith.mulf %55, %57 : vector<2x3072xf32>
    %59 = arith.addf %49, %58 : vector<2x3072xf32>
    %c2_i32_12 = arith.constant 2 : i32
    %60 = tpu.dynamic_rotate %54 by %c2_i32_12 dim 1 : vector<2x3072xf32>, i32 -> vector<2x3072xf32>
    %61 = vector.extract_strided_slice %6 {offsets = [1, 0], sizes = [1, 3072], strides = [1, 1]} : vector<8x3072xf32> to vector<1x3072xf32>
    %62 = vector.broadcast %61 : vector<1x3072xf32> to vector<2x3072xf32>
    %63 = arith.mulf %60, %62 : vector<2x3072xf32>
    %64 = arith.addf %54, %63 : vector<2x3072xf32>
    %c3070_i32_13 = arith.constant 3070 : i32
    %65 = tpu.dynamic_rotate %59 by %c3070_i32_13 dim 1 : vector<2x3072xf32>, i32 -> vector<2x3072xf32>
    %66 = vector.extract_strided_slice %6 {offsets = [5, 0], sizes = [1, 3072], strides = [1, 1]} : vector<8x3072xf32> to vector<1x3072xf32>
    %67 = vector.broadcast %66 : vector<1x3072xf32> to vector<2x3072xf32>
    %68 = arith.mulf %65, %67 : vector<2x3072xf32>
    %69 = arith.addf %59, %68 : vector<2x3072xf32>
    %c4_i32_14 = arith.constant 4 : i32
    %70 = tpu.dynamic_rotate %64 by %c4_i32_14 dim 1 : vector<2x3072xf32>, i32 -> vector<2x3072xf32>
    %71 = vector.extract_strided_slice %6 {offsets = [2, 0], sizes = [1, 3072], strides = [1, 1]} : vector<8x3072xf32> to vector<1x3072xf32>
    %72 = vector.broadcast %71 : vector<1x3072xf32> to vector<2x3072xf32>
    %73 = arith.mulf %70, %72 : vector<2x3072xf32>
    %74 = arith.addf %64, %73 : vector<2x3072xf32>
    %c3068_i32_15 = arith.constant 3068 : i32
    %75 = tpu.dynamic_rotate %69 by %c3068_i32_15 dim 1 : vector<2x3072xf32>, i32 -> vector<2x3072xf32>
    %76 = vector.extract_strided_slice %6 {offsets = [6, 0], sizes = [1, 3072], strides = [1, 1]} : vector<8x3072xf32> to vector<1x3072xf32>
    %77 = vector.broadcast %76 : vector<1x3072xf32> to vector<2x3072xf32>
    %78 = arith.mulf %75, %77 : vector<2x3072xf32>
    %79 = arith.addf %69, %78 : vector<2x3072xf32>
    %c8_i32_16 = arith.constant 8 : i32
    %80 = tpu.dynamic_rotate %74 by %c8_i32_16 dim 1 : vector<2x3072xf32>, i32 -> vector<2x3072xf32>
    %81 = vector.extract_strided_slice %6 {offsets = [3, 0], sizes = [1, 3072], strides = [1, 1]} : vector<8x3072xf32> to vector<1x3072xf32>
    %82 = vector.broadcast %81 : vector<1x3072xf32> to vector<2x3072xf32>
    %83 = arith.mulf %80, %82 : vector<2x3072xf32>
    %84 = arith.addf %74, %83 : vector<2x3072xf32>
    %c3064_i32_17 = arith.constant 3064 : i32
    %85 = tpu.dynamic_rotate %79 by %c3064_i32_17 dim 1 : vector<2x3072xf32>, i32 -> vector<2x3072xf32>
    %86 = vector.extract_strided_slice %6 {offsets = [7, 0], sizes = [1, 3072], strides = [1, 1]} : vector<8x3072xf32> to vector<1x3072xf32>
    %87 = vector.broadcast %86 : vector<1x3072xf32> to vector<2x3072xf32>
    %88 = arith.mulf %85, %87 : vector<2x3072xf32>
    %89 = arith.addf %79, %88 : vector<2x3072xf32>
    %90 = arith.addf %84, %89 : vector<2x3072xf32>
    %91 = arith.subf %90, %49 : vector<2x3072xf32>
    %92 = arith.divf %49, %91 : vector<2x3072xf32>
    %93 = vector.extract_strided_slice %92 {offsets = [0, 0], sizes = [2, 3024], strides = [1, 1]} : vector<2x3072xf32> to vector<2x3024xf32>
    %c0_18 = arith.constant 0 : index
    %c0_19 = arith.constant 0 : index
    %94 = vector.load %arg4[%c0_18, %c0_19] : memref<2x3024xf32, #tpu.memory_space<vmem>>, vector<2x3024xf32>
    tpu.vector_store %arg4[%c0_18, %c0_19], %93 {strides = array<i32>} : memref<2x3024xf32, #tpu.memory_space<vmem>>, vector<2x3024xf32>,
    return
  }
  func.func @transform_0(%arg0: i32) -> (i32, i32) {
    %c0_i32 = arith.constant 0 : i32
    %c0_i32_0 = arith.constant 0 : i32
    %c0_i32_1 = arith.constant 0 : i32
    return %c0_i32, %c0_i32_0 : i32, i32
  }
  func.func @transform_1(%arg0: i32) -> (i32, i32) {
    %c0_i32 = arith.constant 0 : i32
    %c0_i32_0 = arith.constant 0 : i32
    %c0_i32_1 = arith.constant 0 : i32
    return %c0_i32, %c0_i32_0 : i32, i32
  }
  func.func @transform_2(%arg0: i32) -> (i32, i32) {
    %c0_i32 = arith.constant 0 : i32
    %c0_i32_0 = arith.constant 0 : i32
    return %arg0, %c0_i32 : i32, i32
  }
  func.func @transform_3(%arg0: i32) -> (i32, i32) {
    %c0_i32 = arith.constant 0 : i32
    %c0_i32_0 = arith.constant 0 : i32
    return %arg0, %c0_i32 : i32, i32
  }
}

</mosaic_0001>

<llo_original>
// kernel: tpu_custom_call.1
$region0: #{tpu_custom_call.1}
  #allocation0 [shape = 'u32[]', space=smem, size = 0x4, offset = 0x4, fixed_abs, tag = 'smem constant byte address 0x4 - core index']
  #allocation1 [shape = 'u32[144,128]{1,0:T(1,128)}', space=vmem, size = 0x12000, scoped, tag = 'internal scratch']
  #allocation2 [shape = 'f32[2,3072]{1,0:T(2,128)}', space=vmem, size = 0x6000, scoped, tag = 'scratch operand']
  %s0 = inlined_call_operand.hbm [shape: f32[8,3072], index: 0, kind: input, shape index: {}]
  %s1 = inlined_call_operand.hbm [shape: f32[8,3072], index: 1, kind: input, shape index: {}]
  %s2 = inlined_call_operand.hbm [shape: f32[2,3024], index: 2, kind: input, shape index: {}]
  %s3 = inlined_call_operand.hbm [shape: f32[2,3024], index: 3, kind: output, shape index: {}]
  %s4 = sld [smem:[#allocation0]]
  $region34: #{tpu_custom_call.1} parent=0
    _
  %s6 = ssub.s32 1, %s4
  %s7 = scalar_select 0, %s6, %s4
  $region1: #{tpu_custom_call.1} parent=0
    #allocation3 [shape = 'u8[98304]{0}', space=vmem, size = 0x18000, scoped, tag = 'input window, operand 0, single buffered']
    #allocation4 [shape = 's32[1]{0}', space=sflag, size = 0x4, scoped, tag = 'scoped memory for tpu_custom_call.1']
    #allocation5 [shape = 's32[1]{0}', space=sflag, size = 0x4, scoped, tag = 'scoped memory for tpu_custom_call.1']
    #allocation6 [shape = 'u8[98304]{0}', space=vmem, size = 0x18000, scoped, tag = 'input window, operand 1, single buffered']
    #allocation7 [shape = 's32[1]{0}', space=sflag, size = 0x4, scoped, tag = 'scoped memory for tpu_custom_call.1']
    #allocation8 [shape = 'u8[24576]{0}', space=vmem, size = 0x6000, scoped, tag = 'input window, operand 2, single buffered']
    #allocation9 [shape = 'u8[24576]{0}', space=vmem, size = 0x6000, scoped, tag = 'output window, operand 0, single buffered']
    %8 = vsyncpa [#allocation4], 0
    %9 = vsyncpa [#allocation7], 0
    %10 = vsyncpa [#allocation5], 0
    // Predicated region
    $region2: #{tpu_custom_call.1} parent=1 // pred_check
      _
    $region3: #{tpu_custom_call.1} parent=1 // pred_check_branch
      %12 = sbr.rel (0) target = $region5
    $region4: #{tpu_custom_call.1} parent=1 // pred_region
      %s14 = ssub.s32 3072, 3072
      %15 = vsyncadd [#allocation4], %s14
      %s17 = sshll.u32 [#allocation3], 4
      %s18 = int_to_ptr.vmem [resolvable:$true] %s17
      %20 = dma.hbm_to_vmem [thread:$0]  %s0, 3072, %s18, [#allocation4]
    $region5: #{tpu_custom_call.1} parent=1 // pred_fallthru
      _
    // Predicated region
    $region6: #{tpu_custom_call.1} parent=1 // pred_check
      _
    $region7: #{tpu_custom_call.1} parent=1 // pred_check_branch
      %22 = sbr.rel (0) target = $region9
    $region8: #{tpu_custom_call.1} parent=1 // pred_region
      %s24 = ssub.s32 3072, 3072
      %25 = vsyncadd [#allocation7], %s24
      %s27 = sshll.u32 [#allocation6], 4
      %s28 = int_to_ptr.vmem [resolvable:$true] %s27
      %30 = dma.hbm_to_vmem [thread:$0]  %s1, 3072, %s28, [#allocation7]
    $region9: #{tpu_custom_call.1} parent=1 // pred_fallthru
      _
    // Predicated region
    $region10: #{tpu_custom_call.1} parent=1 // pred_check
      _
    $region11: #{tpu_custom_call.1} parent=1 // pred_check_branch
      %32 = sbr.rel (0) target = $region13
    $region12: #{tpu_custom_call.1} parent=1 // pred_region
      %s34 = ssub.s32 768, 768
      %35 = vsyncadd [#allocation7], %s34
      %s37 = sshll.u32 [#allocation8], 4
      %s38 = int_to_ptr.vmem [resolvable:$true] %s37
      %40 = dma.hbm_to_vmem [thread:$0]  %s2, 768, %s38, [#allocation7]
    $region13: #{tpu_custom_call.1} parent=1 // pred_fallthru
      _
    // Predicated region
    $region14: #{tpu_custom_call.1} parent=1 // pred_check
      _
    $region15: #{tpu_custom_call.1} parent=1 // pred_check_branch
      %42 = sbr.rel (0) target = $region17
    $region16: #{tpu_custom_call.1} parent=1 // pred_region
      %43 = dma.done [#allocation4], 3072
    $region17: #{tpu_custom_call.1} parent=1 // pred_fallthru
      _
    // Predicated region
    $region18: #{tpu_custom_call.1} parent=1 // pred_check
      _
    $region19: #{tpu_custom_call.1} parent=1 // pred_check_branch
      %45 = sbr.rel (0) target = $region21
    $region20: #{tpu_custom_call.1} parent=1 // pred_region
      %46 = dma.done [#allocation7], 3072
    $region21: #{tpu_custom_call.1} parent=1 // pred_fallthru
      _
    // Predicated region
    $region22: #{tpu_custom_call.1} parent=1 // pred_check
      _
    $region23: #{tpu_custom_call.1} parent=1 // pred_check_branch
      %48 = sbr.rel (0) target = $region25
    $region24: #{tpu_custom_call.1} parent=1 // pred_region
      %49 = dma.done [#allocation7], 768
    $region25: #{tpu_custom_call.1} parent=1 // pred_fallthru
      _
    %v50 = vld [vmem:[#allocation8] sm:$0xff]
    %v51 = vld [vmem:[#allocation8 + $0x8] sm:$0xff]
    %v52 = vld [vmem:[#allocation8 + $0x10] sm:$0xff]
    %v53 = vld [vmem:[#allocation8 + $0x18] sm:$0xff]
    %v54 = vld [vmem:[#allocation8 + $0x20] sm:$0xff]
    %v55 = vld [vmem:[#allocation8 + $0x28] sm:$0xff]
    %56 = vst [vmem:[#allocation2] sm:$0xff] %v50
    %57 = vst [vmem:[#allocation2 + $0x8] sm:$0xff] %v51
    %58 = vst [vmem:[#allocation2 + $0x10] sm:$0xff] %v52
    %59 = vst [vmem:[#allocation2 + $0x18] sm:$0xff] %v53
    %60 = vst [vmem:[#allocation2 + $0x20] sm:$0xff] %v54
    %vm61 = vcmask 1041408
    %vm62 = vcmask 1043458
    %vm63 = vmor %vm62, %vm61
    %vm64 = vcmask 1045508
    %vm65 = vmor %vm64, %vm63
    %vm66 = vcmask 654342
    %vm67 = vmor %vm66, %vm65
    %68 = vst.msk [vmem:[#allocation2 + $0x28] sm:$0xff] %vm67, %v55
    %vm69 = vcmask 1042048
    %70 = vst.msk [vmem:[#allocation2 + $0x2e] sm:$0x3] %vm69, 0.0
    %v71 = vld [vmem:[#allocation2] sm:$0xff]
    %v72 = vld [vmem:[#allocation2 + $0x8] sm:$0xff]
    %v73 = vld [vmem:[#allocation2 + $0x10] sm:$0xff]
    %v74 = vld [vmem:[#allocation2 + $0x18] sm:$0xff]
    %v75 = vld [vmem:[#allocation2 + $0x20] sm:$0xff]
    %v76 = vld [vmem:[#allocation2 + $0x28] sm:$0xff]
    %v77 = vld [vmem:[#allocation3] sm:$0xff]
    %v78 = vld [vmem:[#allocation3 + $0x8] sm:$0xff]
    %v79 = vld [vmem:[#allocation3 + $0x10] sm:$0xff]
    %v80 = vld [vmem:[#allocation3 + $0x18] sm:$0xff]
    %v81 = vld [vmem:[#allocation3 + $0x20] sm:$0xff]
    %v82 = vld [vmem:[#allocation3 + $0x28] sm:$0xff]
    %v83 = vld [vmem:[#allocation3 + $0x30] sm:$0xff]
    %v84 = vld [vmem:[#allocation3 + $0x38] sm:$0xff]
    %v85 = vld [vmem:[#allocation3 + $0x40] sm:$0xff]
    %v86 = vld [vmem:[#allocation3 + $0x48] sm:$0xff]
    %v87 = vld [vmem:[#allocation3 + $0x50] sm:$0xff]
    %v88 = vld [vmem:[#allocation3 + $0x58] sm:$0xff]
    %v89 = vld [vmem:[#allocation3 + $0x60] sm:$0xff]
    %v90 = vld [vmem:[#allocation3 + $0x68] sm:$0xff]
    %v91 = vld [vmem:[#allocation3 + $0x70] sm:$0xff]
    %v92 = vld [vmem:[#allocation3 + $0x78] sm:$0xff]
    %v93 = vld [vmem:[#allocation3 + $0x80] sm:$0xff]
    %v94 = vld [vmem:[#allocation3 + $0x88] sm:$0xff]
    %v95 = vld [vmem:[#allocation3 + $0x90] sm:$0xff]
    %v96 = vld [vmem:[#allocation3 + $0x98] sm:$0xff]
    %v97 = vld [vmem:[#allocation3 + $0xa0] sm:$0xff]
    %v98 = vld [vmem:[#allocation3 + $0xa8] sm:$0xff]
    %v99 = vld [vmem:[#allocation3 + $0xb0] sm:$0xff]
    %v100 = vld [vmem:[#allocation3 + $0xb8] sm:$0xff]
    %v101 = vld [vmem:[#allocation6] sm:$0xff]
    %v102 = vld [vmem:[#allocation6 + $0x8] sm:$0xff]
    %v103 = vld [vmem:[#allocation6 + $0x10] sm:$0xff]
    %v104 = vld [vmem:[#allocation6 + $0x18] sm:$0xff]
    %v105 = vld [vmem:[#allocation6 + $0x20] sm:$0xff]
    %v106 = vld [vmem:[#allocation6 + $0x28] sm:$0xff]
    %v107 = vld [vmem:[#allocation6 + $0x30] sm:$0xff]
    %v108 = vld [vmem:[#allocation6 + $0x38] sm:$0xff]
    %v109 = vld [vmem:[#allocation6 + $0x40] sm:$0xff]
    %v110 = vld [vmem:[#allocation6 + $0x48] sm:$0xff]
    %v111 = vld [vmem:[#allocation6 + $0x50] sm:$0xff]
    %v112 = vld [vmem:[#allocation6 + $0x58] sm:$0xff]
    %v113 = vld [vmem:[#allocation6 + $0x60] sm:$0xff]
    %v114 = vld [vmem:[#allocation6 + $0x68] sm:$0xff]
    %v115 = vld [vmem:[#allocation6 + $0x70] sm:$0xff]
    %v116 = vld [vmem:[#allocation6 + $0x78] sm:$0xff]
    %v117 = vld [vmem:[#allocation6 + $0x80] sm:$0xff]
    %v118 = vld [vmem:[#allocation6 + $0x88] sm:$0xff]
    %v119 = vld [vmem:[#allocation6 + $0x90] sm:$0xff]
    %v120 = vld [vmem:[#allocation6 + $0x98] sm:$0xff]
    %v121 = vld [vmem:[#allocation6 + $0xa0] sm:$0xff]
    %v122 = vld [vmem:[#allocation6 + $0xa8] sm:$0xff]
    %v123 = vld [vmem:[#allocation6 + $0xb0] sm:$0xff]
    %v124 = vld [vmem:[#allocation6 + $0xb8] sm:$0xff]
    %v131 = vcombine.high %v71, %v71
    %v133 = vunpack.c.l.s4 1983009808
    %v134 = vunpack.c.0.s8 %v133
    %v135 = vlaneseq
    %v136 = vshrl.u32 %v135, 7
    %v137 = vsub.s32 %v134, %v136
    %v138 = vrot.slane %v71, %v137
    %v140 = vunpack.c.l.s4 1983009808
    %v141 = vunpack.c.0.s8 %v140
    %v142 = vlaneseq
    %v143 = vshrl.u32 %v142, 7
    %v144 = vsub.s32 %v141, %v143
    %v145 = vrot.slane %v131, %v144
    %v146 = vcombine.high %v138, %v138
    %v147 = vcombine.high %v145, %v145
    %v148 = vcombine.high %v72, %v72
    %v150 = vunpack.c.l.s4 1983009808
    %v151 = vunpack.c.0.s8 %v150
    %v152 = vlaneseq
    %v153 = vshrl.u32 %v152, 7
    %v154 = vsub.s32 %v151, %v153
    %v155 = vrot.slane %v72, %v154
    %v157 = vunpack.c.l.s4 1983009808
    %v158 = vunpack.c.0.s8 %v157
    %v159 = vlaneseq
    %v160 = vshrl.u32 %v159, 7
    %v161 = vsub.s32 %v158, %v160
    %v162 = vrot.slane %v148, %v161
    %v163 = vcombine.high %v155, %v155
    %v164 = vcombine.high %v162, %v162
    %v165 = vcombine.high %v73, %v73
    %v167 = vunpack.c.l.s4 1983009808
    %v168 = vunpack.c.0.s8 %v167
    %v169 = vlaneseq
    %v170 = vshrl.u32 %v169, 7
    %v171 = vsub.s32 %v168, %v170
    %v172 = vrot.slane %v73, %v171
    %v174 = vunpack.c.l.s4 1983009808
    %v175 = vunpack.c.0.s8 %v174
    %v176 = vlaneseq
    %v177 = vshrl.u32 %v176, 7
    %v178 = vsub.s32 %v175, %v177
    %v179 = vrot.slane %v165, %v178
    %v180 = vcombine.high %v172, %v172
    %v181 = vcombine.high %v179, %v179
    %v182 = vcombine.high %v74, %v74
    %v184 = vunpack.c.l.s4 1983009808
    %v185 = vunpack.c.0.s8 %v184
    %v186 = vlaneseq
    %v187 = vshrl.u32 %v186, 7
    %v188 = vsub.s32 %v185, %v187
    %v189 = vrot.slane %v74, %v188
    %v191 = vunpack.c.l.s4 1983009808
    %v192 = vunpack.c.0.s8 %v191
    %v193 = vlaneseq
    %v194 = vshrl.u32 %v193, 7
    %v195 = vsub.s32 %v192, %v194
    %v196 = vrot.slane %v182, %v195
    %v197 = vcombine.high %v189, %v189
    %v198 = vcombine.high %v196, %v196
    %v199 = vcombine.high %v75, %v75
    %v201 = vunpack.c.l.s4 1983009808
    %v202 = vunpack.c.0.s8 %v201
    %v203 = vlaneseq
    %v204 = vshrl.u32 %v203, 7
    %v205 = vsub.s32 %v202, %v204
    %v206 = vrot.slane %v75, %v205
    %v208 = vunpack.c.l.s4 1983009808
    %v209 = vunpack.c.0.s8 %v208
    %v210 = vlaneseq
    %v211 = vshrl.u32 %v210, 7
    %v212 = vsub.s32 %v209, %v211
    %v213 = vrot.slane %v199, %v212
    %v214 = vcombine.high %v206, %v206
    %v215 = vcombine.high %v213, %v213
    %v216 = vcombine.high %v76, %v76
    %v218 = vunpack.c.l.s4 1983009808
    %v219 = vunpack.c.0.s8 %v218
    %v220 = vlaneseq
    %v221 = vshrl.u32 %v220, 7
    %v222 = vsub.s32 %v219, %v221
    %v223 = vrot.slane %v76, %v222
    %v225 = vunpack.c.l.s4 1983009808
    %v226 = vunpack.c.0.s8 %v225
    %v227 = vlaneseq
    %v228 = vshrl.u32 %v227, 7
    %v229 = vsub.s32 %v226, %v228
    %v230 = vrot.slane %v216, %v229
    %v231 = vcombine.high %v223, %v223
    %v232 = vcombine.high %v230, %v230
    %257 = vrot.lane.b32.xlu0 %v138, 1
    %v258 = vpop.permute.xlu0 %257
    %259 = vrot.lane.b32.xlu0 %v146, 1
    %v260 = vpop.permute.xlu0 %259
    %261 = vrot.lane.b32.xlu0 %v145, 1
    %v262 = vpop.permute.xlu0 %261
    %263 = vrot.lane.b32.xlu0 %v147, 1
    %v264 = vpop.permute.xlu0 %263
    %265 = vrot.lane.b32.xlu0 %v155, 1
    %v266 = vpop.permute.xlu0 %265
    %267 = vrot.lane.b32.xlu0 %v163, 1
    %v268 = vpop.permute.xlu0 %267
    %269 = vrot.lane.b32.xlu0 %v162, 1
    %v270 = vpop.permute.xlu0 %269
    %271 = vrot.lane.b32.xlu0 %v164, 1
    %v272 = vpop.permute.xlu0 %271
    %273 = vrot.lane.b32.xlu0 %v172, 1
    %v274 = vpop.permute.xlu0 %273
    %275 = vrot.lane.b32.xlu0 %v180, 1
    %v276 = vpop.permute.xlu0 %275
    %277 = vrot.lane.b32.xlu0 %v179, 1
    %v278 = vpop.permute.xlu0 %277
    %279 = vrot.lane.b32.xlu0 %v181, 1
    %v280 = vpop.permute.xlu0 %279
    %281 = vrot.lane.b32.xlu0 %v189, 1
    %v282 = vpop.permute.xlu0 %281
    %283 = vrot.lane.b32.xlu0 %v197, 1
    %v284 = vpop.permute.xlu0 %283
    %285 = vrot.lane.b32.xlu0 %v196, 1
    %v286 = vpop.permute.xlu0 %285
    %287 = vrot.lane.b32.xlu0 %v198, 1
    %v288 = vpop.permute.xlu0 %287
    %289 = vrot.lane.b32.xlu0 %v206, 1
    %v290 = vpop.permute.xlu0 %289
    %291 = vrot.lane.b32.xlu0 %v214, 1
    %v292 = vpop.permute.xlu0 %291
    %293 = vrot.lane.b32.xlu0 %v213, 1
    %v294 = vpop.permute.xlu0 %293
    %295 = vrot.lane.b32.xlu0 %v215, 1
    %v296 = vpop.permute.xlu0 %295
    %297 = vrot.lane.b32.xlu0 %v223, 1
    %v298 = vpop.permute.xlu0 %297
    %299 = vrot.lane.b32.xlu0 %v231, 1
    %v300 = vpop.permute.xlu0 %299
    %301 = vrot.lane.b32.xlu0 %v230, 1
    %v302 = vpop.permute.xlu0 %301
    %303 = vrot.lane.b32.xlu0 %v232, 1
    %v304 = vpop.permute.xlu0 %303
    %v305 = vlaneseq
    %v306 = vand.u32 %v305, 127
    %vm307 = vcmp.lt.s32.totalorder %v306, 1
    %v308 = vsel %vm307, %v302, %v304
    %v309 = vsel %vm307, %v300, %v302
    %v310 = vsel %vm307, %v298, %v300
    %v311 = vsel %vm307, %v296, %v298
    %v312 = vsel %vm307, %v294, %v296
    %v313 = vsel %vm307, %v292, %v294
    %v314 = vsel %vm307, %v290, %v292
    %v315 = vsel %vm307, %v288, %v290
    %v316 = vsel %vm307, %v286, %v288
    %v317 = vsel %vm307, %v284, %v286
    %v318 = vsel %vm307, %v282, %v284
    %v319 = vsel %vm307, %v280, %v282
    %v320 = vsel %vm307, %v278, %v280
    %v321 = vsel %vm307, %v276, %v278
    %v322 = vsel %vm307, %v274, %v276
    %v323 = vsel %vm307, %v272, %v274
    %v324 = vsel %vm307, %v270, %v272
    %v325 = vsel %vm307, %v268, %v270
    %v326 = vsel %vm307, %v266, %v268
    %v327 = vsel %vm307, %v264, %v266
    %v328 = vsel %vm307, %v262, %v264
    %v329 = vsel %vm307, %v260, %v262
    %v330 = vsel %vm307, %v258, %v260
    %v331 = vsel %vm307, %v304, %v258
    %v332 = vlaneseq
    %v333 = vshrl.u32 %v332, 7
    %v334 = vsub.s32 0, %v333
    %v335 = vrot.slane %v77, %v334
    %v336 = vlaneseq
    %v337 = vshrl.u32 %v336, 7
    %v338 = vsub.s32 0, %v337
    %v339 = vrot.slane %v78, %v338
    %v340 = vlaneseq
    %v341 = vshrl.u32 %v340, 7
    %v342 = vsub.s32 0, %v341
    %v343 = vrot.slane %v79, %v342
    %v344 = vlaneseq
    %v345 = vshrl.u32 %v344, 7
    %v346 = vsub.s32 0, %v345
    %v347 = vrot.slane %v80, %v346
    %v348 = vlaneseq
    %v349 = vshrl.u32 %v348, 7
    %v350 = vsub.s32 0, %v349
    %v351 = vrot.slane %v81, %v350
    %v352 = vlaneseq
    %v353 = vshrl.u32 %v352, 7
    %v354 = vsub.s32 0, %v353
    %v355 = vrot.slane %v82, %v354
    %v356 = vlaneseq
    %v357 = vshrl.u32 %v356, 7
    %v358 = vsub.s32 0, %v357
    %v359 = vrot.slane %v83, %v358
    %v360 = vlaneseq
    %v361 = vshrl.u32 %v360, 7
    %v362 = vsub.s32 0, %v361
    %v363 = vrot.slane %v84, %v362
    %v364 = vlaneseq
    %v365 = vshrl.u32 %v364, 7
    %v366 = vsub.s32 0, %v365
    %v367 = vrot.slane %v85, %v366
    %v368 = vlaneseq
    %v369 = vshrl.u32 %v368, 7
    %v370 = vsub.s32 0, %v369
    %v371 = vrot.slane %v86, %v370
    %v372 = vlaneseq
    %v373 = vshrl.u32 %v372, 7
    %v374 = vsub.s32 0, %v373
    %v375 = vrot.slane %v87, %v374
    %v376 = vlaneseq
    %v377 = vshrl.u32 %v376, 7
    %v378 = vsub.s32 0, %v377
    %v379 = vrot.slane %v88, %v378
    %v380 = vlaneseq
    %v381 = vshrl.u32 %v380, 7
    %v382 = vsub.s32 0, %v381
    %v383 = vrot.slane %v89, %v382
    %v384 = vlaneseq
    %v385 = vshrl.u32 %v384, 7
    %v386 = vsub.s32 0, %v385
    %v387 = vrot.slane %v90, %v386
    %v388 = vlaneseq
    %v389 = vshrl.u32 %v388, 7
    %v390 = vsub.s32 0, %v389
    %v391 = vrot.slane %v91, %v390
    %v392 = vlaneseq
    %v393 = vshrl.u32 %v392, 7
    %v394 = vsub.s32 0, %v393
    %v395 = vrot.slane %v92, %v394
    %v396 = vlaneseq
    %v397 = vshrl.u32 %v396, 7
    %v398 = vsub.s32 0, %v397
    %v399 = vrot.slane %v93, %v398
    %v400 = vlaneseq
    %v401 = vshrl.u32 %v400, 7
    %v402 = vsub.s32 0, %v401
    %v403 = vrot.slane %v94, %v402
    %v404 = vlaneseq
    %v405 = vshrl.u32 %v404, 7
    %v406 = vsub.s32 0, %v405
    %v407 = vrot.slane %v95, %v406
    %v408 = vlaneseq
    %v409 = vshrl.u32 %v408, 7
    %v410 = vsub.s32 0, %v409
    %v411 = vrot.slane %v96, %v410
    %v412 = vlaneseq
    %v413 = vshrl.u32 %v412, 7
    %v414 = vsub.s32 0, %v413
    %v415 = vrot.slane %v97, %v414
    %v416 = vlaneseq
    %v417 = vshrl.u32 %v416, 7
    %v418 = vsub.s32 0, %v417
    %v419 = vrot.slane %v98, %v418
    %v420 = vlaneseq
    %v421 = vshrl.u32 %v420, 7
    %v422 = vsub.s32 0, %v421
    %v423 = vrot.slane %v99, %v422
    %v424 = vlaneseq
    %v425 = vshrl.u32 %v424, 7
    %v426 = vsub.s32 0, %v425
    %v427 = vrot.slane %v100, %v426
    %v428 = vadd.f32 %v331, %v335
    %v429 = vadd.f32 %v330, %v339
    %v430 = vadd.f32 %v329, %v343
    %v431 = vadd.f32 %v328, %v347
    %v432 = vadd.f32 %v327, %v351
    %v433 = vadd.f32 %v326, %v355
    %v434 = vadd.f32 %v325, %v359
    %v435 = vadd.f32 %v324, %v363
    %v436 = vadd.f32 %v323, %v367
    %v437 = vadd.f32 %v322, %v371
    %v438 = vadd.f32 %v321, %v375
    %v439 = vadd.f32 %v320, %v379
    %v440 = vadd.f32 %v319, %v383
    %v441 = vadd.f32 %v318, %v387
    %v442 = vadd.f32 %v317, %v391
    %v443 = vadd.f32 %v316, %v395
    %v444 = vadd.f32 %v315, %v399
    %v445 = vadd.f32 %v314, %v403
    %v446 = vadd.f32 %v313, %v407
    %v447 = vadd.f32 %v312, %v411
    %v448 = vadd.f32 %v311, %v415
    %v449 = vadd.f32 %v310, %v419
    %v450 = vadd.f32 %v309, %v423
    %v451 = vadd.f32 %v308, %v427
    %v476 = vcombine.low %v428, %v429
    %v477 = vcombine.low %v430, %v431
    %v479 = vunpack.c.l.s4 1983009808
    %v480 = vunpack.c.0.s8 %v479
    %v481 = vlaneseq
    %v482 = vshrl.u32 %v481, 7
    %v483 = vsub.s32 %v480, %v482
    %v484 = vrot.slane %v476, %v483
    %v486 = vunpack.c.l.s4 1983009808
    %v487 = vunpack.c.0.s8 %v486
    %v488 = vlaneseq
    %v489 = vshrl.u32 %v488, 7
    %v490 = vsub.s32 %v487, %v489
    %v491 = vrot.slane %v477, %v490
    %v492 = vcombine.low %v484, %v491
    %v493 = vcombine.low %v432, %v433
    %v494 = vcombine.low %v434, %v435
    %v496 = vunpack.c.l.s4 1983009808
    %v497 = vunpack.c.0.s8 %v496
    %v498 = vlaneseq
    %v499 = vshrl.u32 %v498, 7
    %v500 = vsub.s32 %v497, %v499
    %v501 = vrot.slane %v493, %v500
    %v503 = vunpack.c.l.s4 1983009808
    %v504 = vunpack.c.0.s8 %v503
    %v505 = vlaneseq
    %v506 = vshrl.u32 %v505, 7
    %v507 = vsub.s32 %v504, %v506
    %v508 = vrot.slane %v494, %v507
    %v509 = vcombine.low %v501, %v508
    %v510 = vcombine.low %v436, %v437
    %v511 = vcombine.low %v438, %v439
    %v513 = vunpack.c.l.s4 1983009808
    %v514 = vunpack.c.0.s8 %v513
    %v515 = vlaneseq
    %v516 = vshrl.u32 %v515, 7
    %v517 = vsub.s32 %v514, %v516
    %v518 = vrot.slane %v510, %v517
    %v520 = vunpack.c.l.s4 1983009808
    %v521 = vunpack.c.0.s8 %v520
    %v522 = vlaneseq
    %v523 = vshrl.u32 %v522, 7
    %v524 = vsub.s32 %v521, %v523
    %v525 = vrot.slane %v511, %v524
    %v526 = vcombine.low %v518, %v525
    %v527 = vcombine.low %v440, %v441
    %v528 = vcombine.low %v442, %v443
    %v530 = vunpack.c.l.s4 1983009808
    %v531 = vunpack.c.0.s8 %v530
    %v532 = vlaneseq
    %v533 = vshrl.u32 %v532, 7
    %v534 = vsub.s32 %v531, %v533
    %v535 = vrot.slane %v527, %v534
    %v537 = vunpack.c.l.s4 1983009808
    %v538 = vunpack.c.0.s8 %v537
    %v539 = vlaneseq
    %v540 = vshrl.u32 %v539, 7
    %v541 = vsub.s32 %v538, %v540
    %v542 = vrot.slane %v528, %v541
    %v543 = vcombine.low %v535, %v542
    %v544 = vcombine.low %v444, %v445
    %v545 = vcombine.low %v446, %v447
    %v547 = vunpack.c.l.s4 1983009808
    %v548 = vunpack.c.0.s8 %v547
    %v549 = vlaneseq
    %v550 = vshrl.u32 %v549, 7
    %v551 = vsub.s32 %v548, %v550
    %v552 = vrot.slane %v544, %v551
    %v554 = vunpack.c.l.s4 1983009808
    %v555 = vunpack.c.0.s8 %v554
    %v556 = vlaneseq
    %v557 = vshrl.u32 %v556, 7
    %v558 = vsub.s32 %v555, %v557
    %v559 = vrot.slane %v545, %v558
    %v560 = vcombine.low %v552, %v559
    %v561 = vcombine.low %v448, %v449
    %v562 = vcombine.low %v450, %v451
    %v564 = vunpack.c.l.s4 1983009808
    %v565 = vunpack.c.0.s8 %v564
    %v566 = vlaneseq
    %v567 = vshrl.u32 %v566, 7
    %v568 = vsub.s32 %v565, %v567
    %v569 = vrot.slane %v561, %v568
    %v571 = vunpack.c.l.s4 1983009808
    %v572 = vunpack.c.0.s8 %v571
    %v573 = vlaneseq
    %v574 = vshrl.u32 %v573, 7
    %v575 = vsub.s32 %v572, %v574
    %v576 = vrot.slane %v562, %v575
    %v577 = vcombine.low %v569, %v576
    %v584 = vmax.f32 %v71, %v492
    %v585 = vmax.f32 %v72, %v509
    %v586 = vmax.f32 %v73, %v526
    %v587 = vmax.f32 %v74, %v543
    %v588 = vmax.f32 %v75, %v560
    %v589 = vmax.f32 %v76, %v577
    %590 = vrot.lane.b32.xlu0 %v138, 127
    %v591 = vpop.permute.xlu0 %590
    %592 = vrot.lane.b32.xlu0 %v146, 127
    %v593 = vpop.permute.xlu0 %592
    %594 = vrot.lane.b32.xlu0 %v145, 127
    %v595 = vpop.permute.xlu0 %594
    %596 = vrot.lane.b32.xlu0 %v147, 127
    %v597 = vpop.permute.xlu0 %596
    %598 = vrot.lane.b32.xlu0 %v155, 127
    %v599 = vpop.permute.xlu0 %598
    %600 = vrot.lane.b32.xlu0 %v163, 127
    %v601 = vpop.permute.xlu0 %600
    %602 = vrot.lane.b32.xlu0 %v162, 127
    %v603 = vpop.permute.xlu0 %602
    %604 = vrot.lane.b32.xlu0 %v164, 127
    %v605 = vpop.permute.xlu0 %604
    %606 = vrot.lane.b32.xlu0 %v172, 127
    %v607 = vpop.permute.xlu0 %606
    %608 = vrot.lane.b32.xlu0 %v180, 127
    %v609 = vpop.permute.xlu0 %608
    %610 = vrot.lane.b32.xlu0 %v179, 127
    %v611 = vpop.permute.xlu0 %610
    %612 = vrot.lane.b32.xlu0 %v181, 127
    %v613 = vpop.permute.xlu0 %612
    %614 = vrot.lane.b32.xlu0 %v189, 127
    %v615 = vpop.permute.xlu0 %614
    %616 = vrot.lane.b32.xlu0 %v197, 127
    %v617 = vpop.permute.xlu0 %616
    %618 = vrot.lane.b32.xlu0 %v196, 127
    %v619 = vpop.permute.xlu0 %618
    %620 = vrot.lane.b32.xlu0 %v198, 127
    %v621 = vpop.permute.xlu0 %620
    %622 = vrot.lane.b32.xlu0 %v206, 127
    %v623 = vpop.permute.xlu0 %622
    %624 = vrot.lane.b32.xlu0 %v214, 127
    %v625 = vpop.permute.xlu0 %624
    %626 = vrot.lane.b32.xlu0 %v213, 127
    %v627 = vpop.permute.xlu0 %626
    %628 = vrot.lane.b32.xlu0 %v215, 127
    %v629 = vpop.permute.xlu0 %628
    %630 = vrot.lane.b32.xlu0 %v223, 127
    %v631 = vpop.permute.xlu0 %630
    %632 = vrot.lane.b32.xlu0 %v231, 127
    %v633 = vpop.permute.xlu0 %632
    %634 = vrot.lane.b32.xlu0 %v230, 127
    %v635 = vpop.permute.xlu0 %634
    %636 = vrot.lane.b32.xlu0 %v232, 127
    %v637 = vpop.permute.xlu0 %636
    %vm638 = vcmp.lt.s32.totalorder %v306, 127
    %v639 = vsel %vm638, %v635, %v637
    %v640 = vsel %vm638, %v633, %v635
    %v641 = vsel %vm638, %v631, %v633
    %v642 = vsel %vm638, %v629, %v631
    %v643 = vsel %vm638, %v627, %v629
    %v644 = vsel %vm638, %v625, %v627
    %v645 = vsel %vm638, %v623, %v625
    %v646 = vsel %vm638, %v621, %v623
    %v647 = vsel %vm638, %v619, %v621
    %v648 = vsel %vm638, %v617, %v619
    %v649 = vsel %vm638, %v615, %v617
    %v650 = vsel %vm638, %v613, %v615
    %v651 = vsel %vm638, %v611, %v613
    %v652 = vsel %vm638, %v609, %v611
    %v653 = vsel %vm638, %v607, %v609
    %v654 = vsel %vm638, %v605, %v607
    %v655 = vsel %vm638, %v603, %v605
    %v656 = vsel %vm638, %v601, %v603
    %v657 = vsel %vm638, %v599, %v601
    %v658 = vsel %vm638, %v597, %v599
    %v659 = vsel %vm638, %v595, %v597
    %v660 = vsel %vm638, %v593, %v595
    %v661 = vsel %vm638, %v591, %v593
    %v662 = vsel %vm638, %v637, %v591
    %v663 = vlaneseq
    %v664 = vshrl.u32 %v663, 7
    %v665 = vsub.s32 4, %v664
    %v666 = vrot.slane %v77, %v665
    %v667 = vlaneseq
    %v668 = vshrl.u32 %v667, 7
    %v669 = vsub.s32 4, %v668
    %v670 = vrot.slane %v78, %v669
    %v671 = vlaneseq
    %v672 = vshrl.u32 %v671, 7
    %v673 = vsub.s32 4, %v672
    %v674 = vrot.slane %v79, %v673
    %v675 = vlaneseq
    %v676 = vshrl.u32 %v675, 7
    %v677 = vsub.s32 4, %v676
    %v678 = vrot.slane %v80, %v677
    %v679 = vlaneseq
    %v680 = vshrl.u32 %v679, 7
    %v681 = vsub.s32 4, %v680
    %v682 = vrot.slane %v81, %v681
    %v683 = vlaneseq
    %v684 = vshrl.u32 %v683, 7
    %v685 = vsub.s32 4, %v684
    %v686 = vrot.slane %v82, %v685
    %v687 = vlaneseq
    %v688 = vshrl.u32 %v687, 7
    %v689 = vsub.s32 4, %v688
    %v690 = vrot.slane %v83, %v689
    %v691 = vlaneseq
    %v692 = vshrl.u32 %v691, 7
    %v693 = vsub.s32 4, %v692
    %v694 = vrot.slane %v84, %v693
    %v695 = vlaneseq
    %v696 = vshrl.u32 %v695, 7
    %v697 = vsub.s32 4, %v696
    %v698 = vrot.slane %v85, %v697
    %v699 = vlaneseq
    %v700 = vshrl.u32 %v699, 7
    %v701 = vsub.s32 4, %v700
    %v702 = vrot.slane %v86, %v701
    %v703 = vlaneseq
    %v704 = vshrl.u32 %v703, 7
    %v705 = vsub.s32 4, %v704
    %v706 = vrot.slane %v87, %v705
    %v707 = vlaneseq
    %v708 = vshrl.u32 %v707, 7
    %v709 = vsub.s32 4, %v708
    %v710 = vrot.slane %v88, %v709
    %v711 = vlaneseq
    %v712 = vshrl.u32 %v711, 7
    %v713 = vsub.s32 4, %v712
    %v714 = vrot.slane %v89, %v713
    %v715 = vlaneseq
    %v716 = vshrl.u32 %v715, 7
    %v717 = vsub.s32 4, %v716
    %v718 = vrot.slane %v90, %v717
    %v719 = vlaneseq
    %v720 = vshrl.u32 %v719, 7
    %v721 = vsub.s32 4, %v720
    %v722 = vrot.slane %v91, %v721
    %v723 = vlaneseq
    %v724 = vshrl.u32 %v723, 7
    %v725 = vsub.s32 4, %v724
    %v726 = vrot.slane %v92, %v725
    %v727 = vlaneseq
    %v728 = vshrl.u32 %v727, 7
    %v729 = vsub.s32 4, %v728
    %v730 = vrot.slane %v93, %v729
    %v731 = vlaneseq
    %v732 = vshrl.u32 %v731, 7
    %v733 = vsub.s32 4, %v732
    %v734 = vrot.slane %v94, %v733
    %v735 = vlaneseq
    %v736 = vshrl.u32 %v735, 7
    %v737 = vsub.s32 4, %v736
    %v738 = vrot.slane %v95, %v737
    %v739 = vlaneseq
    %v740 = vshrl.u32 %v739, 7
    %v741 = vsub.s32 4, %v740
    %v742 = vrot.slane %v96, %v741
    %v743 = vlaneseq
    %v744 = vshrl.u32 %v743, 7
    %v745 = vsub.s32 4, %v744
    %v746 = vrot.slane %v97, %v745
    %v747 = vlaneseq
    %v748 = vshrl.u32 %v747, 7
    %v749 = vsub.s32 4, %v748
    %v750 = vrot.slane %v98, %v749
    %v751 = vlaneseq
    %v752 = vshrl.u32 %v751, 7
    %v753 = vsub.s32 4, %v752
    %v754 = vrot.slane %v99, %v753
    %v755 = vlaneseq
    %v756 = vshrl.u32 %v755, 7
    %v757 = vsub.s32 4, %v756
    %v758 = vrot.slane %v100, %v757
    %v759 = vadd.f32 %v661, %v666
    %v760 = vadd.f32 %v660, %v670
    %v761 = vadd.f32 %v659, %v674
    %v762 = vadd.f32 %v658, %v678
    %v763 = vadd.f32 %v657, %v682
    %v764 = vadd.f32 %v656, %v686
    %v765 = vadd.f32 %v655, %v690
    %v766 = vadd.f32 %v654, %v694
    %v767 = vadd.f32 %v653, %v698
    %v768 = vadd.f32 %v652, %v702
    %v769 = vadd.f32 %v651, %v706
    %v770 = vadd.f32 %v650, %v710
    %v771 = vadd.f32 %v649, %v714
    %v772 = vadd.f32 %v648, %v718
    %v773 = vadd.f32 %v647, %v722
    %v774 = vadd.f32 %v646, %v726
    %v775 = vadd.f32 %v645, %v730
    %v776 = vadd.f32 %v644, %v734
    %v777 = vadd.f32 %v643, %v738
    %v778 = vadd.f32 %v642, %v742
    %v779 = vadd.f32 %v641, %v746
    %v780 = vadd.f32 %v640, %v750
    %v781 = vadd.f32 %v639, %v754
    %v782 = vadd.f32 %v662, %v758
    %v807 = vcombine.low %v759, %v760
    %v808 = vcombine.low %v761, %v762
    %v810 = vunpack.c.l.s4 1983009808
    %v811 = vunpack.c.0.s8 %v810
    %v812 = vlaneseq
    %v813 = vshrl.u32 %v812, 7
    %v814 = vsub.s32 %v811, %v813
    %v815 = vrot.slane %v807, %v814
    %v817 = vunpack.c.l.s4 1983009808
    %v818 = vunpack.c.0.s8 %v817
    %v819 = vlaneseq
    %v820 = vshrl.u32 %v819, 7
    %v821 = vsub.s32 %v818, %v820
    %v822 = vrot.slane %v808, %v821
    %v823 = vcombine.low %v815, %v822
    %v824 = vcombine.low %v763, %v764
    %v825 = vcombine.low %v765, %v766
    %v827 = vunpack.c.l.s4 1983009808
    %v828 = vunpack.c.0.s8 %v827
    %v829 = vlaneseq
    %v830 = vshrl.u32 %v829, 7
    %v831 = vsub.s32 %v828, %v830
    %v832 = vrot.slane %v824, %v831
    %v834 = vunpack.c.l.s4 1983009808
    %v835 = vunpack.c.0.s8 %v834
    %v836 = vlaneseq
    %v837 = vshrl.u32 %v836, 7
    %v838 = vsub.s32 %v835, %v837
    %v839 = vrot.slane %v825, %v838
    %v840 = vcombine.low %v832, %v839
    %v841 = vcombine.low %v767, %v768
    %v842 = vcombine.low %v769, %v770
    %v844 = vunpack.c.l.s4 1983009808
    %v845 = vunpack.c.0.s8 %v844
    %v846 = vlaneseq
    %v847 = vshrl.u32 %v846, 7
    %v848 = vsub.s32 %v845, %v847
    %v849 = vrot.slane %v841, %v848
    %v851 = vunpack.c.l.s4 1983009808
    %v852 = vunpack.c.0.s8 %v851
    %v853 = vlaneseq
    %v854 = vshrl.u32 %v853, 7
    %v855 = vsub.s32 %v852, %v854
    %v856 = vrot.slane %v842, %v855
    %v857 = vcombine.low %v849, %v856
    %v858 = vcombine.low %v771, %v772
    %v859 = vcombine.low %v773, %v774
    %v861 = vunpack.c.l.s4 1983009808
    %v862 = vunpack.c.0.s8 %v861
    %v863 = vlaneseq
    %v864 = vshrl.u32 %v863, 7
    %v865 = vsub.s32 %v862, %v864
    %v866 = vrot.slane %v858, %v865
    %v868 = vunpack.c.l.s4 1983009808
    %v869 = vunpack.c.0.s8 %v868
    %v870 = vlaneseq
    %v871 = vshrl.u32 %v870, 7
    %v872 = vsub.s32 %v869, %v871
    %v873 = vrot.slane %v859, %v872
    %v874 = vcombine.low %v866, %v873
    %v875 = vcombine.low %v775, %v776
    %v876 = vcombine.low %v777, %v778
    %v878 = vunpack.c.l.s4 1983009808
    %v879 = vunpack.c.0.s8 %v878
    %v880 = vlaneseq
    %v881 = vshrl.u32 %v880, 7
    %v882 = vsub.s32 %v879, %v881
    %v883 = vrot.slane %v875, %v882
    %v885 = vunpack.c.l.s4 1983009808
    %v886 = vunpack.c.0.s8 %v885
    %v887 = vlaneseq
    %v888 = vshrl.u32 %v887, 7
    %v889 = vsub.s32 %v886, %v888
    %v890 = vrot.slane %v876, %v889
    %v891 = vcombine.low %v883, %v890
    %v892 = vcombine.low %v779, %v780
    %v893 = vcombine.low %v781, %v782
    %v895 = vunpack.c.l.s4 1983009808
    %v896 = vunpack.c.0.s8 %v895
    %v897 = vlaneseq
    %v898 = vshrl.u32 %v897, 7
    %v899 = vsub.s32 %v896, %v898
    %v900 = vrot.slane %v892, %v899
    %v902 = vunpack.c.l.s4 1983009808
    %v903 = vunpack.c.0.s8 %v902
    %v904 = vlaneseq
    %v905 = vshrl.u32 %v904, 7
    %v906 = vsub.s32 %v903, %v905
    %v907 = vrot.slane %v893, %v906
    %v908 = vcombine.low %v900, %v907
    %v915 = vmax.f32 %v71, %v823
    %v916 = vmax.f32 %v72, %v840
    %v917 = vmax.f32 %v73, %v857
    %v918 = vmax.f32 %v74, %v874
    %v919 = vmax.f32 %v75, %v891
    %v920 = vmax.f32 %v76, %v908
    %v927 = vcombine.high %v584, %v584
    %v929 = vunpack.c.l.s4 1983009808
    %v930 = vunpack.c.0.s8 %v929
    %v931 = vlaneseq
    %v932 = vshrl.u32 %v931, 7
    %v933 = vsub.s32 %v930, %v932
    %v934 = vrot.slane %v584, %v933
    %v936 = vunpack.c.l.s4 1983009808
    %v937 = vunpack.c.0.s8 %v936
    %v938 = vlaneseq
    %v939 = vshrl.u32 %v938, 7
    %v940 = vsub.s32 %v937, %v939
    %v941 = vrot.slane %v927, %v940
    %v942 = vcombine.high %v934, %v934
    %v943 = vcombine.high %v941, %v941
    %v944 = vcombine.high %v585, %v585
    %v946 = vunpack.c.l.s4 1983009808
    %v947 = vunpack.c.0.s8 %v946
    %v948 = vlaneseq
    %v949 = vshrl.u32 %v948, 7
    %v950 = vsub.s32 %v947, %v949
    %v951 = vrot.slane %v585, %v950
    %v953 = vunpack.c.l.s4 1983009808
    %v954 = vunpack.c.0.s8 %v953
    %v955 = vlaneseq
    %v956 = vshrl.u32 %v955, 7
    %v957 = vsub.s32 %v954, %v956
    %v958 = vrot.slane %v944, %v957
    %v959 = vcombine.high %v951, %v951
    %v960 = vcombine.high %v958, %v958
    %v961 = vcombine.high %v586, %v586
    %v963 = vunpack.c.l.s4 1983009808
    %v964 = vunpack.c.0.s8 %v963
    %v965 = vlaneseq
    %v966 = vshrl.u32 %v965, 7
    %v967 = vsub.s32 %v964, %v966
    %v968 = vrot.slane %v586, %v967
    %v970 = vunpack.c.l.s4 1983009808
    %v971 = vunpack.c.0.s8 %v970
    %v972 = vlaneseq
    %v973 = vshrl.u32 %v972, 7
    %v974 = vsub.s32 %v971, %v973
    %v975 = vrot.slane %v961, %v974
    %v976 = vcombine.high %v968, %v968
    %v977 = vcombine.high %v975, %v975
    %v978 = vcombine.high %v587, %v587
    %v980 = vunpack.c.l.s4 1983009808
    %v981 = vunpack.c.0.s8 %v980
    %v982 = vlaneseq
    %v983 = vshrl.u32 %v982, 7
    %v984 = vsub.s32 %v981, %v983
    %v985 = vrot.slane %v587, %v984
    %v987 = vunpack.c.l.s4 1983009808
    %v988 = vunpack.c.0.s8 %v987
    %v989 = vlaneseq
    %v990 = vshrl.u32 %v989, 7
    %v991 = vsub.s32 %v988, %v990
    %v992 = vrot.slane %v978, %v991
    %v993 = vcombine.high %v985, %v985
    %v994 = vcombine.high %v992, %v992
    %v995 = vcombine.high %v588, %v588
    %v997 = vunpack.c.l.s4 1983009808
    %v998 = vunpack.c.0.s8 %v997
    %v999 = vlaneseq
    %v1000 = vshrl.u32 %v999, 7
    %v1001 = vsub.s32 %v998, %v1000
    %v1002 = vrot.slane %v588, %v1001
    %v1004 = vunpack.c.l.s4 1983009808
    %v1005 = vunpack.c.0.s8 %v1004
    %v1006 = vlaneseq
    %v1007 = vshrl.u32 %v1006, 7
    %v1008 = vsub.s32 %v1005, %v1007
    %v1009 = vrot.slane %v995, %v1008
    %v1010 = vcombine.high %v1002, %v1002
    %v1011 = vcombine.high %v1009, %v1009
    %v1012 = vcombine.high %v589, %v589
    %v1014 = vunpack.c.l.s4 1983009808
    %v1015 = vunpack.c.0.s8 %v1014
    %v1016 = vlaneseq
    %v1017 = vshrl.u32 %v1016, 7
    %v1018 = vsub.s32 %v1015, %v1017
    %v1019 = vrot.slane %v589, %v1018
    %v1021 = vunpack.c.l.s4 1983009808
    %v1022 = vunpack.c.0.s8 %v1021
    %v1023 = vlaneseq
    %v1024 = vshrl.u32 %v1023, 7
    %v1025 = vsub.s32 %v1022, %v1024
    %v1026 = vrot.slane %v1012, %v1025
    %v1027 = vcombine.high %v1019, %v1019
    %v1028 = vcombine.high %v1026, %v1026
    %1053 = vrot.lane.b32.xlu0 %v934, 2
    %v1054 = vpop.permute.xlu0 %1053
    %1055 = vrot.lane.b32.xlu0 %v942, 2
    %v1056 = vpop.permute.xlu0 %1055
    %1057 = vrot.lane.b32.xlu0 %v941, 2
    %v1058 = vpop.permute.xlu0 %1057
    %1059 = vrot.lane.b32.xlu0 %v943, 2
    %v1060 = vpop.permute.xlu0 %1059
    %1061 = vrot.lane.b32.xlu0 %v951, 2
    %v1062 = vpop.permute.xlu0 %1061
    %1063 = vrot.lane.b32.xlu0 %v959, 2
    %v1064 = vpop.permute.xlu0 %1063
    %1065 = vrot.lane.b32.xlu0 %v958, 2
    %v1066 = vpop.permute.xlu0 %1065
    %1067 = vrot.lane.b32.xlu0 %v960, 2
    %v1068 = vpop.permute.xlu0 %1067
    %1069 = vrot.lane.b32.xlu0 %v968, 2
    %v1070 = vpop.permute.xlu0 %1069
    %1071 = vrot.lane.b32.xlu0 %v976, 2
    %v1072 = vpop.permute.xlu0 %1071
    %1073 = vrot.lane.b32.xlu0 %v975, 2
    %v1074 = vpop.permute.xlu0 %1073
    %1075 = vrot.lane.b32.xlu0 %v977, 2
    %v1076 = vpop.permute.xlu0 %1075
    %1077 = vrot.lane.b32.xlu0 %v985, 2
    %v1078 = vpop.permute.xlu0 %1077
    %1079 = vrot.lane.b32.xlu0 %v993, 2
    %v1080 = vpop.permute.xlu0 %1079
    %1081 = vrot.lane.b32.xlu0 %v992, 2
    %v1082 = vpop.permute.xlu0 %1081
    %1083 = vrot.lane.b32.xlu0 %v994, 2
    %v1084 = vpop.permute.xlu0 %1083
    %1085 = vrot.lane.b32.xlu0 %v1002, 2
    %v1086 = vpop.permute.xlu0 %1085
    %1087 = vrot.lane.b32.xlu0 %v1010, 2
    %v1088 = vpop.permute.xlu0 %1087
    %1089 = vrot.lane.b32.xlu0 %v1009, 2
    %v1090 = vpop.permute.xlu0 %1089
    %1091 = vrot.lane.b32.xlu0 %v1011, 2
    %v1092 = vpop.permute.xlu0 %1091
    %1093 = vrot.lane.b32.xlu0 %v1019, 2
    %v1094 = vpop.permute.xlu0 %1093
    %1095 = vrot.lane.b32.xlu0 %v1027, 2
    %v1096 = vpop.permute.xlu0 %1095
    %1097 = vrot.lane.b32.xlu0 %v1026, 2
    %v1098 = vpop.permute.xlu0 %1097
    %1099 = vrot.lane.b32.xlu0 %v1028, 2
    %v1100 = vpop.permute.xlu0 %1099
    %vm1101 = vcmp.lt.s32.totalorder %v306, 2
    %v1102 = vsel %vm1101, %v1098, %v1100
    %v1103 = vsel %vm1101, %v1096, %v1098
    %v1104 = vsel %vm1101, %v1094, %v1096
    %v1105 = vsel %vm1101, %v1092, %v1094
    %v1106 = vsel %vm1101, %v1090, %v1092
    %v1107 = vsel %vm1101, %v1088, %v1090
    %v1108 = vsel %vm1101, %v1086, %v1088
    %v1109 = vsel %vm1101, %v1084, %v1086
    %v1110 = vsel %vm1101, %v1082, %v1084
    %v1111 = vsel %vm1101, %v1080, %v1082
    %v1112 = vsel %vm1101, %v1078, %v1080
    %v1113 = vsel %vm1101, %v1076, %v1078
    %v1114 = vsel %vm1101, %v1074, %v1076
    %v1115 = vsel %vm1101, %v1072, %v1074
    %v1116 = vsel %vm1101, %v1070, %v1072
    %v1117 = vsel %vm1101, %v1068, %v1070
    %v1118 = vsel %vm1101, %v1066, %v1068
    %v1119 = vsel %vm1101, %v1064, %v1066
    %v1120 = vsel %vm1101, %v1062, %v1064
    %v1121 = vsel %vm1101, %v1060, %v1062
    %v1122 = vsel %vm1101, %v1058, %v1060
    %v1123 = vsel %vm1101, %v1056, %v1058
    %v1124 = vsel %vm1101, %v1054, %v1056
    %v1125 = vsel %vm1101, %v1100, %v1054
    %v1126 = vlaneseq
    %v1127 = vshrl.u32 %v1126, 7
    %v1128 = vsub.s32 1, %v1127
    %v1129 = vrot.slane %v77, %v1128
    %v1130 = vlaneseq
    %v1131 = vshrl.u32 %v1130, 7
    %v1132 = vsub.s32 1, %v1131
    %v1133 = vrot.slane %v78, %v1132
    %v1134 = vlaneseq
    %v1135 = vshrl.u32 %v1134, 7
    %v1136 = vsub.s32 1, %v1135
    %v1137 = vrot.slane %v79, %v1136
    %v1138 = vlaneseq
    %v1139 = vshrl.u32 %v1138, 7
    %v1140 = vsub.s32 1, %v1139
    %v1141 = vrot.slane %v80, %v1140
    %v1142 = vlaneseq
    %v1143 = vshrl.u32 %v1142, 7
    %v1144 = vsub.s32 1, %v1143
    %v1145 = vrot.slane %v81, %v1144
    %v1146 = vlaneseq
    %v1147 = vshrl.u32 %v1146, 7
    %v1148 = vsub.s32 1, %v1147
    %v1149 = vrot.slane %v82, %v1148
    %v1150 = vlaneseq
    %v1151 = vshrl.u32 %v1150, 7
    %v1152 = vsub.s32 1, %v1151
    %v1153 = vrot.slane %v83, %v1152
    %v1154 = vlaneseq
    %v1155 = vshrl.u32 %v1154, 7
    %v1156 = vsub.s32 1, %v1155
    %v1157 = vrot.slane %v84, %v1156
    %v1158 = vlaneseq
    %v1159 = vshrl.u32 %v1158, 7
    %v1160 = vsub.s32 1, %v1159
    %v1161 = vrot.slane %v85, %v1160
    %v1162 = vlaneseq
    %v1163 = vshrl.u32 %v1162, 7
    %v1164 = vsub.s32 1, %v1163
    %v1165 = vrot.slane %v86, %v1164
    %v1166 = vlaneseq
    %v1167 = vshrl.u32 %v1166, 7
    %v1168 = vsub.s32 1, %v1167
    %v1169 = vrot.slane %v87, %v1168
    %v1170 = vlaneseq
    %v1171 = vshrl.u32 %v1170, 7
    %v1172 = vsub.s32 1, %v1171
    %v1173 = vrot.slane %v88, %v1172
    %v1174 = vlaneseq
    %v1175 = vshrl.u32 %v1174, 7
    %v1176 = vsub.s32 1, %v1175
    %v1177 = vrot.slane %v89, %v1176
    %v1178 = vlaneseq
    %v1179 = vshrl.u32 %v1178, 7
    %v1180 = vsub.s32 1, %v1179
    %v1181 = vrot.slane %v90, %v1180
    %v1182 = vlaneseq
    %v1183 = vshrl.u32 %v1182, 7
    %v1184 = vsub.s32 1, %v1183
    %v1185 = vrot.slane %v91, %v1184
    %v1186 = vlaneseq
    %v1187 = vshrl.u32 %v1186, 7
    %v1188 = vsub.s32 1, %v1187
    %v1189 = vrot.slane %v92, %v1188
    %v1190 = vlaneseq
    %v1191 = vshrl.u32 %v1190, 7
    %v1192 = vsub.s32 1, %v1191
    %v1193 = vrot.slane %v93, %v1192
    %v1194 = vlaneseq
    %v1195 = vshrl.u32 %v1194, 7
    %v1196 = vsub.s32 1, %v1195
    %v1197 = vrot.slane %v94, %v1196
    %v1198 = vlaneseq
    %v1199 = vshrl.u32 %v1198, 7
    %v1200 = vsub.s32 1, %v1199
    %v1201 = vrot.slane %v95, %v1200
    %v1202 = vlaneseq
    %v1203 = vshrl.u32 %v1202, 7
    %v1204 = vsub.s32 1, %v1203
    %v1205 = vrot.slane %v96, %v1204
    %v1206 = vlaneseq
    %v1207 = vshrl.u32 %v1206, 7
    %v1208 = vsub.s32 1, %v1207
    %v1209 = vrot.slane %v97, %v1208
    %v1210 = vlaneseq
    %v1211 = vshrl.u32 %v1210, 7
    %v1212 = vsub.s32 1, %v1211
    %v1213 = vrot.slane %v98, %v1212
    %v1214 = vlaneseq
    %v1215 = vshrl.u32 %v1214, 7
    %v1216 = vsub.s32 1, %v1215
    %v1217 = vrot.slane %v99, %v1216
    %v1218 = vlaneseq
    %v1219 = vshrl.u32 %v1218, 7
    %v1220 = vsub.s32 1, %v1219
    %v1221 = vrot.slane %v100, %v1220
    %v1222 = vadd.f32 %v1125, %v1129
    %v1223 = vadd.f32 %v1124, %v1133
    %v1224 = vadd.f32 %v1123, %v1137
    %v1225 = vadd.f32 %v1122, %v1141
    %v1226 = vadd.f32 %v1121, %v1145
    %v1227 = vadd.f32 %v1120, %v1149
    %v1228 = vadd.f32 %v1119, %v1153
    %v1229 = vadd.f32 %v1118, %v1157
    %v1230 = vadd.f32 %v1117, %v1161
    %v1231 = vadd.f32 %v1116, %v1165
    %v1232 = vadd.f32 %v1115, %v1169
    %v1233 = vadd.f32 %v1114, %v1173
    %v1234 = vadd.f32 %v1113, %v1177
    %v1235 = vadd.f32 %v1112, %v1181
    %v1236 = vadd.f32 %v1111, %v1185
    %v1237 = vadd.f32 %v1110, %v1189
    %v1238 = vadd.f32 %v1109, %v1193
    %v1239 = vadd.f32 %v1108, %v1197
    %v1240 = vadd.f32 %v1107, %v1201
    %v1241 = vadd.f32 %v1106, %v1205
    %v1242 = vadd.f32 %v1105, %v1209
    %v1243 = vadd.f32 %v1104, %v1213
    %v1244 = vadd.f32 %v1103, %v1217
    %v1245 = vadd.f32 %v1102, %v1221
    %v1270 = vcombine.low %v1222, %v1223
    %v1271 = vcombine.low %v1224, %v1225
    %v1273 = vunpack.c.l.s4 1983009808
    %v1274 = vunpack.c.0.s8 %v1273
    %v1275 = vlaneseq
    %v1276 = vshrl.u32 %v1275, 7
    %v1277 = vsub.s32 %v1274, %v1276
    %v1278 = vrot.slane %v1270, %v1277
    %v1280 = vunpack.c.l.s4 1983009808
    %v1281 = vunpack.c.0.s8 %v1280
    %v1282 = vlaneseq
    %v1283 = vshrl.u32 %v1282, 7
    %v1284 = vsub.s32 %v1281, %v1283
    %v1285 = vrot.slane %v1271, %v1284
    %v1286 = vcombine.low %v1278, %v1285
    %v1287 = vcombine.low %v1226, %v1227
    %v1288 = vcombine.low %v1228, %v1229
    %v1290 = vunpack.c.l.s4 1983009808
    %v1291 = vunpack.c.0.s8 %v1290
    %v1292 = vlaneseq
    %v1293 = vshrl.u32 %v1292, 7
    %v1294 = vsub.s32 %v1291, %v1293
    %v1295 = vrot.slane %v1287, %v1294
    %v1297 = vunpack.c.l.s4 1983009808
    %v1298 = vunpack.c.0.s8 %v1297
    %v1299 = vlaneseq
    %v1300 = vshrl.u32 %v1299, 7
    %v1301 = vsub.s32 %v1298, %v1300
    %v1302 = vrot.slane %v1288, %v1301
    %v1303 = vcombine.low %v1295, %v1302
    %v1304 = vcombine.low %v1230, %v1231
    %v1305 = vcombine.low %v1232, %v1233
    %v1307 = vunpack.c.l.s4 1983009808
    %v1308 = vunpack.c.0.s8 %v1307
    %v1309 = vlaneseq
    %v1310 = vshrl.u32 %v1309, 7
    %v1311 = vsub.s32 %v1308, %v1310
    %v1312 = vrot.slane %v1304, %v1311
    %v1314 = vunpack.c.l.s4 1983009808
    %v1315 = vunpack.c.0.s8 %v1314
    %v1316 = vlaneseq
    %v1317 = vshrl.u32 %v1316, 7
    %v1318 = vsub.s32 %v1315, %v1317
    %v1319 = vrot.slane %v1305, %v1318
    %v1320 = vcombine.low %v1312, %v1319
    %v1321 = vcombine.low %v1234, %v1235
    %v1322 = vcombine.low %v1236, %v1237
    %v1324 = vunpack.c.l.s4 1983009808
    %v1325 = vunpack.c.0.s8 %v1324
    %v1326 = vlaneseq
    %v1327 = vshrl.u32 %v1326, 7
    %v1328 = vsub.s32 %v1325, %v1327
    %v1329 = vrot.slane %v1321, %v1328
    %v1331 = vunpack.c.l.s4 1983009808
    %v1332 = vunpack.c.0.s8 %v1331
    %v1333 = vlaneseq
    %v1334 = vshrl.u32 %v1333, 7
    %v1335 = vsub.s32 %v1332, %v1334
    %v1336 = vrot.slane %v1322, %v1335
    %v1337 = vcombine.low %v1329, %v1336
    %v1338 = vcombine.low %v1238, %v1239
    %v1339 = vcombine.low %v1240, %v1241
    %v1341 = vunpack.c.l.s4 1983009808
    %v1342 = vunpack.c.0.s8 %v1341
    %v1343 = vlaneseq
    %v1344 = vshrl.u32 %v1343, 7
    %v1345 = vsub.s32 %v1342, %v1344
    %v1346 = vrot.slane %v1338, %v1345
    %v1348 = vunpack.c.l.s4 1983009808
    %v1349 = vunpack.c.0.s8 %v1348
    %v1350 = vlaneseq
    %v1351 = vshrl.u32 %v1350, 7
    %v1352 = vsub.s32 %v1349, %v1351
    %v1353 = vrot.slane %v1339, %v1352
    %v1354 = vcombine.low %v1346, %v1353
    %v1355 = vcombine.low %v1242, %v1243
    %v1356 = vcombine.low %v1244, %v1245
    %v1358 = vunpack.c.l.s4 1983009808
    %v1359 = vunpack.c.0.s8 %v1358
    %v1360 = vlaneseq
    %v1361 = vshrl.u32 %v1360, 7
    %v1362 = vsub.s32 %v1359, %v1361
    %v1363 = vrot.slane %v1355, %v1362
    %v1365 = vunpack.c.l.s4 1983009808
    %v1366 = vunpack.c.0.s8 %v1365
    %v1367 = vlaneseq
    %v1368 = vshrl.u32 %v1367, 7
    %v1369 = vsub.s32 %v1366, %v1368
    %v1370 = vrot.slane %v1356, %v1369
    %v1371 = vcombine.low %v1363, %v1370
    %v1378 = vmax.f32 %v584, %v1286
    %v1379 = vmax.f32 %v585, %v1303
    %v1380 = vmax.f32 %v586, %v1320
    %v1381 = vmax.f32 %v587, %v1337
    %v1382 = vmax.f32 %v588, %v1354
    %v1383 = vmax.f32 %v589, %v1371
    %v1390 = vcombine.high %v915, %v915
    %v1392 = vunpack.c.l.s4 1983009808
    %v1393 = vunpack.c.0.s8 %v1392
    %v1394 = vlaneseq
    %v1395 = vshrl.u32 %v1394, 7
    %v1396 = vsub.s32 %v1393, %v1395
    %v1397 = vrot.slane %v915, %v1396
    %v1399 = vunpack.c.l.s4 1983009808
    %v1400 = vunpack.c.0.s8 %v1399
    %v1401 = vlaneseq
    %v1402 = vshrl.u32 %v1401, 7
    %v1403 = vsub.s32 %v1400, %v1402
    %v1404 = vrot.slane %v1390, %v1403
    %v1405 = vcombine.high %v1397, %v1397
    %v1406 = vcombine.high %v1404, %v1404
    %v1407 = vcombine.high %v916, %v916
    %v1409 = vunpack.c.l.s4 1983009808
    %v1410 = vunpack.c.0.s8 %v1409
    %v1411 = vlaneseq
    %v1412 = vshrl.u32 %v1411, 7
    %v1413 = vsub.s32 %v1410, %v1412
    %v1414 = vrot.slane %v916, %v1413
    %v1416 = vunpack.c.l.s4 1983009808
    %v1417 = vunpack.c.0.s8 %v1416
    %v1418 = vlaneseq
    %v1419 = vshrl.u32 %v1418, 7
    %v1420 = vsub.s32 %v1417, %v1419
    %v1421 = vrot.slane %v1407, %v1420
    %v1422 = vcombine.high %v1414, %v1414
    %v1423 = vcombine.high %v1421, %v1421
    %v1424 = vcombine.high %v917, %v917
    %v1426 = vunpack.c.l.s4 1983009808
    %v1427 = vunpack.c.0.s8 %v1426
    %v1428 = vlaneseq
    %v1429 = vshrl.u32 %v1428, 7
    %v1430 = vsub.s32 %v1427, %v1429
    %v1431 = vrot.slane %v917, %v1430
    %v1433 = vunpack.c.l.s4 1983009808
    %v1434 = vunpack.c.0.s8 %v1433
    %v1435 = vlaneseq
    %v1436 = vshrl.u32 %v1435, 7
    %v1437 = vsub.s32 %v1434, %v1436
    %v1438 = vrot.slane %v1424, %v1437
    %v1439 = vcombine.high %v1431, %v1431
    %v1440 = vcombine.high %v1438, %v1438
    %v1441 = vcombine.high %v918, %v918
    %v1443 = vunpack.c.l.s4 1983009808
    %v1444 = vunpack.c.0.s8 %v1443
    %v1445 = vlaneseq
    %v1446 = vshrl.u32 %v1445, 7
    %v1447 = vsub.s32 %v1444, %v1446
    %v1448 = vrot.slane %v918, %v1447
    %v1450 = vunpack.c.l.s4 1983009808
    %v1451 = vunpack.c.0.s8 %v1450
    %v1452 = vlaneseq
    %v1453 = vshrl.u32 %v1452, 7
    %v1454 = vsub.s32 %v1451, %v1453
    %v1455 = vrot.slane %v1441, %v1454
    %v1456 = vcombine.high %v1448, %v1448
    %v1457 = vcombine.high %v1455, %v1455
    %v1458 = vcombine.high %v919, %v919
    %v1460 = vunpack.c.l.s4 1983009808
    %v1461 = vunpack.c.0.s8 %v1460
    %v1462 = vlaneseq
    %v1463 = vshrl.u32 %v1462, 7
    %v1464 = vsub.s32 %v1461, %v1463
    %v1465 = vrot.slane %v919, %v1464
    %v1467 = vunpack.c.l.s4 1983009808
    %v1468 = vunpack.c.0.s8 %v1467
    %v1469 = vlaneseq
    %v1470 = vshrl.u32 %v1469, 7
    %v1471 = vsub.s32 %v1468, %v1470
    %v1472 = vrot.slane %v1458, %v1471
    %v1473 = vcombine.high %v1465, %v1465
    %v1474 = vcombine.high %v1472, %v1472
    %v1475 = vcombine.high %v920, %v920
    %v1477 = vunpack.c.l.s4 1983009808
    %v1478 = vunpack.c.0.s8 %v1477
    %v1479 = vlaneseq
    %v1480 = vshrl.u32 %v1479, 7
    %v1481 = vsub.s32 %v1478, %v1480
    %v1482 = vrot.slane %v920, %v1481
    %v1484 = vunpack.c.l.s4 1983009808
    %v1485 = vunpack.c.0.s8 %v1484
    %v1486 = vlaneseq
    %v1487 = vshrl.u32 %v1486, 7
    %v1488 = vsub.s32 %v1485, %v1487
    %v1489 = vrot.slane %v1475, %v1488
    %v1490 = vcombine.high %v1482, %v1482
    %v1491 = vcombine.high %v1489, %v1489
    %1516 = vrot.lane.b32.xlu0 %v1397, 126
    %v1517 = vpop.permute.xlu0 %1516
    %1518 = vrot.lane.b32.xlu0 %v1405, 126
    %v1519 = vpop.permute.xlu0 %1518
    %1520 = vrot.lane.b32.xlu0 %v1404, 126
    %v1521 = vpop.permute.xlu0 %1520
    %1522 = vrot.lane.b32.xlu0 %v1406, 126
    %v1523 = vpop.permute.xlu0 %1522
    %1524 = vrot.lane.b32.xlu0 %v1414, 126
    %v1525 = vpop.permute.xlu0 %1524
    %1526 = vrot.lane.b32.xlu0 %v1422, 126
    %v1527 = vpop.permute.xlu0 %1526
    %1528 = vrot.lane.b32.xlu0 %v1421, 126
    %v1529 = vpop.permute.xlu0 %1528
    %1530 = vrot.lane.b32.xlu0 %v1423, 126
    %v1531 = vpop.permute.xlu0 %1530
    %1532 = vrot.lane.b32.xlu0 %v1431, 126
    %v1533 = vpop.permute.xlu0 %1532
    %1534 = vrot.lane.b32.xlu0 %v1439, 126
    %v1535 = vpop.permute.xlu0 %1534
    %1536 = vrot.lane.b32.xlu0 %v1438, 126
    %v1537 = vpop.permute.xlu0 %1536
    %1538 = vrot.lane.b32.xlu0 %v1440, 126
    %v1539 = vpop.permute.xlu0 %1538
    %1540 = vrot.lane.b32.xlu0 %v1448, 126
    %v1541 = vpop.permute.xlu0 %1540
    %1542 = vrot.lane.b32.xlu0 %v1456, 126
    %v1543 = vpop.permute.xlu0 %1542
    %1544 = vrot.lane.b32.xlu0 %v1455, 126
    %v1545 = vpop.permute.xlu0 %1544
    %1546 = vrot.lane.b32.xlu0 %v1457, 126
    %v1547 = vpop.permute.xlu0 %1546
    %1548 = vrot.lane.b32.xlu0 %v1465, 126
    %v1549 = vpop.permute.xlu0 %1548
    %1550 = vrot.lane.b32.xlu0 %v1473, 126
    %v1551 = vpop.permute.xlu0 %1550
    %1552 = vrot.lane.b32.xlu0 %v1472, 126
    %v1553 = vpop.permute.xlu0 %1552
    %1554 = vrot.lane.b32.xlu0 %v1474, 126
    %v1555 = vpop.permute.xlu0 %1554
    %1556 = vrot.lane.b32.xlu0 %v1482, 126
    %v1557 = vpop.permute.xlu0 %1556
    %1558 = vrot.lane.b32.xlu0 %v1490, 126
    %v1559 = vpop.permute.xlu0 %1558
    %1560 = vrot.lane.b32.xlu0 %v1489, 126
    %v1561 = vpop.permute.xlu0 %1560
    %1562 = vrot.lane.b32.xlu0 %v1491, 126
    %v1563 = vpop.permute.xlu0 %1562
    %vm1564 = vcmp.lt.s32.totalorder %v306, 126
    %v1565 = vsel %vm1564, %v1561, %v1563
    %v1566 = vsel %vm1564, %v1559, %v1561
    %v1567 = vsel %vm1564, %v1557, %v1559
    %v1568 = vsel %vm1564, %v1555, %v1557
    %v1569 = vsel %vm1564, %v1553, %v1555
    %v1570 = vsel %vm1564, %v1551, %v1553
    %v1571 = vsel %vm1564, %v1549, %v1551
    %v1572 = vsel %vm1564, %v1547, %v1549
    %v1573 = vsel %vm1564, %v1545, %v1547
    %v1574 = vsel %vm1564, %v1543, %v1545
    %v1575 = vsel %vm1564, %v1541, %v1543
    %v1576 = vsel %vm1564, %v1539, %v1541
    %v1577 = vsel %vm1564, %v1537, %v1539
    %v1578 = vsel %vm1564, %v1535, %v1537
    %v1579 = vsel %vm1564, %v1533, %v1535
    %v1580 = vsel %vm1564, %v1531, %v1533
    %v1581 = vsel %vm1564, %v1529, %v1531
    %v1582 = vsel %vm1564, %v1527, %v1529
    %v1583 = vsel %vm1564, %v1525, %v1527
    %v1584 = vsel %vm1564, %v1523, %v1525
    %v1585 = vsel %vm1564, %v1521, %v1523
    %v1586 = vsel %vm1564, %v1519, %v1521
    %v1587 = vsel %vm1564, %v1517, %v1519
    %v1588 = vsel %vm1564, %v1563, %v1517
    %v1589 = vlaneseq
    %v1590 = vshrl.u32 %v1589, 7
    %v1591 = vsub.s32 5, %v1590
    %v1592 = vrot.slane %v77, %v1591
    %v1593 = vlaneseq
    %v1594 = vshrl.u32 %v1593, 7
    %v1595 = vsub.s32 5, %v1594
    %v1596 = vrot.slane %v78, %v1595
    %v1597 = vlaneseq
    %v1598 = vshrl.u32 %v1597, 7
    %v1599 = vsub.s32 5, %v1598
    %v1600 = vrot.slane %v79, %v1599
    %v1601 = vlaneseq
    %v1602 = vshrl.u32 %v1601, 7
    %v1603 = vsub.s32 5, %v1602
    %v1604 = vrot.slane %v80, %v1603
    %v1605 = vlaneseq
    %v1606 = vshrl.u32 %v1605, 7
    %v1607 = vsub.s32 5, %v1606
    %v1608 = vrot.slane %v81, %v1607
    %v1609 = vlaneseq
    %v1610 = vshrl.u32 %v1609, 7
    %v1611 = vsub.s32 5, %v1610
    %v1612 = vrot.slane %v82, %v1611
    %v1613 = vlaneseq
    %v1614 = vshrl.u32 %v1613, 7
    %v1615 = vsub.s32 5, %v1614
    %v1616 = vrot.slane %v83, %v1615
    %v1617 = vlaneseq
    %v1618 = vshrl.u32 %v1617, 7
    %v1619 = vsub.s32 5, %v1618
    %v1620 = vrot.slane %v84, %v1619
    %v1621 = vlaneseq
    %v1622 = vshrl.u32 %v1621, 7
    %v1623 = vsub.s32 5, %v1622
    %v1624 = vrot.slane %v85, %v1623
    %v1625 = vlaneseq
    %v1626 = vshrl.u32 %v1625, 7
    %v1627 = vsub.s32 5, %v1626
    %v1628 = vrot.slane %v86, %v1627
    %v1629 = vlaneseq
    %v1630 = vshrl.u32 %v1629, 7
    %v1631 = vsub.s32 5, %v1630
    %v1632 = vrot.slane %v87, %v1631
    %v1633 = vlaneseq
    %v1634 = vshrl.u32 %v1633, 7
    %v1635 = vsub.s32 5, %v1634
    %v1636 = vrot.slane %v88, %v1635
    %v1637 = vlaneseq
    %v1638 = vshrl.u32 %v1637, 7
    %v1639 = vsub.s32 5, %v1638
    %v1640 = vrot.slane %v89, %v1639
    %v1641 = vlaneseq
    %v1642 = vshrl.u32 %v1641, 7
    %v1643 = vsub.s32 5, %v1642
    %v1644 = vrot.slane %v90, %v1643
    %v1645 = vlaneseq
    %v1646 = vshrl.u32 %v1645, 7
    %v1647 = vsub.s32 5, %v1646
    %v1648 = vrot.slane %v91, %v1647
    %v1649 = vlaneseq
    %v1650 = vshrl.u32 %v1649, 7
    %v1651 = vsub.s32 5, %v1650
    %v1652 = vrot.slane %v92, %v1651
    %v1653 = vlaneseq
    %v1654 = vshrl.u32 %v1653, 7
    %v1655 = vsub.s32 5, %v1654
    %v1656 = vrot.slane %v93, %v1655
    %v1657 = vlaneseq
    %v1658 = vshrl.u32 %v1657, 7
    %v1659 = vsub.s32 5, %v1658
    %v1660 = vrot.slane %v94, %v1659
    %v1661 = vlaneseq
    %v1662 = vshrl.u32 %v1661, 7
    %v1663 = vsub.s32 5, %v1662
    %v1664 = vrot.slane %v95, %v1663
    %v1665 = vlaneseq
    %v1666 = vshrl.u32 %v1665, 7
    %v1667 = vsub.s32 5, %v1666
    %v1668 = vrot.slane %v96, %v1667
    %v1669 = vlaneseq
    %v1670 = vshrl.u32 %v1669, 7
    %v1671 = vsub.s32 5, %v1670
    %v1672 = vrot.slane %v97, %v1671
    %v1673 = vlaneseq
    %v1674 = vshrl.u32 %v1673, 7
    %v1675 = vsub.s32 5, %v1674
    %v1676 = vrot.slane %v98, %v1675
    %v1677 = vlaneseq
    %v1678 = vshrl.u32 %v1677, 7
    %v1679 = vsub.s32 5, %v1678
    %v1680 = vrot.slane %v99, %v1679
    %v1681 = vlaneseq
    %v1682 = vshrl.u32 %v1681, 7
    %v1683 = vsub.s32 5, %v1682
    %v1684 = vrot.slane %v100, %v1683
    %v1685 = vadd.f32 %v1587, %v1592
    %v1686 = vadd.f32 %v1586, %v1596
    %v1687 = vadd.f32 %v1585, %v1600
    %v1688 = vadd.f32 %v1584, %v1604
    %v1689 = vadd.f32 %v1583, %v1608
    %v1690 = vadd.f32 %v1582, %v1612
    %v1691 = vadd.f32 %v1581, %v1616
    %v1692 = vadd.f32 %v1580, %v1620
    %v1693 = vadd.f32 %v1579, %v1624
    %v1694 = vadd.f32 %v1578, %v1628
    %v1695 = vadd.f32 %v1577, %v1632
    %v1696 = vadd.f32 %v1576, %v1636
    %v1697 = vadd.f32 %v1575, %v1640
    %v1698 = vadd.f32 %v1574, %v1644
    %v1699 = vadd.f32 %v1573, %v1648
    %v1700 = vadd.f32 %v1572, %v1652
    %v1701 = vadd.f32 %v1571, %v1656
    %v1702 = vadd.f32 %v1570, %v1660
    %v1703 = vadd.f32 %v1569, %v1664
    %v1704 = vadd.f32 %v1568, %v1668
    %v1705 = vadd.f32 %v1567, %v1672
    %v1706 = vadd.f32 %v1566, %v1676
    %v1707 = vadd.f32 %v1565, %v1680
    %v1708 = vadd.f32 %v1588, %v1684
    %v1733 = vcombine.low %v1685, %v1686
    %v1734 = vcombine.low %v1687, %v1688
    %v1736 = vunpack.c.l.s4 1983009808
    %v1737 = vunpack.c.0.s8 %v1736
    %v1738 = vlaneseq
    %v1739 = vshrl.u32 %v1738, 7
    %v1740 = vsub.s32 %v1737, %v1739
    %v1741 = vrot.slane %v1733, %v1740
    %v1743 = vunpack.c.l.s4 1983009808
    %v1744 = vunpack.c.0.s8 %v1743
    %v1745 = vlaneseq
    %v1746 = vshrl.u32 %v1745, 7
    %v1747 = vsub.s32 %v1744, %v1746
    %v1748 = vrot.slane %v1734, %v1747
    %v1749 = vcombine.low %v1741, %v1748
    %v1750 = vcombine.low %v1689, %v1690
    %v1751 = vcombine.low %v1691, %v1692
    %v1753 = vunpack.c.l.s4 1983009808
    %v1754 = vunpack.c.0.s8 %v1753
    %v1755 = vlaneseq
    %v1756 = vshrl.u32 %v1755, 7
    %v1757 = vsub.s32 %v1754, %v1756
    %v1758 = vrot.slane %v1750, %v1757
    %v1760 = vunpack.c.l.s4 1983009808
    %v1761 = vunpack.c.0.s8 %v1760
    %v1762 = vlaneseq
    %v1763 = vshrl.u32 %v1762, 7
    %v1764 = vsub.s32 %v1761, %v1763
    %v1765 = vrot.slane %v1751, %v1764
    %v1766 = vcombine.low %v1758, %v1765
    %v1767 = vcombine.low %v1693, %v1694
    %v1768 = vcombine.low %v1695, %v1696
    %v1770 = vunpack.c.l.s4 1983009808
    %v1771 = vunpack.c.0.s8 %v1770
    %v1772 = vlaneseq
    %v1773 = vshrl.u32 %v1772, 7
    %v1774 = vsub.s32 %v1771, %v1773
    %v1775 = vrot.slane %v1767, %v1774
    %v1777 = vunpack.c.l.s4 1983009808
    %v1778 = vunpack.c.0.s8 %v1777
    %v1779 = vlaneseq
    %v1780 = vshrl.u32 %v1779, 7
    %v1781 = vsub.s32 %v1778, %v1780
    %v1782 = vrot.slane %v1768, %v1781
    %v1783 = vcombine.low %v1775, %v1782
    %v1784 = vcombine.low %v1697, %v1698
    %v1785 = vcombine.low %v1699, %v1700
    %v1787 = vunpack.c.l.s4 1983009808
    %v1788 = vunpack.c.0.s8 %v1787
    %v1789 = vlaneseq
    %v1790 = vshrl.u32 %v1789, 7
    %v1791 = vsub.s32 %v1788, %v1790
    %v1792 = vrot.slane %v1784, %v1791
    %v1794 = vunpack.c.l.s4 1983009808
    %v1795 = vunpack.c.0.s8 %v1794
    %v1796 = vlaneseq
    %v1797 = vshrl.u32 %v1796, 7
    %v1798 = vsub.s32 %v1795, %v1797
    %v1799 = vrot.slane %v1785, %v1798
    %v1800 = vcombine.low %v1792, %v1799
    %v1801 = vcombine.low %v1701, %v1702
    %v1802 = vcombine.low %v1703, %v1704
    %v1804 = vunpack.c.l.s4 1983009808
    %v1805 = vunpack.c.0.s8 %v1804
    %v1806 = vlaneseq
    %v1807 = vshrl.u32 %v1806, 7
    %v1808 = vsub.s32 %v1805, %v1807
    %v1809 = vrot.slane %v1801, %v1808
    %v1811 = vunpack.c.l.s4 1983009808
    %v1812 = vunpack.c.0.s8 %v1811
    %v1813 = vlaneseq
    %v1814 = vshrl.u32 %v1813, 7
    %v1815 = vsub.s32 %v1812, %v1814
    %v1816 = vrot.slane %v1802, %v1815
    %v1817 = vcombine.low %v1809, %v1816
    %v1818 = vcombine.low %v1705, %v1706
    %v1819 = vcombine.low %v1707, %v1708
    %v1821 = vunpack.c.l.s4 1983009808
    %v1822 = vunpack.c.0.s8 %v1821
    %v1823 = vlaneseq
    %v1824 = vshrl.u32 %v1823, 7
    %v1825 = vsub.s32 %v1822, %v1824
    %v1826 = vrot.slane %v1818, %v1825
    %v1828 = vunpack.c.l.s4 1983009808
    %v1829 = vunpack.c.0.s8 %v1828
    %v1830 = vlaneseq
    %v1831 = vshrl.u32 %v1830, 7
    %v1832 = vsub.s32 %v1829, %v1831
    %v1833 = vrot.slane %v1819, %v1832
    %v1834 = vcombine.low %v1826, %v1833
    %v1841 = vmax.f32 %v915, %v1749
    %v1842 = vmax.f32 %v916, %v1766
    %v1843 = vmax.f32 %v917, %v1783
    %v1844 = vmax.f32 %v918, %v1800
    %v1845 = vmax.f32 %v919, %v1817
    %v1846 = vmax.f32 %v920, %v1834
    %v1853 = vcombine.high %v1378, %v1378
    %v1855 = vunpack.c.l.s4 1983009808
    %v1856 = vunpack.c.0.s8 %v1855
    %v1857 = vlaneseq
    %v1858 = vshrl.u32 %v1857, 7
    %v1859 = vsub.s32 %v1856, %v1858
    %v1860 = vrot.slane %v1378, %v1859
    %v1862 = vunpack.c.l.s4 1983009808
    %v1863 = vunpack.c.0.s8 %v1862
    %v1864 = vlaneseq
    %v1865 = vshrl.u32 %v1864, 7
    %v1866 = vsub.s32 %v1863, %v1865
    %v1867 = vrot.slane %v1853, %v1866
    %v1868 = vcombine.high %v1860, %v1860
    %v1869 = vcombine.high %v1867, %v1867
    %v1870 = vcombine.high %v1379, %v1379
    %v1872 = vunpack.c.l.s4 1983009808
    %v1873 = vunpack.c.0.s8 %v1872
    %v1874 = vlaneseq
    %v1875 = vshrl.u32 %v1874, 7
    %v1876 = vsub.s32 %v1873, %v1875
    %v1877 = vrot.slane %v1379, %v1876
    %v1879 = vunpack.c.l.s4 1983009808
    %v1880 = vunpack.c.0.s8 %v1879
    %v1881 = vlaneseq
    %v1882 = vshrl.u32 %v1881, 7
    %v1883 = vsub.s32 %v1880, %v1882
    %v1884 = vrot.slane %v1870, %v1883
    %v1885 = vcombine.high %v1877, %v1877
    %v1886 = vcombine.high %v1884, %v1884
    %v1887 = vcombine.high %v1380, %v1380
    %v1889 = vunpack.c.l.s4 1983009808
    %v1890 = vunpack.c.0.s8 %v1889
    %v1891 = vlaneseq
    %v1892 = vshrl.u32 %v1891, 7
    %v1893 = vsub.s32 %v1890, %v1892
    %v1894 = vrot.slane %v1380, %v1893
    %v1896 = vunpack.c.l.s4 1983009808
    %v1897 = vunpack.c.0.s8 %v1896
    %v1898 = vlaneseq
    %v1899 = vshrl.u32 %v1898, 7
    %v1900 = vsub.s32 %v1897, %v1899
    %v1901 = vrot.slane %v1887, %v1900
    %v1902 = vcombine.high %v1894, %v1894
    %v1903 = vcombine.high %v1901, %v1901
    %v1904 = vcombine.high %v1381, %v1381
    %v1906 = vunpack.c.l.s4 1983009808
    %v1907 = vunpack.c.0.s8 %v1906
    %v1908 = vlaneseq
    %v1909 = vshrl.u32 %v1908, 7
    %v1910 = vsub.s32 %v1907, %v1909
    %v1911 = vrot.slane %v1381, %v1910
    %v1913 = vunpack.c.l.s4 1983009808
    %v1914 = vunpack.c.0.s8 %v1913
    %v1915 = vlaneseq
    %v1916 = vshrl.u32 %v1915, 7
    %v1917 = vsub.s32 %v1914, %v1916
    %v1918 = vrot.slane %v1904, %v1917
    %v1919 = vcombine.high %v1911, %v1911
    %v1920 = vcombine.high %v1918, %v1918
    %v1921 = vcombine.high %v1382, %v1382
    %v1923 = vunpack.c.l.s4 1983009808
    %v1924 = vunpack.c.0.s8 %v1923
    %v1925 = vlaneseq
    %v1926 = vshrl.u32 %v1925, 7
    %v1927 = vsub.s32 %v1924, %v1926
    %v1928 = vrot.slane %v1382, %v1927
    %v1930 = vunpack.c.l.s4 1983009808
    %v1931 = vunpack.c.0.s8 %v1930
    %v1932 = vlaneseq
    %v1933 = vshrl.u32 %v1932, 7
    %v1934 = vsub.s32 %v1931, %v1933
    %v1935 = vrot.slane %v1921, %v1934
    %v1936 = vcombine.high %v1928, %v1928
    %v1937 = vcombine.high %v1935, %v1935
    %v1938 = vcombine.high %v1383, %v1383
    %v1940 = vunpack.c.l.s4 1983009808
    %v1941 = vunpack.c.0.s8 %v1940
    %v1942 = vlaneseq
    %v1943 = vshrl.u32 %v1942, 7
    %v1944 = vsub.s32 %v1941, %v1943
    %v1945 = vrot.slane %v1383, %v1944
    %v1947 = vunpack.c.l.s4 1983009808
    %v1948 = vunpack.c.0.s8 %v1947
    %v1949 = vlaneseq
    %v1950 = vshrl.u32 %v1949, 7
    %v1951 = vsub.s32 %v1948, %v1950
    %v1952 = vrot.slane %v1938, %v1951
    %v1953 = vcombine.high %v1945, %v1945
    %v1954 = vcombine.high %v1952, %v1952
    %1979 = vrot.lane.b32.xlu0 %v1860, 4
    %v1980 = vpop.permute.xlu0 %1979
    %1981 = vrot.lane.b32.xlu0 %v1868, 4
    %v1982 = vpop.permute.xlu0 %1981
    %1983 = vrot.lane.b32.xlu0 %v1867, 4
    %v1984 = vpop.permute.xlu0 %1983
    %1985 = vrot.lane.b32.xlu0 %v1869, 4
    %v1986 = vpop.permute.xlu0 %1985
    %1987 = vrot.lane.b32.xlu0 %v1877, 4
    %v1988 = vpop.permute.xlu0 %1987
    %1989 = vrot.lane.b32.xlu0 %v1885, 4
    %v1990 = vpop.permute.xlu0 %1989
    %1991 = vrot.lane.b32.xlu0 %v1884, 4
    %v1992 = vpop.permute.xlu0 %1991
    %1993 = vrot.lane.b32.xlu0 %v1886, 4
    %v1994 = vpop.permute.xlu0 %1993
    %1995 = vrot.lane.b32.xlu0 %v1894, 4
    %v1996 = vpop.permute.xlu0 %1995
    %1997 = vrot.lane.b32.xlu0 %v1902, 4
    %v1998 = vpop.permute.xlu0 %1997
    %1999 = vrot.lane.b32.xlu0 %v1901, 4
    %v2000 = vpop.permute.xlu0 %1999
    %2001 = vrot.lane.b32.xlu0 %v1903, 4
    %v2002 = vpop.permute.xlu0 %2001
    %2003 = vrot.lane.b32.xlu0 %v1911, 4
    %v2004 = vpop.permute.xlu0 %2003
    %2005 = vrot.lane.b32.xlu0 %v1919, 4
    %v2006 = vpop.permute.xlu0 %2005
    %2007 = vrot.lane.b32.xlu0 %v1918, 4
    %v2008 = vpop.permute.xlu0 %2007
    %2009 = vrot.lane.b32.xlu0 %v1920, 4
    %v2010 = vpop.permute.xlu0 %2009
    %2011 = vrot.lane.b32.xlu0 %v1928, 4
    %v2012 = vpop.permute.xlu0 %2011
    %2013 = vrot.lane.b32.xlu0 %v1936, 4
    %v2014 = vpop.permute.xlu0 %2013
    %2015 = vrot.lane.b32.xlu0 %v1935, 4
    %v2016 = vpop.permute.xlu0 %2015
    %2017 = vrot.lane.b32.xlu0 %v1937, 4
    %v2018 = vpop.permute.xlu0 %2017
    %2019 = vrot.lane.b32.xlu0 %v1945, 4
    %v2020 = vpop.permute.xlu0 %2019
    %2021 = vrot.lane.b32.xlu0 %v1953, 4
    %v2022 = vpop.permute.xlu0 %2021
    %2023 = vrot.lane.b32.xlu0 %v1952, 4
    %v2024 = vpop.permute.xlu0 %2023
    %2025 = vrot.lane.b32.xlu0 %v1954, 4
    %v2026 = vpop.permute.xlu0 %2025
    %vm2027 = vcmp.lt.s32.totalorder %v306, 4
    %v2028 = vsel %vm2027, %v2024, %v2026
    %v2029 = vsel %vm2027, %v2022, %v2024
    %v2030 = vsel %vm2027, %v2020, %v2022
    %v2031 = vsel %vm2027, %v2018, %v2020
    %v2032 = vsel %vm2027, %v2016, %v2018
    %v2033 = vsel %vm2027, %v2014, %v2016
    %v2034 = vsel %vm2027, %v2012, %v2014
    %v2035 = vsel %vm2027, %v2010, %v2012
    %v2036 = vsel %vm2027, %v2008, %v2010
    %v2037 = vsel %vm2027, %v2006, %v2008
    %v2038 = vsel %vm2027, %v2004, %v2006
    %v2039 = vsel %vm2027, %v2002, %v2004
    %v2040 = vsel %vm2027, %v2000, %v2002
    %v2041 = vsel %vm2027, %v1998, %v2000
    %v2042 = vsel %vm2027, %v1996, %v1998
    %v2043 = vsel %vm2027, %v1994, %v1996
    %v2044 = vsel %vm2027, %v1992, %v1994
    %v2045 = vsel %vm2027, %v1990, %v1992
    %v2046 = vsel %vm2027, %v1988, %v1990
    %v2047 = vsel %vm2027, %v1986, %v1988
    %v2048 = vsel %vm2027, %v1984, %v1986
    %v2049 = vsel %vm2027, %v1982, %v1984
    %v2050 = vsel %vm2027, %v1980, %v1982
    %v2051 = vsel %vm2027, %v2026, %v1980
    %v2052 = vlaneseq
    %v2053 = vshrl.u32 %v2052, 7
    %v2054 = vsub.s32 2, %v2053
    %v2055 = vrot.slane %v77, %v2054
    %v2056 = vlaneseq
    %v2057 = vshrl.u32 %v2056, 7
    %v2058 = vsub.s32 2, %v2057
    %v2059 = vrot.slane %v78, %v2058
    %v2060 = vlaneseq
    %v2061 = vshrl.u32 %v2060, 7
    %v2062 = vsub.s32 2, %v2061
    %v2063 = vrot.slane %v79, %v2062
    %v2064 = vlaneseq
    %v2065 = vshrl.u32 %v2064, 7
    %v2066 = vsub.s32 2, %v2065
    %v2067 = vrot.slane %v80, %v2066
    %v2068 = vlaneseq
    %v2069 = vshrl.u32 %v2068, 7
    %v2070 = vsub.s32 2, %v2069
    %v2071 = vrot.slane %v81, %v2070
    %v2072 = vlaneseq
    %v2073 = vshrl.u32 %v2072, 7
    %v2074 = vsub.s32 2, %v2073
    %v2075 = vrot.slane %v82, %v2074
    %v2076 = vlaneseq
    %v2077 = vshrl.u32 %v2076, 7
    %v2078 = vsub.s32 2, %v2077
    %v2079 = vrot.slane %v83, %v2078
    %v2080 = vlaneseq
    %v2081 = vshrl.u32 %v2080, 7
    %v2082 = vsub.s32 2, %v2081
    %v2083 = vrot.slane %v84, %v2082
    %v2084 = vlaneseq
    %v2085 = vshrl.u32 %v2084, 7
    %v2086 = vsub.s32 2, %v2085
    %v2087 = vrot.slane %v85, %v2086
    %v2088 = vlaneseq
    %v2089 = vshrl.u32 %v2088, 7
    %v2090 = vsub.s32 2, %v2089
    %v2091 = vrot.slane %v86, %v2090
    %v2092 = vlaneseq
    %v2093 = vshrl.u32 %v2092, 7
    %v2094 = vsub.s32 2, %v2093
    %v2095 = vrot.slane %v87, %v2094
    %v2096 = vlaneseq
    %v2097 = vshrl.u32 %v2096, 7
    %v2098 = vsub.s32 2, %v2097
    %v2099 = vrot.slane %v88, %v2098
    %v2100 = vlaneseq
    %v2101 = vshrl.u32 %v2100, 7
    %v2102 = vsub.s32 2, %v2101
    %v2103 = vrot.slane %v89, %v2102
    %v2104 = vlaneseq
    %v2105 = vshrl.u32 %v2104, 7
    %v2106 = vsub.s32 2, %v2105
    %v2107 = vrot.slane %v90, %v2106
    %v2108 = vlaneseq
    %v2109 = vshrl.u32 %v2108, 7
    %v2110 = vsub.s32 2, %v2109
    %v2111 = vrot.slane %v91, %v2110
    %v2112 = vlaneseq
    %v2113 = vshrl.u32 %v2112, 7
    %v2114 = vsub.s32 2, %v2113
    %v2115 = vrot.slane %v92, %v2114
    %v2116 = vlaneseq
    %v2117 = vshrl.u32 %v2116, 7
    %v2118 = vsub.s32 2, %v2117
    %v2119 = vrot.slane %v93, %v2118
    %v2120 = vlaneseq
    %v2121 = vshrl.u32 %v2120, 7
    %v2122 = vsub.s32 2, %v2121
    %v2123 = vrot.slane %v94, %v2122
    %v2124 = vlaneseq
    %v2125 = vshrl.u32 %v2124, 7
    %v2126 = vsub.s32 2, %v2125
    %v2127 = vrot.slane %v95, %v2126
    %v2128 = vlaneseq
    %v2129 = vshrl.u32 %v2128, 7
    %v2130 = vsub.s32 2, %v2129
    %v2131 = vrot.slane %v96, %v2130
    %v2132 = vlaneseq
    %v2133 = vshrl.u32 %v2132, 7
    %v2134 = vsub.s32 2, %v2133
    %v2135 = vrot.slane %v97, %v2134
    %v2136 = vlaneseq
    %v2137 = vshrl.u32 %v2136, 7
    %v2138 = vsub.s32 2, %v2137
    %v2139 = vrot.slane %v98, %v2138
    %v2140 = vlaneseq
    %v2141 = vshrl.u32 %v2140, 7
    %v2142 = vsub.s32 2, %v2141
    %v2143 = vrot.slane %v99, %v2142
    %v2144 = vlaneseq
    %v2145 = vshrl.u32 %v2144, 7
    %v2146 = vsub.s32 2, %v2145
    %v2147 = vrot.slane %v100, %v2146
    %v2148 = vadd.f32 %v2051, %v2055
    %v2149 = vadd.f32 %v2050, %v2059
    %v2150 = vadd.f32 %v2049, %v2063
    %v2151 = vadd.f32 %v2048, %v2067
    %v2152 = vadd.f32 %v2047, %v2071
    %v2153 = vadd.f32 %v2046, %v2075
    %v2154 = vadd.f32 %v2045, %v2079
    %v2155 = vadd.f32 %v2044, %v2083
    %v2156 = vadd.f32 %v2043, %v2087
    %v2157 = vadd.f32 %v2042, %v2091
    %v2158 = vadd.f32 %v2041, %v2095
    %v2159 = vadd.f32 %v2040, %v2099
    %v2160 = vadd.f32 %v2039, %v2103
    %v2161 = vadd.f32 %v2038, %v2107
    %v2162 = vadd.f32 %v2037, %v2111
    %v2163 = vadd.f32 %v2036, %v2115
    %v2164 = vadd.f32 %v2035, %v2119
    %v2165 = vadd.f32 %v2034, %v2123
    %v2166 = vadd.f32 %v2033, %v2127
    %v2167 = vadd.f32 %v2032, %v2131
    %v2168 = vadd.f32 %v2031, %v2135
    %v2169 = vadd.f32 %v2030, %v2139
    %v2170 = vadd.f32 %v2029, %v2143
    %v2171 = vadd.f32 %v2028, %v2147
    %v2196 = vcombine.low %v2148, %v2149
    %v2197 = vcombine.low %v2150, %v2151
    %v2199 = vunpack.c.l.s4 1983009808
    %v2200 = vunpack.c.0.s8 %v2199
    %v2201 = vlaneseq
    %v2202 = vshrl.u32 %v2201, 7
    %v2203 = vsub.s32 %v2200, %v2202
    %v2204 = vrot.slane %v2196, %v2203
    %v2206 = vunpack.c.l.s4 1983009808
    %v2207 = vunpack.c.0.s8 %v2206
    %v2208 = vlaneseq
    %v2209 = vshrl.u32 %v2208, 7
    %v2210 = vsub.s32 %v2207, %v2209
    %v2211 = vrot.slane %v2197, %v2210
    %v2212 = vcombine.low %v2204, %v2211
    %v2213 = vcombine.low %v2152, %v2153
    %v2214 = vcombine.low %v2154, %v2155
    %v2216 = vunpack.c.l.s4 1983009808
    %v2217 = vunpack.c.0.s8 %v2216
    %v2218 = vlaneseq
    %v2219 = vshrl.u32 %v2218, 7
    %v2220 = vsub.s32 %v2217, %v2219
    %v2221 = vrot.slane %v2213, %v2220
    %v2223 = vunpack.c.l.s4 1983009808
    %v2224 = vunpack.c.0.s8 %v2223
    %v2225 = vlaneseq
    %v2226 = vshrl.u32 %v2225, 7
    %v2227 = vsub.s32 %v2224, %v2226
    %v2228 = vrot.slane %v2214, %v2227
    %v2229 = vcombine.low %v2221, %v2228
    %v2230 = vcombine.low %v2156, %v2157
    %v2231 = vcombine.low %v2158, %v2159
    %v2233 = vunpack.c.l.s4 1983009808
    %v2234 = vunpack.c.0.s8 %v2233
    %v2235 = vlaneseq
    %v2236 = vshrl.u32 %v2235, 7
    %v2237 = vsub.s32 %v2234, %v2236
    %v2238 = vrot.slane %v2230, %v2237
    %v2240 = vunpack.c.l.s4 1983009808
    %v2241 = vunpack.c.0.s8 %v2240
    %v2242 = vlaneseq
    %v2243 = vshrl.u32 %v2242, 7
    %v2244 = vsub.s32 %v2241, %v2243
    %v2245 = vrot.slane %v2231, %v2244
    %v2246 = vcombine.low %v2238, %v2245
    %v2247 = vcombine.low %v2160, %v2161
    %v2248 = vcombine.low %v2162, %v2163
    %v2250 = vunpack.c.l.s4 1983009808
    %v2251 = vunpack.c.0.s8 %v2250
    %v2252 = vlaneseq
    %v2253 = vshrl.u32 %v2252, 7
    %v2254 = vsub.s32 %v2251, %v2253
    %v2255 = vrot.slane %v2247, %v2254
    %v2257 = vunpack.c.l.s4 1983009808
    %v2258 = vunpack.c.0.s8 %v2257
    %v2259 = vlaneseq
    %v2260 = vshrl.u32 %v2259, 7
    %v2261 = vsub.s32 %v2258, %v2260
    %v2262 = vrot.slane %v2248, %v2261
    %v2263 = vcombine.low %v2255, %v2262
    %v2264 = vcombine.low %v2164, %v2165
    %v2265 = vcombine.low %v2166, %v2167
    %v2267 = vunpack.c.l.s4 1983009808
    %v2268 = vunpack.c.0.s8 %v2267
    %v2269 = vlaneseq
    %v2270 = vshrl.u32 %v2269, 7
    %v2271 = vsub.s32 %v2268, %v2270
    %v2272 = vrot.slane %v2264, %v2271
    %v2274 = vunpack.c.l.s4 1983009808
    %v2275 = vunpack.c.0.s8 %v2274
    %v2276 = vlaneseq
    %v2277 = vshrl.u32 %v2276, 7
    %v2278 = vsub.s32 %v2275, %v2277
    %v2279 = vrot.slane %v2265, %v2278
    %v2280 = vcombine.low %v2272, %v2279
    %v2281 = vcombine.low %v2168, %v2169
    %v2282 = vcombine.low %v2170, %v2171
    %v2284 = vunpack.c.l.s4 1983009808
    %v2285 = vunpack.c.0.s8 %v2284
    %v2286 = vlaneseq
    %v2287 = vshrl.u32 %v2286, 7
    %v2288 = vsub.s32 %v2285, %v2287
    %v2289 = vrot.slane %v2281, %v2288
    %v2291 = vunpack.c.l.s4 1983009808
    %v2292 = vunpack.c.0.s8 %v2291
    %v2293 = vlaneseq
    %v2294 = vshrl.u32 %v2293, 7
    %v2295 = vsub.s32 %v2292, %v2294
    %v2296 = vrot.slane %v2282, %v2295
    %v2297 = vcombine.low %v2289, %v2296
    %v2304 = vmax.f32 %v1378, %v2212
    %v2305 = vmax.f32 %v1379, %v2229
    %v2306 = vmax.f32 %v1380, %v2246
    %v2307 = vmax.f32 %v1381, %v2263
    %v2308 = vmax.f32 %v1382, %v2280
    %v2309 = vmax.f32 %v1383, %v2297
    %v2316 = vcombine.high %v1841, %v1841
    %v2318 = vunpack.c.l.s4 1983009808
    %v2319 = vunpack.c.0.s8 %v2318
    %v2320 = vlaneseq
    %v2321 = vshrl.u32 %v2320, 7
    %v2322 = vsub.s32 %v2319, %v2321
    %v2323 = vrot.slane %v1841, %v2322
    %v2325 = vunpack.c.l.s4 1983009808
    %v2326 = vunpack.c.0.s8 %v2325
    %v2327 = vlaneseq
    %v2328 = vshrl.u32 %v2327, 7
    %v2329 = vsub.s32 %v2326, %v2328
    %v2330 = vrot.slane %v2316, %v2329
    %v2331 = vcombine.high %v2323, %v2323
    %v2332 = vcombine.high %v2330, %v2330
    %v2333 = vcombine.high %v1842, %v1842
    %v2335 = vunpack.c.l.s4 1983009808
    %v2336 = vunpack.c.0.s8 %v2335
    %v2337 = vlaneseq
    %v2338 = vshrl.u32 %v2337, 7
    %v2339 = vsub.s32 %v2336, %v2338
    %v2340 = vrot.slane %v1842, %v2339
    %v2342 = vunpack.c.l.s4 1983009808
    %v2343 = vunpack.c.0.s8 %v2342
    %v2344 = vlaneseq
    %v2345 = vshrl.u32 %v2344, 7
    %v2346 = vsub.s32 %v2343, %v2345
    %v2347 = vrot.slane %v2333, %v2346
    %v2348 = vcombine.high %v2340, %v2340
    %v2349 = vcombine.high %v2347, %v2347
    %v2350 = vcombine.high %v1843, %v1843
    %v2352 = vunpack.c.l.s4 1983009808
    %v2353 = vunpack.c.0.s8 %v2352
    %v2354 = vlaneseq
    %v2355 = vshrl.u32 %v2354, 7
    %v2356 = vsub.s32 %v2353, %v2355
    %v2357 = vrot.slane %v1843, %v2356
    %v2359 = vunpack.c.l.s4 1983009808
    %v2360 = vunpack.c.0.s8 %v2359
    %v2361 = vlaneseq
    %v2362 = vshrl.u32 %v2361, 7
    %v2363 = vsub.s32 %v2360, %v2362
    %v2364 = vrot.slane %v2350, %v2363
    %v2365 = vcombine.high %v2357, %v2357
    %v2366 = vcombine.high %v2364, %v2364
    %v2367 = vcombine.high %v1844, %v1844
    %v2369 = vunpack.c.l.s4 1983009808
    %v2370 = vunpack.c.0.s8 %v2369
    %v2371 = vlaneseq
    %v2372 = vshrl.u32 %v2371, 7
    %v2373 = vsub.s32 %v2370, %v2372
    %v2374 = vrot.slane %v1844, %v2373
    %v2376 = vunpack.c.l.s4 1983009808
    %v2377 = vunpack.c.0.s8 %v2376
    %v2378 = vlaneseq
    %v2379 = vshrl.u32 %v2378, 7
    %v2380 = vsub.s32 %v2377, %v2379
    %v2381 = vrot.slane %v2367, %v2380
    %v2382 = vcombine.high %v2374, %v2374
    %v2383 = vcombine.high %v2381, %v2381
    %v2384 = vcombine.high %v1845, %v1845
    %v2386 = vunpack.c.l.s4 1983009808
    %v2387 = vunpack.c.0.s8 %v2386
    %v2388 = vlaneseq
    %v2389 = vshrl.u32 %v2388, 7
    %v2390 = vsub.s32 %v2387, %v2389
    %v2391 = vrot.slane %v1845, %v2390
    %v2393 = vunpack.c.l.s4 1983009808
    %v2394 = vunpack.c.0.s8 %v2393
    %v2395 = vlaneseq
    %v2396 = vshrl.u32 %v2395, 7
    %v2397 = vsub.s32 %v2394, %v2396
    %v2398 = vrot.slane %v2384, %v2397
    %v2399 = vcombine.high %v2391, %v2391
    %v2400 = vcombine.high %v2398, %v2398
    %v2401 = vcombine.high %v1846, %v1846
    %v2403 = vunpack.c.l.s4 1983009808
    %v2404 = vunpack.c.0.s8 %v2403
    %v2405 = vlaneseq
    %v2406 = vshrl.u32 %v2405, 7
    %v2407 = vsub.s32 %v2404, %v2406
    %v2408 = vrot.slane %v1846, %v2407
    %v2410 = vunpack.c.l.s4 1983009808
    %v2411 = vunpack.c.0.s8 %v2410
    %v2412 = vlaneseq
    %v2413 = vshrl.u32 %v2412, 7
    %v2414 = vsub.s32 %v2411, %v2413
    %v2415 = vrot.slane %v2401, %v2414
    %v2416 = vcombine.high %v2408, %v2408
    %v2417 = vcombine.high %v2415, %v2415
    %2442 = vrot.lane.b32.xlu0 %v2323, 124
    %v2443 = vpop.permute.xlu0 %2442
    %2444 = vrot.lane.b32.xlu0 %v2331, 124
    %v2445 = vpop.permute.xlu0 %2444
    %2446 = vrot.lane.b32.xlu0 %v2330, 124
    %v2447 = vpop.permute.xlu0 %2446
    %2448 = vrot.lane.b32.xlu0 %v2332, 124
    %v2449 = vpop.permute.xlu0 %2448
    %2450 = vrot.lane.b32.xlu0 %v2340, 124
    %v2451 = vpop.permute.xlu0 %2450
    %2452 = vrot.lane.b32.xlu0 %v2348, 124
    %v2453 = vpop.permute.xlu0 %2452
    %2454 = vrot.lane.b32.xlu0 %v2347, 124
    %v2455 = vpop.permute.xlu0 %2454
    %2456 = vrot.lane.b32.xlu0 %v2349, 124
    %v2457 = vpop.permute.xlu0 %2456
    %2458 = vrot.lane.b32.xlu0 %v2357, 124
    %v2459 = vpop.permute.xlu0 %2458
    %2460 = vrot.lane.b32.xlu0 %v2365, 124
    %v2461 = vpop.permute.xlu0 %2460
    %2462 = vrot.lane.b32.xlu0 %v2364, 124
    %v2463 = vpop.permute.xlu0 %2462
    %2464 = vrot.lane.b32.xlu0 %v2366, 124
    %v2465 = vpop.permute.xlu0 %2464
    %2466 = vrot.lane.b32.xlu0 %v2374, 124
    %v2467 = vpop.permute.xlu0 %2466
    %2468 = vrot.lane.b32.xlu0 %v2382, 124
    %v2469 = vpop.permute.xlu0 %2468
    %2470 = vrot.lane.b32.xlu0 %v2381, 124
    %v2471 = vpop.permute.xlu0 %2470
    %2472 = vrot.lane.b32.xlu0 %v2383, 124
    %v2473 = vpop.permute.xlu0 %2472
    %2474 = vrot.lane.b32.xlu0 %v2391, 124
    %v2475 = vpop.permute.xlu0 %2474
    %2476 = vrot.lane.b32.xlu0 %v2399, 124
    %v2477 = vpop.permute.xlu0 %2476
    %2478 = vrot.lane.b32.xlu0 %v2398, 124
    %v2479 = vpop.permute.xlu0 %2478
    %2480 = vrot.lane.b32.xlu0 %v2400, 124
    %v2481 = vpop.permute.xlu0 %2480
    %2482 = vrot.lane.b32.xlu0 %v2408, 124
    %v2483 = vpop.permute.xlu0 %2482
    %2484 = vrot.lane.b32.xlu0 %v2416, 124
    %v2485 = vpop.permute.xlu0 %2484
    %2486 = vrot.lane.b32.xlu0 %v2415, 124
    %v2487 = vpop.permute.xlu0 %2486
    %2488 = vrot.lane.b32.xlu0 %v2417, 124
    %v2489 = vpop.permute.xlu0 %2488
    %vm2490 = vcmp.lt.s32.totalorder %v306, 124
    %v2491 = vsel %vm2490, %v2487, %v2489
    %v2492 = vsel %vm2490, %v2485, %v2487
    %v2493 = vsel %vm2490, %v2483, %v2485
    %v2494 = vsel %vm2490, %v2481, %v2483
    %v2495 = vsel %vm2490, %v2479, %v2481
    %v2496 = vsel %vm2490, %v2477, %v2479
    %v2497 = vsel %vm2490, %v2475, %v2477
    %v2498 = vsel %vm2490, %v2473, %v2475
    %v2499 = vsel %vm2490, %v2471, %v2473
    %v2500 = vsel %vm2490, %v2469, %v2471
    %v2501 = vsel %vm2490, %v2467, %v2469
    %v2502 = vsel %vm2490, %v2465, %v2467
    %v2503 = vsel %vm2490, %v2463, %v2465
    %v2504 = vsel %vm2490, %v2461, %v2463
    %v2505 = vsel %vm2490, %v2459, %v2461
    %v2506 = vsel %vm2490, %v2457, %v2459
    %v2507 = vsel %vm2490, %v2455, %v2457
    %v2508 = vsel %vm2490, %v2453, %v2455
    %v2509 = vsel %vm2490, %v2451, %v2453
    %v2510 = vsel %vm2490, %v2449, %v2451
    %v2511 = vsel %vm2490, %v2447, %v2449
    %v2512 = vsel %vm2490, %v2445, %v2447
    %v2513 = vsel %vm2490, %v2443, %v2445
    %v2514 = vsel %vm2490, %v2489, %v2443
    %v2515 = vlaneseq
    %v2516 = vshrl.u32 %v2515, 7
    %v2517 = vsub.s32 6, %v2516
    %v2518 = vrot.slane %v77, %v2517
    %v2519 = vlaneseq
    %v2520 = vshrl.u32 %v2519, 7
    %v2521 = vsub.s32 6, %v2520
    %v2522 = vrot.slane %v78, %v2521
    %v2523 = vlaneseq
    %v2524 = vshrl.u32 %v2523, 7
    %v2525 = vsub.s32 6, %v2524
    %v2526 = vrot.slane %v79, %v2525
    %v2527 = vlaneseq
    %v2528 = vshrl.u32 %v2527, 7
    %v2529 = vsub.s32 6, %v2528
    %v2530 = vrot.slane %v80, %v2529
    %v2531 = vlaneseq
    %v2532 = vshrl.u32 %v2531, 7
    %v2533 = vsub.s32 6, %v2532
    %v2534 = vrot.slane %v81, %v2533
    %v2535 = vlaneseq
    %v2536 = vshrl.u32 %v2535, 7
    %v2537 = vsub.s32 6, %v2536
    %v2538 = vrot.slane %v82, %v2537
    %v2539 = vlaneseq
    %v2540 = vshrl.u32 %v2539, 7
    %v2541 = vsub.s32 6, %v2540
    %v2542 = vrot.slane %v83, %v2541
    %v2543 = vlaneseq
    %v2544 = vshrl.u32 %v2543, 7
    %v2545 = vsub.s32 6, %v2544
    %v2546 = vrot.slane %v84, %v2545
    %v2547 = vlaneseq
    %v2548 = vshrl.u32 %v2547, 7
    %v2549 = vsub.s32 6, %v2548
    %v2550 = vrot.slane %v85, %v2549
    %v2551 = vlaneseq
    %v2552 = vshrl.u32 %v2551, 7
    %v2553 = vsub.s32 6, %v2552
    %v2554 = vrot.slane %v86, %v2553
    %v2555 = vlaneseq
    %v2556 = vshrl.u32 %v2555, 7
    %v2557 = vsub.s32 6, %v2556
    %v2558 = vrot.slane %v87, %v2557
    %v2559 = vlaneseq
    %v2560 = vshrl.u32 %v2559, 7
    %v2561 = vsub.s32 6, %v2560
    %v2562 = vrot.slane %v88, %v2561
    %v2563 = vlaneseq
    %v2564 = vshrl.u32 %v2563, 7
    %v2565 = vsub.s32 6, %v2564
    %v2566 = vrot.slane %v89, %v2565
    %v2567 = vlaneseq
    %v2568 = vshrl.u32 %v2567, 7
    %v2569 = vsub.s32 6, %v2568
    %v2570 = vrot.slane %v90, %v2569
    %v2571 = vlaneseq
    %v2572 = vshrl.u32 %v2571, 7
    %v2573 = vsub.s32 6, %v2572
    %v2574 = vrot.slane %v91, %v2573
    %v2575 = vlaneseq
    %v2576 = vshrl.u32 %v2575, 7
    %v2577 = vsub.s32 6, %v2576
    %v2578 = vrot.slane %v92, %v2577
    %v2579 = vlaneseq
    %v2580 = vshrl.u32 %v2579, 7
    %v2581 = vsub.s32 6, %v2580
    %v2582 = vrot.slane %v93, %v2581
    %v2583 = vlaneseq
    %v2584 = vshrl.u32 %v2583, 7
    %v2585 = vsub.s32 6, %v2584
    %v2586 = vrot.slane %v94, %v2585
    %v2587 = vlaneseq
    %v2588 = vshrl.u32 %v2587, 7
    %v2589 = vsub.s32 6, %v2588
    %v2590 = vrot.slane %v95, %v2589
    %v2591 = vlaneseq
    %v2592 = vshrl.u32 %v2591, 7
    %v2593 = vsub.s32 6, %v2592
    %v2594 = vrot.slane %v96, %v2593
    %v2595 = vlaneseq
    %v2596 = vshrl.u32 %v2595, 7
    %v2597 = vsub.s32 6, %v2596
    %v2598 = vrot.slane %v97, %v2597
    %v2599 = vlaneseq
    %v2600 = vshrl.u32 %v2599, 7
    %v2601 = vsub.s32 6, %v2600
    %v2602 = vrot.slane %v98, %v2601
    %v2603 = vlaneseq
    %v2604 = vshrl.u32 %v2603, 7
    %v2605 = vsub.s32 6, %v2604
    %v2606 = vrot.slane %v99, %v2605
    %v2607 = vlaneseq
    %v2608 = vshrl.u32 %v2607, 7
    %v2609 = vsub.s32 6, %v2608
    %v2610 = vrot.slane %v100, %v2609
    %v2611 = vadd.f32 %v2513, %v2518
    %v2612 = vadd.f32 %v2512, %v2522
    %v2613 = vadd.f32 %v2511, %v2526
    %v2614 = vadd.f32 %v2510, %v2530
    %v2615 = vadd.f32 %v2509, %v2534
    %v2616 = vadd.f32 %v2508, %v2538
    %v2617 = vadd.f32 %v2507, %v2542
    %v2618 = vadd.f32 %v2506, %v2546
    %v2619 = vadd.f32 %v2505, %v2550
    %v2620 = vadd.f32 %v2504, %v2554
    %v2621 = vadd.f32 %v2503, %v2558
    %v2622 = vadd.f32 %v2502, %v2562
    %v2623 = vadd.f32 %v2501, %v2566
    %v2624 = vadd.f32 %v2500, %v2570
    %v2625 = vadd.f32 %v2499, %v2574
    %v2626 = vadd.f32 %v2498, %v2578
    %v2627 = vadd.f32 %v2497, %v2582
    %v2628 = vadd.f32 %v2496, %v2586
    %v2629 = vadd.f32 %v2495, %v2590
    %v2630 = vadd.f32 %v2494, %v2594
    %v2631 = vadd.f32 %v2493, %v2598
    %v2632 = vadd.f32 %v2492, %v2602
    %v2633 = vadd.f32 %v2491, %v2606
    %v2634 = vadd.f32 %v2514, %v2610
    %v2659 = vcombine.low %v2611, %v2612
    %v2660 = vcombine.low %v2613, %v2614
    %v2662 = vunpack.c.l.s4 1983009808
    %v2663 = vunpack.c.0.s8 %v2662
    %v2664 = vlaneseq
    %v2665 = vshrl.u32 %v2664, 7
    %v2666 = vsub.s32 %v2663, %v2665
    %v2667 = vrot.slane %v2659, %v2666
    %v2669 = vunpack.c.l.s4 1983009808
    %v2670 = vunpack.c.0.s8 %v2669
    %v2671 = vlaneseq
    %v2672 = vshrl.u32 %v2671, 7
    %v2673 = vsub.s32 %v2670, %v2672
    %v2674 = vrot.slane %v2660, %v2673
    %v2675 = vcombine.low %v2667, %v2674
    %v2676 = vcombine.low %v2615, %v2616
    %v2677 = vcombine.low %v2617, %v2618
    %v2679 = vunpack.c.l.s4 1983009808
    %v2680 = vunpack.c.0.s8 %v2679
    %v2681 = vlaneseq
    %v2682 = vshrl.u32 %v2681, 7
    %v2683 = vsub.s32 %v2680, %v2682
    %v2684 = vrot.slane %v2676, %v2683
    %v2686 = vunpack.c.l.s4 1983009808
    %v2687 = vunpack.c.0.s8 %v2686
    %v2688 = vlaneseq
    %v2689 = vshrl.u32 %v2688, 7
    %v2690 = vsub.s32 %v2687, %v2689
    %v2691 = vrot.slane %v2677, %v2690
    %v2692 = vcombine.low %v2684, %v2691
    %v2693 = vcombine.low %v2619, %v2620
    %v2694 = vcombine.low %v2621, %v2622
    %v2696 = vunpack.c.l.s4 1983009808
    %v2697 = vunpack.c.0.s8 %v2696
    %v2698 = vlaneseq
    %v2699 = vshrl.u32 %v2698, 7
    %v2700 = vsub.s32 %v2697, %v2699
    %v2701 = vrot.slane %v2693, %v2700
    %v2703 = vunpack.c.l.s4 1983009808
    %v2704 = vunpack.c.0.s8 %v2703
    %v2705 = vlaneseq
    %v2706 = vshrl.u32 %v2705, 7
    %v2707 = vsub.s32 %v2704, %v2706
    %v2708 = vrot.slane %v2694, %v2707
    %v2709 = vcombine.low %v2701, %v2708
    %v2710 = vcombine.low %v2623, %v2624
    %v2711 = vcombine.low %v2625, %v2626
    %v2713 = vunpack.c.l.s4 1983009808
    %v2714 = vunpack.c.0.s8 %v2713
    %v2715 = vlaneseq
    %v2716 = vshrl.u32 %v2715, 7
    %v2717 = vsub.s32 %v2714, %v2716
    %v2718 = vrot.slane %v2710, %v2717
    %v2720 = vunpack.c.l.s4 1983009808
    %v2721 = vunpack.c.0.s8 %v2720
    %v2722 = vlaneseq
    %v2723 = vshrl.u32 %v2722, 7
    %v2724 = vsub.s32 %v2721, %v2723
    %v2725 = vrot.slane %v2711, %v2724
    %v2726 = vcombine.low %v2718, %v2725
    %v2727 = vcombine.low %v2627, %v2628
    %v2728 = vcombine.low %v2629, %v2630
    %v2730 = vunpack.c.l.s4 1983009808
    %v2731 = vunpack.c.0.s8 %v2730
    %v2732 = vlaneseq
    %v2733 = vshrl.u32 %v2732, 7
    %v2734 = vsub.s32 %v2731, %v2733
    %v2735 = vrot.slane %v2727, %v2734
    %v2737 = vunpack.c.l.s4 1983009808
    %v2738 = vunpack.c.0.s8 %v2737
    %v2739 = vlaneseq
    %v2740 = vshrl.u32 %v2739, 7
    %v2741 = vsub.s32 %v2738, %v2740
    %v2742 = vrot.slane %v2728, %v2741
    %v2743 = vcombine.low %v2735, %v2742
    %v2744 = vcombine.low %v2631, %v2632
    %v2745 = vcombine.low %v2633, %v2634
    %v2747 = vunpack.c.l.s4 1983009808
    %v2748 = vunpack.c.0.s8 %v2747
    %v2749 = vlaneseq
    %v2750 = vshrl.u32 %v2749, 7
    %v2751 = vsub.s32 %v2748, %v2750
    %v2752 = vrot.slane %v2744, %v2751
    %v2754 = vunpack.c.l.s4 1983009808
    %v2755 = vunpack.c.0.s8 %v2754
    %v2756 = vlaneseq
    %v2757 = vshrl.u32 %v2756, 7
    %v2758 = vsub.s32 %v2755, %v2757
    %v2759 = vrot.slane %v2745, %v2758
    %v2760 = vcombine.low %v2752, %v2759
    %v2767 = vmax.f32 %v1841, %v2675
    %v2768 = vmax.f32 %v1842, %v2692
    %v2769 = vmax.f32 %v1843, %v2709
    %v2770 = vmax.f32 %v1844, %v2726
    %v2771 = vmax.f32 %v1845, %v2743
    %v2772 = vmax.f32 %v1846, %v2760
    %v2779 = vcombine.high %v2304, %v2304
    %v2781 = vunpack.c.l.s4 1983009808
    %v2782 = vunpack.c.0.s8 %v2781
    %v2783 = vlaneseq
    %v2784 = vshrl.u32 %v2783, 7
    %v2785 = vsub.s32 %v2782, %v2784
    %v2786 = vrot.slane %v2304, %v2785
    %v2788 = vunpack.c.l.s4 1983009808
    %v2789 = vunpack.c.0.s8 %v2788
    %v2790 = vlaneseq
    %v2791 = vshrl.u32 %v2790, 7
    %v2792 = vsub.s32 %v2789, %v2791
    %v2793 = vrot.slane %v2779, %v2792
    %v2794 = vcombine.high %v2786, %v2786
    %v2795 = vcombine.high %v2793, %v2793
    %v2796 = vcombine.high %v2305, %v2305
    %v2798 = vunpack.c.l.s4 1983009808
    %v2799 = vunpack.c.0.s8 %v2798
    %v2800 = vlaneseq
    %v2801 = vshrl.u32 %v2800, 7
    %v2802 = vsub.s32 %v2799, %v2801
    %v2803 = vrot.slane %v2305, %v2802
    %v2805 = vunpack.c.l.s4 1983009808
    %v2806 = vunpack.c.0.s8 %v2805
    %v2807 = vlaneseq
    %v2808 = vshrl.u32 %v2807, 7
    %v2809 = vsub.s32 %v2806, %v2808
    %v2810 = vrot.slane %v2796, %v2809
    %v2811 = vcombine.high %v2803, %v2803
    %v2812 = vcombine.high %v2810, %v2810
    %v2813 = vcombine.high %v2306, %v2306
    %v2815 = vunpack.c.l.s4 1983009808
    %v2816 = vunpack.c.0.s8 %v2815
    %v2817 = vlaneseq
    %v2818 = vshrl.u32 %v2817, 7
    %v2819 = vsub.s32 %v2816, %v2818
    %v2820 = vrot.slane %v2306, %v2819
    %v2822 = vunpack.c.l.s4 1983009808
    %v2823 = vunpack.c.0.s8 %v2822
    %v2824 = vlaneseq
    %v2825 = vshrl.u32 %v2824, 7
    %v2826 = vsub.s32 %v2823, %v2825
    %v2827 = vrot.slane %v2813, %v2826
    %v2828 = vcombine.high %v2820, %v2820
    %v2829 = vcombine.high %v2827, %v2827
    %v2830 = vcombine.high %v2307, %v2307
    %v2832 = vunpack.c.l.s4 1983009808
    %v2833 = vunpack.c.0.s8 %v2832
    %v2834 = vlaneseq
    %v2835 = vshrl.u32 %v2834, 7
    %v2836 = vsub.s32 %v2833, %v2835
    %v2837 = vrot.slane %v2307, %v2836
    %v2839 = vunpack.c.l.s4 1983009808
    %v2840 = vunpack.c.0.s8 %v2839
    %v2841 = vlaneseq
    %v2842 = vshrl.u32 %v2841, 7
    %v2843 = vsub.s32 %v2840, %v2842
    %v2844 = vrot.slane %v2830, %v2843
    %v2845 = vcombine.high %v2837, %v2837
    %v2846 = vcombine.high %v2844, %v2844
    %v2847 = vcombine.high %v2308, %v2308
    %v2849 = vunpack.c.l.s4 1983009808
    %v2850 = vunpack.c.0.s8 %v2849
    %v2851 = vlaneseq
    %v2852 = vshrl.u32 %v2851, 7
    %v2853 = vsub.s32 %v2850, %v2852
    %v2854 = vrot.slane %v2308, %v2853
    %v2856 = vunpack.c.l.s4 1983009808
    %v2857 = vunpack.c.0.s8 %v2856
    %v2858 = vlaneseq
    %v2859 = vshrl.u32 %v2858, 7
    %v2860 = vsub.s32 %v2857, %v2859
    %v2861 = vrot.slane %v2847, %v2860
    %v2862 = vcombine.high %v2854, %v2854
    %v2863 = vcombine.high %v2861, %v2861
    %v2864 = vcombine.high %v2309, %v2309
    %v2866 = vunpack.c.l.s4 1983009808
    %v2867 = vunpack.c.0.s8 %v2866
    %v2868 = vlaneseq
    %v2869 = vshrl.u32 %v2868, 7
    %v2870 = vsub.s32 %v2867, %v2869
    %v2871 = vrot.slane %v2309, %v2870
    %v2873 = vunpack.c.l.s4 1983009808
    %v2874 = vunpack.c.0.s8 %v2873
    %v2875 = vlaneseq
    %v2876 = vshrl.u32 %v2875, 7
    %v2877 = vsub.s32 %v2874, %v2876
    %v2878 = vrot.slane %v2864, %v2877
    %v2879 = vcombine.high %v2871, %v2871
    %v2880 = vcombine.high %v2878, %v2878
    %2905 = vrot.lane.b32.xlu0 %v2786, 8
    %v2906 = vpop.permute.xlu0 %2905
    %2907 = vrot.lane.b32.xlu0 %v2794, 8
    %v2908 = vpop.permute.xlu0 %2907
    %2909 = vrot.lane.b32.xlu0 %v2793, 8
    %v2910 = vpop.permute.xlu0 %2909
    %2911 = vrot.lane.b32.xlu0 %v2795, 8
    %v2912 = vpop.permute.xlu0 %2911
    %2913 = vrot.lane.b32.xlu0 %v2803, 8
    %v2914 = vpop.permute.xlu0 %2913
    %2915 = vrot.lane.b32.xlu0 %v2811, 8
    %v2916 = vpop.permute.xlu0 %2915
    %2917 = vrot.lane.b32.xlu0 %v2810, 8
    %v2918 = vpop.permute.xlu0 %2917
    %2919 = vrot.lane.b32.xlu0 %v2812, 8
    %v2920 = vpop.permute.xlu0 %2919
    %2921 = vrot.lane.b32.xlu0 %v2820, 8
    %v2922 = vpop.permute.xlu0 %2921
    %2923 = vrot.lane.b32.xlu0 %v2828, 8
    %v2924 = vpop.permute.xlu0 %2923
    %2925 = vrot.lane.b32.xlu0 %v2827, 8
    %v2926 = vpop.permute.xlu0 %2925
    %2927 = vrot.lane.b32.xlu0 %v2829, 8
    %v2928 = vpop.permute.xlu0 %2927
    %2929 = vrot.lane.b32.xlu0 %v2837, 8
    %v2930 = vpop.permute.xlu0 %2929
    %2931 = vrot.lane.b32.xlu0 %v2845, 8
    %v2932 = vpop.permute.xlu0 %2931
    %2933 = vrot.lane.b32.xlu0 %v2844, 8
    %v2934 = vpop.permute.xlu0 %2933
    %2935 = vrot.lane.b32.xlu0 %v2846, 8
    %v2936 = vpop.permute.xlu0 %2935
    %2937 = vrot.lane.b32.xlu0 %v2854, 8
    %v2938 = vpop.permute.xlu0 %2937
    %2939 = vrot.lane.b32.xlu0 %v2862, 8
    %v2940 = vpop.permute.xlu0 %2939
    %2941 = vrot.lane.b32.xlu0 %v2861, 8
    %v2942 = vpop.permute.xlu0 %2941
    %2943 = vrot.lane.b32.xlu0 %v2863, 8
    %v2944 = vpop.permute.xlu0 %2943
    %2945 = vrot.lane.b32.xlu0 %v2871, 8
    %v2946 = vpop.permute.xlu0 %2945
    %2947 = vrot.lane.b32.xlu0 %v2879, 8
    %v2948 = vpop.permute.xlu0 %2947
    %2949 = vrot.lane.b32.xlu0 %v2878, 8
    %v2950 = vpop.permute.xlu0 %2949
    %2951 = vrot.lane.b32.xlu0 %v2880, 8
    %v2952 = vpop.permute.xlu0 %2951
    %vm2953 = vcmp.lt.s32.totalorder %v306, 8
    %v2954 = vsel %vm2953, %v2950, %v2952
    %v2955 = vsel %vm2953, %v2948, %v2950
    %v2956 = vsel %vm2953, %v2946, %v2948
    %v2957 = vsel %vm2953, %v2944, %v2946
    %v2958 = vsel %vm2953, %v2942, %v2944
    %v2959 = vsel %vm2953, %v2940, %v2942
    %v2960 = vsel %vm2953, %v2938, %v2940
    %v2961 = vsel %vm2953, %v2936, %v2938
    %v2962 = vsel %vm2953, %v2934, %v2936
    %v2963 = vsel %vm2953, %v2932, %v2934
    %v2964 = vsel %vm2953, %v2930, %v2932
    %v2965 = vsel %vm2953, %v2928, %v2930
    %v2966 = vsel %vm2953, %v2926, %v2928
    %v2967 = vsel %vm2953, %v2924, %v2926
    %v2968 = vsel %vm2953, %v2922, %v2924
    %v2969 = vsel %vm2953, %v2920, %v2922
    %v2970 = vsel %vm2953, %v2918, %v2920
    %v2971 = vsel %vm2953, %v2916, %v2918
    %v2972 = vsel %vm2953, %v2914, %v2916
    %v2973 = vsel %vm2953, %v2912, %v2914
    %v2974 = vsel %vm2953, %v2910, %v2912
    %v2975 = vsel %vm2953, %v2908, %v2910
    %v2976 = vsel %vm2953, %v2906, %v2908
    %v2977 = vsel %vm2953, %v2952, %v2906
    %v2978 = vlaneseq
    %v2979 = vshrl.u32 %v2978, 7
    %v2980 = vsub.s32 3, %v2979
    %v2981 = vrot.slane %v77, %v2980
    %v2982 = vlaneseq
    %v2983 = vshrl.u32 %v2982, 7
    %v2984 = vsub.s32 3, %v2983
    %v2985 = vrot.slane %v78, %v2984
    %v2986 = vlaneseq
    %v2987 = vshrl.u32 %v2986, 7
    %v2988 = vsub.s32 3, %v2987
    %v2989 = vrot.slane %v79, %v2988
    %v2990 = vlaneseq
    %v2991 = vshrl.u32 %v2990, 7
    %v2992 = vsub.s32 3, %v2991
    %v2993 = vrot.slane %v80, %v2992
    %v2994 = vlaneseq
    %v2995 = vshrl.u32 %v2994, 7
    %v2996 = vsub.s32 3, %v2995
    %v2997 = vrot.slane %v81, %v2996
    %v2998 = vlaneseq
    %v2999 = vshrl.u32 %v2998, 7
    %v3000 = vsub.s32 3, %v2999
    %v3001 = vrot.slane %v82, %v3000
    %v3002 = vlaneseq
    %v3003 = vshrl.u32 %v3002, 7
    %v3004 = vsub.s32 3, %v3003
    %v3005 = vrot.slane %v83, %v3004
    %v3006 = vlaneseq
    %v3007 = vshrl.u32 %v3006, 7
    %v3008 = vsub.s32 3, %v3007
    %v3009 = vrot.slane %v84, %v3008
    %v3010 = vlaneseq
    %v3011 = vshrl.u32 %v3010, 7
    %v3012 = vsub.s32 3, %v3011
    %v3013 = vrot.slane %v85, %v3012
    %v3014 = vlaneseq
    %v3015 = vshrl.u32 %v3014, 7
    %v3016 = vsub.s32 3, %v3015
    %v3017 = vrot.slane %v86, %v3016
    %v3018 = vlaneseq
    %v3019 = vshrl.u32 %v3018, 7
    %v3020 = vsub.s32 3, %v3019
    %v3021 = vrot.slane %v87, %v3020
    %v3022 = vlaneseq
    %v3023 = vshrl.u32 %v3022, 7
    %v3024 = vsub.s32 3, %v3023
    %v3025 = vrot.slane %v88, %v3024
    %v3026 = vlaneseq
    %v3027 = vshrl.u32 %v3026, 7
    %v3028 = vsub.s32 3, %v3027
    %v3029 = vrot.slane %v89, %v3028
    %v3030 = vlaneseq
    %v3031 = vshrl.u32 %v3030, 7
    %v3032 = vsub.s32 3, %v3031
    %v3033 = vrot.slane %v90, %v3032
    %v3034 = vlaneseq
    %v3035 = vshrl.u32 %v3034, 7
    %v3036 = vsub.s32 3, %v3035
    %v3037 = vrot.slane %v91, %v3036
    %v3038 = vlaneseq
    %v3039 = vshrl.u32 %v3038, 7
    %v3040 = vsub.s32 3, %v3039
    %v3041 = vrot.slane %v92, %v3040
    %v3042 = vlaneseq
    %v3043 = vshrl.u32 %v3042, 7
    %v3044 = vsub.s32 3, %v3043
    %v3045 = vrot.slane %v93, %v3044
    %v3046 = vlaneseq
    %v3047 = vshrl.u32 %v3046, 7
    %v3048 = vsub.s32 3, %v3047
    %v3049 = vrot.slane %v94, %v3048
    %v3050 = vlaneseq
    %v3051 = vshrl.u32 %v3050, 7
    %v3052 = vsub.s32 3, %v3051
    %v3053 = vrot.slane %v95, %v3052
    %v3054 = vlaneseq
    %v3055 = vshrl.u32 %v3054, 7
    %v3056 = vsub.s32 3, %v3055
    %v3057 = vrot.slane %v96, %v3056
    %v3058 = vlaneseq
    %v3059 = vshrl.u32 %v3058, 7
    %v3060 = vsub.s32 3, %v3059
    %v3061 = vrot.slane %v97, %v3060
    %v3062 = vlaneseq
    %v3063 = vshrl.u32 %v3062, 7
    %v3064 = vsub.s32 3, %v3063
    %v3065 = vrot.slane %v98, %v3064
    %v3066 = vlaneseq
    %v3067 = vshrl.u32 %v3066, 7
    %v3068 = vsub.s32 3, %v3067
    %v3069 = vrot.slane %v99, %v3068
    %v3070 = vlaneseq
    %v3071 = vshrl.u32 %v3070, 7
    %v3072 = vsub.s32 3, %v3071
    %v3073 = vrot.slane %v100, %v3072
    %v3074 = vadd.f32 %v2977, %v2981
    %v3075 = vadd.f32 %v2976, %v2985
    %v3076 = vadd.f32 %v2975, %v2989
    %v3077 = vadd.f32 %v2974, %v2993
    %v3078 = vadd.f32 %v2973, %v2997
    %v3079 = vadd.f32 %v2972, %v3001
    %v3080 = vadd.f32 %v2971, %v3005
    %v3081 = vadd.f32 %v2970, %v3009
    %v3082 = vadd.f32 %v2969, %v3013
    %v3083 = vadd.f32 %v2968, %v3017
    %v3084 = vadd.f32 %v2967, %v3021
    %v3085 = vadd.f32 %v2966, %v3025
    %v3086 = vadd.f32 %v2965, %v3029
    %v3087 = vadd.f32 %v2964, %v3033
    %v3088 = vadd.f32 %v2963, %v3037
    %v3089 = vadd.f32 %v2962, %v3041
    %v3090 = vadd.f32 %v2961, %v3045
    %v3091 = vadd.f32 %v2960, %v3049
    %v3092 = vadd.f32 %v2959, %v3053
    %v3093 = vadd.f32 %v2958, %v3057
    %v3094 = vadd.f32 %v2957, %v3061
    %v3095 = vadd.f32 %v2956, %v3065
    %v3096 = vadd.f32 %v2955, %v3069
    %v3097 = vadd.f32 %v2954, %v3073
    %v3122 = vcombine.low %v3074, %v3075
    %v3123 = vcombine.low %v3076, %v3077
    %v3125 = vunpack.c.l.s4 1983009808
    %v3126 = vunpack.c.0.s8 %v3125
    %v3127 = vlaneseq
    %v3128 = vshrl.u32 %v3127, 7
    %v3129 = vsub.s32 %v3126, %v3128
    %v3130 = vrot.slane %v3122, %v3129
    %v3132 = vunpack.c.l.s4 1983009808
    %v3133 = vunpack.c.0.s8 %v3132
    %v3134 = vlaneseq
    %v3135 = vshrl.u32 %v3134, 7
    %v3136 = vsub.s32 %v3133, %v3135
    %v3137 = vrot.slane %v3123, %v3136
    %v3138 = vcombine.low %v3130, %v3137
    %v3139 = vcombine.low %v3078, %v3079
    %v3140 = vcombine.low %v3080, %v3081
    %v3142 = vunpack.c.l.s4 1983009808
    %v3143 = vunpack.c.0.s8 %v3142
    %v3144 = vlaneseq
    %v3145 = vshrl.u32 %v3144, 7
    %v3146 = vsub.s32 %v3143, %v3145
    %v3147 = vrot.slane %v3139, %v3146
    %v3149 = vunpack.c.l.s4 1983009808
    %v3150 = vunpack.c.0.s8 %v3149
    %v3151 = vlaneseq
    %v3152 = vshrl.u32 %v3151, 7
    %v3153 = vsub.s32 %v3150, %v3152
    %v3154 = vrot.slane %v3140, %v3153
    %v3155 = vcombine.low %v3147, %v3154
    %v3156 = vcombine.low %v3082, %v3083
    %v3157 = vcombine.low %v3084, %v3085
    %v3159 = vunpack.c.l.s4 1983009808
    %v3160 = vunpack.c.0.s8 %v3159
    %v3161 = vlaneseq
    %v3162 = vshrl.u32 %v3161, 7
    %v3163 = vsub.s32 %v3160, %v3162
    %v3164 = vrot.slane %v3156, %v3163
    %v3166 = vunpack.c.l.s4 1983009808
    %v3167 = vunpack.c.0.s8 %v3166
    %v3168 = vlaneseq
    %v3169 = vshrl.u32 %v3168, 7
    %v3170 = vsub.s32 %v3167, %v3169
    %v3171 = vrot.slane %v3157, %v3170
    %v3172 = vcombine.low %v3164, %v3171
    %v3173 = vcombine.low %v3086, %v3087
    %v3174 = vcombine.low %v3088, %v3089
    %v3176 = vunpack.c.l.s4 1983009808
    %v3177 = vunpack.c.0.s8 %v3176
    %v3178 = vlaneseq
    %v3179 = vshrl.u32 %v3178, 7
    %v3180 = vsub.s32 %v3177, %v3179
    %v3181 = vrot.slane %v3173, %v3180
    %v3183 = vunpack.c.l.s4 1983009808
    %v3184 = vunpack.c.0.s8 %v3183
    %v3185 = vlaneseq
    %v3186 = vshrl.u32 %v3185, 7
    %v3187 = vsub.s32 %v3184, %v3186
    %v3188 = vrot.slane %v3174, %v3187
    %v3189 = vcombine.low %v3181, %v3188
    %v3190 = vcombine.low %v3090, %v3091
    %v3191 = vcombine.low %v3092, %v3093
    %v3193 = vunpack.c.l.s4 1983009808
    %v3194 = vunpack.c.0.s8 %v3193
    %v3195 = vlaneseq
    %v3196 = vshrl.u32 %v3195, 7
    %v3197 = vsub.s32 %v3194, %v3196
    %v3198 = vrot.slane %v3190, %v3197
    %v3200 = vunpack.c.l.s4 1983009808
    %v3201 = vunpack.c.0.s8 %v3200
    %v3202 = vlaneseq
    %v3203 = vshrl.u32 %v3202, 7
    %v3204 = vsub.s32 %v3201, %v3203
    %v3205 = vrot.slane %v3191, %v3204
    %v3206 = vcombine.low %v3198, %v3205
    %v3207 = vcombine.low %v3094, %v3095
    %v3208 = vcombine.low %v3096, %v3097
    %v3210 = vunpack.c.l.s4 1983009808
    %v3211 = vunpack.c.0.s8 %v3210
    %v3212 = vlaneseq
    %v3213 = vshrl.u32 %v3212, 7
    %v3214 = vsub.s32 %v3211, %v3213
    %v3215 = vrot.slane %v3207, %v3214
    %v3217 = vunpack.c.l.s4 1983009808
    %v3218 = vunpack.c.0.s8 %v3217
    %v3219 = vlaneseq
    %v3220 = vshrl.u32 %v3219, 7
    %v3221 = vsub.s32 %v3218, %v3220
    %v3222 = vrot.slane %v3208, %v3221
    %v3223 = vcombine.low %v3215, %v3222
    %v3230 = vmax.f32 %v2304, %v3138
    %v3231 = vmax.f32 %v2305, %v3155
    %v3232 = vmax.f32 %v2306, %v3172
    %v3233 = vmax.f32 %v2307, %v3189
    %v3234 = vmax.f32 %v2308, %v3206
    %v3235 = vmax.f32 %v2309, %v3223
    %v3242 = vcombine.high %v2767, %v2767
    %v3244 = vunpack.c.l.s4 1983009808
    %v3245 = vunpack.c.0.s8 %v3244
    %v3246 = vlaneseq
    %v3247 = vshrl.u32 %v3246, 7
    %v3248 = vsub.s32 %v3245, %v3247
    %v3249 = vrot.slane %v2767, %v3248
    %v3251 = vunpack.c.l.s4 1983009808
    %v3252 = vunpack.c.0.s8 %v3251
    %v3253 = vlaneseq
    %v3254 = vshrl.u32 %v3253, 7
    %v3255 = vsub.s32 %v3252, %v3254
    %v3256 = vrot.slane %v3242, %v3255
    %v3257 = vcombine.high %v3249, %v3249
    %v3258 = vcombine.high %v3256, %v3256
    %v3259 = vcombine.high %v2768, %v2768
    %v3261 = vunpack.c.l.s4 1983009808
    %v3262 = vunpack.c.0.s8 %v3261
    %v3263 = vlaneseq
    %v3264 = vshrl.u32 %v3263, 7
    %v3265 = vsub.s32 %v3262, %v3264
    %v3266 = vrot.slane %v2768, %v3265
    %v3268 = vunpack.c.l.s4 1983009808
    %v3269 = vunpack.c.0.s8 %v3268
    %v3270 = vlaneseq
    %v3271 = vshrl.u32 %v3270, 7
    %v3272 = vsub.s32 %v3269, %v3271
    %v3273 = vrot.slane %v3259, %v3272
    %v3274 = vcombine.high %v3266, %v3266
    %v3275 = vcombine.high %v3273, %v3273
    %v3276 = vcombine.high %v2769, %v2769
    %v3278 = vunpack.c.l.s4 1983009808
    %v3279 = vunpack.c.0.s8 %v3278
    %v3280 = vlaneseq
    %v3281 = vshrl.u32 %v3280, 7
    %v3282 = vsub.s32 %v3279, %v3281
    %v3283 = vrot.slane %v2769, %v3282
    %v3285 = vunpack.c.l.s4 1983009808
    %v3286 = vunpack.c.0.s8 %v3285
    %v3287 = vlaneseq
    %v3288 = vshrl.u32 %v3287, 7
    %v3289 = vsub.s32 %v3286, %v3288
    %v3290 = vrot.slane %v3276, %v3289
    %v3291 = vcombine.high %v3283, %v3283
    %v3292 = vcombine.high %v3290, %v3290
    %v3293 = vcombine.high %v2770, %v2770
    %v3295 = vunpack.c.l.s4 1983009808
    %v3296 = vunpack.c.0.s8 %v3295
    %v3297 = vlaneseq
    %v3298 = vshrl.u32 %v3297, 7
    %v3299 = vsub.s32 %v3296, %v3298
    %v3300 = vrot.slane %v2770, %v3299
    %v3302 = vunpack.c.l.s4 1983009808
    %v3303 = vunpack.c.0.s8 %v3302
    %v3304 = vlaneseq
    %v3305 = vshrl.u32 %v3304, 7
    %v3306 = vsub.s32 %v3303, %v3305
    %v3307 = vrot.slane %v3293, %v3306
    %v3308 = vcombine.high %v3300, %v3300
    %v3309 = vcombine.high %v3307, %v3307
    %v3310 = vcombine.high %v2771, %v2771
    %v3312 = vunpack.c.l.s4 1983009808
    %v3313 = vunpack.c.0.s8 %v3312
    %v3314 = vlaneseq
    %v3315 = vshrl.u32 %v3314, 7
    %v3316 = vsub.s32 %v3313, %v3315
    %v3317 = vrot.slane %v2771, %v3316
    %v3319 = vunpack.c.l.s4 1983009808
    %v3320 = vunpack.c.0.s8 %v3319
    %v3321 = vlaneseq
    %v3322 = vshrl.u32 %v3321, 7
    %v3323 = vsub.s32 %v3320, %v3322
    %v3324 = vrot.slane %v3310, %v3323
    %v3325 = vcombine.high %v3317, %v3317
    %v3326 = vcombine.high %v3324, %v3324
    %v3327 = vcombine.high %v2772, %v2772
    %v3329 = vunpack.c.l.s4 1983009808
    %v3330 = vunpack.c.0.s8 %v3329
    %v3331 = vlaneseq
    %v3332 = vshrl.u32 %v3331, 7
    %v3333 = vsub.s32 %v3330, %v3332
    %v3334 = vrot.slane %v2772, %v3333
    %v3336 = vunpack.c.l.s4 1983009808
    %v3337 = vunpack.c.0.s8 %v3336
    %v3338 = vlaneseq
    %v3339 = vshrl.u32 %v3338, 7
    %v3340 = vsub.s32 %v3337, %v3339
    %v3341 = vrot.slane %v3327, %v3340
    %v3342 = vcombine.high %v3334, %v3334
    %v3343 = vcombine.high %v3341, %v3341
    %3368 = vrot.lane.b32.xlu0 %v3249, 120
    %v3369 = vpop.permute.xlu0 %3368
    %3370 = vrot.lane.b32.xlu0 %v3257, 120
    %v3371 = vpop.permute.xlu0 %3370
    %3372 = vrot.lane.b32.xlu0 %v3256, 120
    %v3373 = vpop.permute.xlu0 %3372
    %3374 = vrot.lane.b32.xlu0 %v3258, 120
    %v3375 = vpop.permute.xlu0 %3374
    %3376 = vrot.lane.b32.xlu0 %v3266, 120
    %v3377 = vpop.permute.xlu0 %3376
    %3378 = vrot.lane.b32.xlu0 %v3274, 120
    %v3379 = vpop.permute.xlu0 %3378
    %3380 = vrot.lane.b32.xlu0 %v3273, 120
    %v3381 = vpop.permute.xlu0 %3380
    %3382 = vrot.lane.b32.xlu0 %v3275, 120
    %v3383 = vpop.permute.xlu0 %3382
    %3384 = vrot.lane.b32.xlu0 %v3283, 120
    %v3385 = vpop.permute.xlu0 %3384
    %3386 = vrot.lane.b32.xlu0 %v3291, 120
    %v3387 = vpop.permute.xlu0 %3386
    %3388 = vrot.lane.b32.xlu0 %v3290, 120
    %v3389 = vpop.permute.xlu0 %3388
    %3390 = vrot.lane.b32.xlu0 %v3292, 120
    %v3391 = vpop.permute.xlu0 %3390
    %3392 = vrot.lane.b32.xlu0 %v3300, 120
    %v3393 = vpop.permute.xlu0 %3392
    %3394 = vrot.lane.b32.xlu0 %v3308, 120
    %v3395 = vpop.permute.xlu0 %3394
    %3396 = vrot.lane.b32.xlu0 %v3307, 120
    %v3397 = vpop.permute.xlu0 %3396
    %3398 = vrot.lane.b32.xlu0 %v3309, 120
    %v3399 = vpop.permute.xlu0 %3398
    %3400 = vrot.lane.b32.xlu0 %v3317, 120
    %v3401 = vpop.permute.xlu0 %3400
    %3402 = vrot.lane.b32.xlu0 %v3325, 120
    %v3403 = vpop.permute.xlu0 %3402
    %3404 = vrot.lane.b32.xlu0 %v3324, 120
    %v3405 = vpop.permute.xlu0 %3404
    %3406 = vrot.lane.b32.xlu0 %v3326, 120
    %v3407 = vpop.permute.xlu0 %3406
    %3408 = vrot.lane.b32.xlu0 %v3334, 120
    %v3409 = vpop.permute.xlu0 %3408
    %3410 = vrot.lane.b32.xlu0 %v3342, 120
    %v3411 = vpop.permute.xlu0 %3410
    %3412 = vrot.lane.b32.xlu0 %v3341, 120
    %v3413 = vpop.permute.xlu0 %3412
    %3414 = vrot.lane.b32.xlu0 %v3343, 120
    %v3415 = vpop.permute.xlu0 %3414
    %vm3416 = vcmp.lt.s32.totalorder %v306, 120
    %v3417 = vsel %vm3416, %v3413, %v3415
    %v3418 = vsel %vm3416, %v3411, %v3413
    %v3419 = vsel %vm3416, %v3409, %v3411
    %v3420 = vsel %vm3416, %v3407, %v3409
    %v3421 = vsel %vm3416, %v3405, %v3407
    %v3422 = vsel %vm3416, %v3403, %v3405
    %v3423 = vsel %vm3416, %v3401, %v3403
    %v3424 = vsel %vm3416, %v3399, %v3401
    %v3425 = vsel %vm3416, %v3397, %v3399
    %v3426 = vsel %vm3416, %v3395, %v3397
    %v3427 = vsel %vm3416, %v3393, %v3395
    %v3428 = vsel %vm3416, %v3391, %v3393
    %v3429 = vsel %vm3416, %v3389, %v3391
    %v3430 = vsel %vm3416, %v3387, %v3389
    %v3431 = vsel %vm3416, %v3385, %v3387
    %v3432 = vsel %vm3416, %v3383, %v3385
    %v3433 = vsel %vm3416, %v3381, %v3383
    %v3434 = vsel %vm3416, %v3379, %v3381
    %v3435 = vsel %vm3416, %v3377, %v3379
    %v3436 = vsel %vm3416, %v3375, %v3377
    %v3437 = vsel %vm3416, %v3373, %v3375
    %v3438 = vsel %vm3416, %v3371, %v3373
    %v3439 = vsel %vm3416, %v3369, %v3371
    %v3440 = vsel %vm3416, %v3415, %v3369
    %v3441 = vlaneseq
    %v3442 = vshrl.u32 %v3441, 7
    %v3443 = vsub.s32 7, %v3442
    %v3444 = vrot.slane %v77, %v3443
    %v3445 = vlaneseq
    %v3446 = vshrl.u32 %v3445, 7
    %v3447 = vsub.s32 7, %v3446
    %v3448 = vrot.slane %v78, %v3447
    %v3449 = vlaneseq
    %v3450 = vshrl.u32 %v3449, 7
    %v3451 = vsub.s32 7, %v3450
    %v3452 = vrot.slane %v79, %v3451
    %v3453 = vlaneseq
    %v3454 = vshrl.u32 %v3453, 7
    %v3455 = vsub.s32 7, %v3454
    %v3456 = vrot.slane %v80, %v3455
    %v3457 = vlaneseq
    %v3458 = vshrl.u32 %v3457, 7
    %v3459 = vsub.s32 7, %v3458
    %v3460 = vrot.slane %v81, %v3459
    %v3461 = vlaneseq
    %v3462 = vshrl.u32 %v3461, 7
    %v3463 = vsub.s32 7, %v3462
    %v3464 = vrot.slane %v82, %v3463
    %v3465 = vlaneseq
    %v3466 = vshrl.u32 %v3465, 7
    %v3467 = vsub.s32 7, %v3466
    %v3468 = vrot.slane %v83, %v3467
    %v3469 = vlaneseq
    %v3470 = vshrl.u32 %v3469, 7
    %v3471 = vsub.s32 7, %v3470
    %v3472 = vrot.slane %v84, %v3471
    %v3473 = vlaneseq
    %v3474 = vshrl.u32 %v3473, 7
    %v3475 = vsub.s32 7, %v3474
    %v3476 = vrot.slane %v85, %v3475
    %v3477 = vlaneseq
    %v3478 = vshrl.u32 %v3477, 7
    %v3479 = vsub.s32 7, %v3478
    %v3480 = vrot.slane %v86, %v3479
    %v3481 = vlaneseq
    %v3482 = vshrl.u32 %v3481, 7
    %v3483 = vsub.s32 7, %v3482
    %v3484 = vrot.slane %v87, %v3483
    %v3485 = vlaneseq
    %v3486 = vshrl.u32 %v3485, 7
    %v3487 = vsub.s32 7, %v3486
    %v3488 = vrot.slane %v88, %v3487
    %v3489 = vlaneseq
    %v3490 = vshrl.u32 %v3489, 7
    %v3491 = vsub.s32 7, %v3490
    %v3492 = vrot.slane %v89, %v3491
    %v3493 = vlaneseq
    %v3494 = vshrl.u32 %v3493, 7
    %v3495 = vsub.s32 7, %v3494
    %v3496 = vrot.slane %v90, %v3495
    %v3497 = vlaneseq
    %v3498 = vshrl.u32 %v3497, 7
    %v3499 = vsub.s32 7, %v3498
    %v3500 = vrot.slane %v91, %v3499
    %v3501 = vlaneseq
    %v3502 = vshrl.u32 %v3501, 7
    %v3503 = vsub.s32 7, %v3502
    %v3504 = vrot.slane %v92, %v3503
    %v3505 = vlaneseq
    %v3506 = vshrl.u32 %v3505, 7
    %v3507 = vsub.s32 7, %v3506
    %v3508 = vrot.slane %v93, %v3507
    %v3509 = vlaneseq
    %v3510 = vshrl.u32 %v3509, 7
    %v3511 = vsub.s32 7, %v3510
    %v3512 = vrot.slane %v94, %v3511
    %v3513 = vlaneseq
    %v3514 = vshrl.u32 %v3513, 7
    %v3515 = vsub.s32 7, %v3514
    %v3516 = vrot.slane %v95, %v3515
    %v3517 = vlaneseq
    %v3518 = vshrl.u32 %v3517, 7
    %v3519 = vsub.s32 7, %v3518
    %v3520 = vrot.slane %v96, %v3519
    %v3521 = vlaneseq
    %v3522 = vshrl.u32 %v3521, 7
    %v3523 = vsub.s32 7, %v3522
    %v3524 = vrot.slane %v97, %v3523
    %v3525 = vlaneseq
    %v3526 = vshrl.u32 %v3525, 7
    %v3527 = vsub.s32 7, %v3526
    %v3528 = vrot.slane %v98, %v3527
    %v3529 = vlaneseq
    %v3530 = vshrl.u32 %v3529, 7
    %v3531 = vsub.s32 7, %v3530
    %v3532 = vrot.slane %v99, %v3531
    %v3533 = vlaneseq
    %v3534 = vshrl.u32 %v3533, 7
    %v3535 = vsub.s32 7, %v3534
    %v3536 = vrot.slane %v100, %v3535
    %v3537 = vadd.f32 %v3439, %v3444
    %v3538 = vadd.f32 %v3438, %v3448
    %v3539 = vadd.f32 %v3437, %v3452
    %v3540 = vadd.f32 %v3436, %v3456
    %v3541 = vadd.f32 %v3435, %v3460
    %v3542 = vadd.f32 %v3434, %v3464
    %v3543 = vadd.f32 %v3433, %v3468
    %v3544 = vadd.f32 %v3432, %v3472
    %v3545 = vadd.f32 %v3431, %v3476
    %v3546 = vadd.f32 %v3430, %v3480
    %v3547 = vadd.f32 %v3429, %v3484
    %v3548 = vadd.f32 %v3428, %v3488
    %v3549 = vadd.f32 %v3427, %v3492
    %v3550 = vadd.f32 %v3426, %v3496
    %v3551 = vadd.f32 %v3425, %v3500
    %v3552 = vadd.f32 %v3424, %v3504
    %v3553 = vadd.f32 %v3423, %v3508
    %v3554 = vadd.f32 %v3422, %v3512
    %v3555 = vadd.f32 %v3421, %v3516
    %v3556 = vadd.f32 %v3420, %v3520
    %v3557 = vadd.f32 %v3419, %v3524
    %v3558 = vadd.f32 %v3418, %v3528
    %v3559 = vadd.f32 %v3417, %v3532
    %v3560 = vadd.f32 %v3440, %v3536
    %v3585 = vcombine.low %v3537, %v3538
    %v3586 = vcombine.low %v3539, %v3540
    %v3588 = vunpack.c.l.s4 1983009808
    %v3589 = vunpack.c.0.s8 %v3588
    %v3590 = vlaneseq
    %v3591 = vshrl.u32 %v3590, 7
    %v3592 = vsub.s32 %v3589, %v3591
    %v3593 = vrot.slane %v3585, %v3592
    %v3595 = vunpack.c.l.s4 1983009808
    %v3596 = vunpack.c.0.s8 %v3595
    %v3597 = vlaneseq
    %v3598 = vshrl.u32 %v3597, 7
    %v3599 = vsub.s32 %v3596, %v3598
    %v3600 = vrot.slane %v3586, %v3599
    %v3601 = vcombine.low %v3593, %v3600
    %v3602 = vcombine.low %v3541, %v3542
    %v3603 = vcombine.low %v3543, %v3544
    %v3605 = vunpack.c.l.s4 1983009808
    %v3606 = vunpack.c.0.s8 %v3605
    %v3607 = vlaneseq
    %v3608 = vshrl.u32 %v3607, 7
    %v3609 = vsub.s32 %v3606, %v3608
    %v3610 = vrot.slane %v3602, %v3609
    %v3612 = vunpack.c.l.s4 1983009808
    %v3613 = vunpack.c.0.s8 %v3612
    %v3614 = vlaneseq
    %v3615 = vshrl.u32 %v3614, 7
    %v3616 = vsub.s32 %v3613, %v3615
    %v3617 = vrot.slane %v3603, %v3616
    %v3618 = vcombine.low %v3610, %v3617
    %v3619 = vcombine.low %v3545, %v3546
    %v3620 = vcombine.low %v3547, %v3548
    %v3622 = vunpack.c.l.s4 1983009808
    %v3623 = vunpack.c.0.s8 %v3622
    %v3624 = vlaneseq
    %v3625 = vshrl.u32 %v3624, 7
    %v3626 = vsub.s32 %v3623, %v3625
    %v3627 = vrot.slane %v3619, %v3626
    %v3629 = vunpack.c.l.s4 1983009808
    %v3630 = vunpack.c.0.s8 %v3629
    %v3631 = vlaneseq
    %v3632 = vshrl.u32 %v3631, 7
    %v3633 = vsub.s32 %v3630, %v3632
    %v3634 = vrot.slane %v3620, %v3633
    %v3635 = vcombine.low %v3627, %v3634
    %v3636 = vcombine.low %v3549, %v3550
    %v3637 = vcombine.low %v3551, %v3552
    %v3639 = vunpack.c.l.s4 1983009808
    %v3640 = vunpack.c.0.s8 %v3639
    %v3641 = vlaneseq
    %v3642 = vshrl.u32 %v3641, 7
    %v3643 = vsub.s32 %v3640, %v3642
    %v3644 = vrot.slane %v3636, %v3643
    %v3646 = vunpack.c.l.s4 1983009808
    %v3647 = vunpack.c.0.s8 %v3646
    %v3648 = vlaneseq
    %v3649 = vshrl.u32 %v3648, 7
    %v3650 = vsub.s32 %v3647, %v3649
    %v3651 = vrot.slane %v3637, %v3650
    %v3652 = vcombine.low %v3644, %v3651
    %v3653 = vcombine.low %v3553, %v3554
    %v3654 = vcombine.low %v3555, %v3556
    %v3656 = vunpack.c.l.s4 1983009808
    %v3657 = vunpack.c.0.s8 %v3656
    %v3658 = vlaneseq
    %v3659 = vshrl.u32 %v3658, 7
    %v3660 = vsub.s32 %v3657, %v3659
    %v3661 = vrot.slane %v3653, %v3660
    %v3663 = vunpack.c.l.s4 1983009808
    %v3664 = vunpack.c.0.s8 %v3663
    %v3665 = vlaneseq
    %v3666 = vshrl.u32 %v3665, 7
    %v3667 = vsub.s32 %v3664, %v3666
    %v3668 = vrot.slane %v3654, %v3667
    %v3669 = vcombine.low %v3661, %v3668
    %v3670 = vcombine.low %v3557, %v3558
    %v3671 = vcombine.low %v3559, %v3560
    %v3673 = vunpack.c.l.s4 1983009808
    %v3674 = vunpack.c.0.s8 %v3673
    %v3675 = vlaneseq
    %v3676 = vshrl.u32 %v3675, 7
    %v3677 = vsub.s32 %v3674, %v3676
    %v3678 = vrot.slane %v3670, %v3677
    %v3680 = vunpack.c.l.s4 1983009808
    %v3681 = vunpack.c.0.s8 %v3680
    %v3682 = vlaneseq
    %v3683 = vshrl.u32 %v3682, 7
    %v3684 = vsub.s32 %v3681, %v3683
    %v3685 = vrot.slane %v3671, %v3684
    %v3686 = vcombine.low %v3678, %v3685
    %v3693 = vmax.f32 %v2767, %v3601
    %v3694 = vmax.f32 %v2768, %v3618
    %v3695 = vmax.f32 %v2769, %v3635
    %v3696 = vmax.f32 %v2770, %v3652
    %v3697 = vmax.f32 %v2771, %v3669
    %v3698 = vmax.f32 %v2772, %v3686
    %v3699 = vmax.f32 %v3230, %v3693
    %v3700 = vmax.f32 %v3231, %v3694
    %v3701 = vmax.f32 %v3232, %v3695
    %v3702 = vmax.f32 %v3233, %v3696
    %v3703 = vmax.f32 %v3234, %v3697
    %v3704 = vmax.f32 %v3235, %v3698
    %v3705 = vsub.f32 %v71, %v3699
    %v3706 = vsub.f32 %v72, %v3700
    %v3707 = vsub.f32 %v73, %v3701
    %v3708 = vsub.f32 %v74, %v3702
    %v3709 = vsub.f32 %v75, %v3703
    %v3710 = vsub.f32 %v76, %v3704
    %v3711 = vmul.f32 %v3705, 1.442695
    %v3712 = vpow.pop %v3711
    %v3713 = vmul.f32 %v3706, 1.442695
    %v3714 = vpow.pop %v3713
    %v3715 = vmul.f32 %v3707, 1.442695
    %v3716 = vpow.pop %v3715
    %v3717 = vmul.f32 %v3708, 1.442695
    %v3718 = vpow.pop %v3717
    %v3719 = vmul.f32 %v3709, 1.442695
    %v3720 = vpow.pop %v3719
    %v3721 = vmul.f32 %v3710, 1.442695
    %v3722 = vpow.pop %v3721
    %v3729 = vcombine.high %v3712, %v3712
    %v3731 = vunpack.c.l.s4 1983009808
    %v3732 = vunpack.c.0.s8 %v3731
    %v3733 = vlaneseq
    %v3734 = vshrl.u32 %v3733, 7
    %v3735 = vsub.s32 %v3732, %v3734
    %v3736 = vrot.slane %v3712, %v3735
    %v3738 = vunpack.c.l.s4 1983009808
    %v3739 = vunpack.c.0.s8 %v3738
    %v3740 = vlaneseq
    %v3741 = vshrl.u32 %v3740, 7
    %v3742 = vsub.s32 %v3739, %v3741
    %v3743 = vrot.slane %v3729, %v3742
    %v3744 = vcombine.high %v3736, %v3736
    %v3745 = vcombine.high %v3743, %v3743
    %v3746 = vcombine.high %v3714, %v3714
    %v3748 = vunpack.c.l.s4 1983009808
    %v3749 = vunpack.c.0.s8 %v3748
    %v3750 = vlaneseq
    %v3751 = vshrl.u32 %v3750, 7
    %v3752 = vsub.s32 %v3749, %v3751
    %v3753 = vrot.slane %v3714, %v3752
    %v3755 = vunpack.c.l.s4 1983009808
    %v3756 = vunpack.c.0.s8 %v3755
    %v3757 = vlaneseq
    %v3758 = vshrl.u32 %v3757, 7
    %v3759 = vsub.s32 %v3756, %v3758
    %v3760 = vrot.slane %v3746, %v3759
    %v3761 = vcombine.high %v3753, %v3753
    %v3762 = vcombine.high %v3760, %v3760
    %v3763 = vcombine.high %v3716, %v3716
    %v3765 = vunpack.c.l.s4 1983009808
    %v3766 = vunpack.c.0.s8 %v3765
    %v3767 = vlaneseq
    %v3768 = vshrl.u32 %v3767, 7
    %v3769 = vsub.s32 %v3766, %v3768
    %v3770 = vrot.slane %v3716, %v3769
    %v3772 = vunpack.c.l.s4 1983009808
    %v3773 = vunpack.c.0.s8 %v3772
    %v3774 = vlaneseq
    %v3775 = vshrl.u32 %v3774, 7
    %v3776 = vsub.s32 %v3773, %v3775
    %v3777 = vrot.slane %v3763, %v3776
    %v3778 = vcombine.high %v3770, %v3770
    %v3779 = vcombine.high %v3777, %v3777
    %v3780 = vcombine.high %v3718, %v3718
    %v3782 = vunpack.c.l.s4 1983009808
    %v3783 = vunpack.c.0.s8 %v3782
    %v3784 = vlaneseq
    %v3785 = vshrl.u32 %v3784, 7
    %v3786 = vsub.s32 %v3783, %v3785
    %v3787 = vrot.slane %v3718, %v3786
    %v3789 = vunpack.c.l.s4 1983009808
    %v3790 = vunpack.c.0.s8 %v3789
    %v3791 = vlaneseq
    %v3792 = vshrl.u32 %v3791, 7
    %v3793 = vsub.s32 %v3790, %v3792
    %v3794 = vrot.slane %v3780, %v3793
    %v3795 = vcombine.high %v3787, %v3787
    %v3796 = vcombine.high %v3794, %v3794
    %v3797 = vcombine.high %v3720, %v3720
    %v3799 = vunpack.c.l.s4 1983009808
    %v3800 = vunpack.c.0.s8 %v3799
    %v3801 = vlaneseq
    %v3802 = vshrl.u32 %v3801, 7
    %v3803 = vsub.s32 %v3800, %v3802
    %v3804 = vrot.slane %v3720, %v3803
    %v3806 = vunpack.c.l.s4 1983009808
    %v3807 = vunpack.c.0.s8 %v3806
    %v3808 = vlaneseq
    %v3809 = vshrl.u32 %v3808, 7
    %v3810 = vsub.s32 %v3807, %v3809
    %v3811 = vrot.slane %v3797, %v3810
    %v3812 = vcombine.high %v3804, %v3804
    %v3813 = vcombine.high %v3811, %v3811
    %v3814 = vcombine.high %v3722, %v3722
    %v3816 = vunpack.c.l.s4 1983009808
    %v3817 = vunpack.c.0.s8 %v3816
    %v3818 = vlaneseq
    %v3819 = vshrl.u32 %v3818, 7
    %v3820 = vsub.s32 %v3817, %v3819
    %v3821 = vrot.slane %v3722, %v3820
    %v3823 = vunpack.c.l.s4 1983009808
    %v3824 = vunpack.c.0.s8 %v3823
    %v3825 = vlaneseq
    %v3826 = vshrl.u32 %v3825, 7
    %v3827 = vsub.s32 %v3824, %v3826
    %v3828 = vrot.slane %v3814, %v3827
    %v3829 = vcombine.high %v3821, %v3821
    %v3830 = vcombine.high %v3828, %v3828
    %3855 = vrot.lane.b32.xlu0 %v3736, 1
    %v3856 = vpop.permute.xlu0 %3855
    %3857 = vrot.lane.b32.xlu0 %v3744, 1
    %v3858 = vpop.permute.xlu0 %3857
    %3859 = vrot.lane.b32.xlu0 %v3743, 1
    %v3860 = vpop.permute.xlu0 %3859
    %3861 = vrot.lane.b32.xlu0 %v3745, 1
    %v3862 = vpop.permute.xlu0 %3861
    %3863 = vrot.lane.b32.xlu0 %v3753, 1
    %v3864 = vpop.permute.xlu0 %3863
    %3865 = vrot.lane.b32.xlu0 %v3761, 1
    %v3866 = vpop.permute.xlu0 %3865
    %3867 = vrot.lane.b32.xlu0 %v3760, 1
    %v3868 = vpop.permute.xlu0 %3867
    %3869 = vrot.lane.b32.xlu0 %v3762, 1
    %v3870 = vpop.permute.xlu0 %3869
    %3871 = vrot.lane.b32.xlu0 %v3770, 1
    %v3872 = vpop.permute.xlu0 %3871
    %3873 = vrot.lane.b32.xlu0 %v3778, 1
    %v3874 = vpop.permute.xlu0 %3873
    %3875 = vrot.lane.b32.xlu0 %v3777, 1
    %v3876 = vpop.permute.xlu0 %3875
    %3877 = vrot.lane.b32.xlu0 %v3779, 1
    %v3878 = vpop.permute.xlu0 %3877
    %3879 = vrot.lane.b32.xlu0 %v3787, 1
    %v3880 = vpop.permute.xlu0 %3879
    %3881 = vrot.lane.b32.xlu0 %v3795, 1
    %v3882 = vpop.permute.xlu0 %3881
    %3883 = vrot.lane.b32.xlu0 %v3794, 1
    %v3884 = vpop.permute.xlu0 %3883
    %3885 = vrot.lane.b32.xlu0 %v3796, 1
    %v3886 = vpop.permute.xlu0 %3885
    %3887 = vrot.lane.b32.xlu0 %v3804, 1
    %v3888 = vpop.permute.xlu0 %3887
    %3889 = vrot.lane.b32.xlu0 %v3812, 1
    %v3890 = vpop.permute.xlu0 %3889
    %3891 = vrot.lane.b32.xlu0 %v3811, 1
    %v3892 = vpop.permute.xlu0 %3891
    %3893 = vrot.lane.b32.xlu0 %v3813, 1
    %v3894 = vpop.permute.xlu0 %3893
    %3895 = vrot.lane.b32.xlu0 %v3821, 1
    %v3896 = vpop.permute.xlu0 %3895
    %3897 = vrot.lane.b32.xlu0 %v3829, 1
    %v3898 = vpop.permute.xlu0 %3897
    %3899 = vrot.lane.b32.xlu0 %v3828, 1
    %v3900 = vpop.permute.xlu0 %3899
    %3901 = vrot.lane.b32.xlu0 %v3830, 1
    %v3902 = vpop.permute.xlu0 %3901
    %v3903 = vsel %vm307, %v3900, %v3902
    %v3904 = vsel %vm307, %v3898, %v3900
    %v3905 = vsel %vm307, %v3896, %v3898
    %v3906 = vsel %vm307, %v3894, %v3896
    %v3907 = vsel %vm307, %v3892, %v3894
    %v3908 = vsel %vm307, %v3890, %v3892
    %v3909 = vsel %vm307, %v3888, %v3890
    %v3910 = vsel %vm307, %v3886, %v3888
    %v3911 = vsel %vm307, %v3884, %v3886
    %v3912 = vsel %vm307, %v3882, %v3884
    %v3913 = vsel %vm307, %v3880, %v3882
    %v3914 = vsel %vm307, %v3878, %v3880
    %v3915 = vsel %vm307, %v3876, %v3878
    %v3916 = vsel %vm307, %v3874, %v3876
    %v3917 = vsel %vm307, %v3872, %v3874
    %v3918 = vsel %vm307, %v3870, %v3872
    %v3919 = vsel %vm307, %v3868, %v3870
    %v3920 = vsel %vm307, %v3866, %v3868
    %v3921 = vsel %vm307, %v3864, %v3866
    %v3922 = vsel %vm307, %v3862, %v3864
    %v3923 = vsel %vm307, %v3860, %v3862
    %v3924 = vsel %vm307, %v3858, %v3860
    %v3925 = vsel %vm307, %v3856, %v3858
    %v3926 = vsel %vm307, %v3902, %v3856
    %v3927 = vlaneseq
    %v3928 = vshrl.u32 %v3927, 7
    %v3929 = vsub.s32 0, %v3928
    %v3930 = vrot.slane %v101, %v3929
    %v3931 = vlaneseq
    %v3932 = vshrl.u32 %v3931, 7
    %v3933 = vsub.s32 0, %v3932
    %v3934 = vrot.slane %v102, %v3933
    %v3935 = vlaneseq
    %v3936 = vshrl.u32 %v3935, 7
    %v3937 = vsub.s32 0, %v3936
    %v3938 = vrot.slane %v103, %v3937
    %v3939 = vlaneseq
    %v3940 = vshrl.u32 %v3939, 7
    %v3941 = vsub.s32 0, %v3940
    %v3942 = vrot.slane %v104, %v3941
    %v3943 = vlaneseq
    %v3944 = vshrl.u32 %v3943, 7
    %v3945 = vsub.s32 0, %v3944
    %v3946 = vrot.slane %v105, %v3945
    %v3947 = vlaneseq
    %v3948 = vshrl.u32 %v3947, 7
    %v3949 = vsub.s32 0, %v3948
    %v3950 = vrot.slane %v106, %v3949
    %v3951 = vlaneseq
    %v3952 = vshrl.u32 %v3951, 7
    %v3953 = vsub.s32 0, %v3952
    %v3954 = vrot.slane %v107, %v3953
    %v3955 = vlaneseq
    %v3956 = vshrl.u32 %v3955, 7
    %v3957 = vsub.s32 0, %v3956
    %v3958 = vrot.slane %v108, %v3957
    %v3959 = vlaneseq
    %v3960 = vshrl.u32 %v3959, 7
    %v3961 = vsub.s32 0, %v3960
    %v3962 = vrot.slane %v109, %v3961
    %v3963 = vlaneseq
    %v3964 = vshrl.u32 %v3963, 7
    %v3965 = vsub.s32 0, %v3964
    %v3966 = vrot.slane %v110, %v3965
    %v3967 = vlaneseq
    %v3968 = vshrl.u32 %v3967, 7
    %v3969 = vsub.s32 0, %v3968
    %v3970 = vrot.slane %v111, %v3969
    %v3971 = vlaneseq
    %v3972 = vshrl.u32 %v3971, 7
    %v3973 = vsub.s32 0, %v3972
    %v3974 = vrot.slane %v112, %v3973
    %v3975 = vlaneseq
    %v3976 = vshrl.u32 %v3975, 7
    %v3977 = vsub.s32 0, %v3976
    %v3978 = vrot.slane %v113, %v3977
    %v3979 = vlaneseq
    %v3980 = vshrl.u32 %v3979, 7
    %v3981 = vsub.s32 0, %v3980
    %v3982 = vrot.slane %v114, %v3981
    %v3983 = vlaneseq
    %v3984 = vshrl.u32 %v3983, 7
    %v3985 = vsub.s32 0, %v3984
    %v3986 = vrot.slane %v115, %v3985
    %v3987 = vlaneseq
    %v3988 = vshrl.u32 %v3987, 7
    %v3989 = vsub.s32 0, %v3988
    %v3990 = vrot.slane %v116, %v3989
    %v3991 = vlaneseq
    %v3992 = vshrl.u32 %v3991, 7
    %v3993 = vsub.s32 0, %v3992
    %v3994 = vrot.slane %v117, %v3993
    %v3995 = vlaneseq
    %v3996 = vshrl.u32 %v3995, 7
    %v3997 = vsub.s32 0, %v3996
    %v3998 = vrot.slane %v118, %v3997
    %v3999 = vlaneseq
    %v4000 = vshrl.u32 %v3999, 7
    %v4001 = vsub.s32 0, %v4000
    %v4002 = vrot.slane %v119, %v4001
    %v4003 = vlaneseq
    %v4004 = vshrl.u32 %v4003, 7
    %v4005 = vsub.s32 0, %v4004
    %v4006 = vrot.slane %v120, %v4005
    %v4007 = vlaneseq
    %v4008 = vshrl.u32 %v4007, 7
    %v4009 = vsub.s32 0, %v4008
    %v4010 = vrot.slane %v121, %v4009
    %v4011 = vlaneseq
    %v4012 = vshrl.u32 %v4011, 7
    %v4013 = vsub.s32 0, %v4012
    %v4014 = vrot.slane %v122, %v4013
    %v4015 = vlaneseq
    %v4016 = vshrl.u32 %v4015, 7
    %v4017 = vsub.s32 0, %v4016
    %v4018 = vrot.slane %v123, %v4017
    %v4019 = vlaneseq
    %v4020 = vshrl.u32 %v4019, 7
    %v4021 = vsub.s32 0, %v4020
    %v4022 = vrot.slane %v124, %v4021
    %v4023 = vmul.f32 %v3926, %v3930
    %v4024 = vmul.f32 %v3925, %v3934
    %v4025 = vmul.f32 %v3924, %v3938
    %v4026 = vmul.f32 %v3923, %v3942
    %v4027 = vmul.f32 %v3922, %v3946
    %v4028 = vmul.f32 %v3921, %v3950
    %v4029 = vmul.f32 %v3920, %v3954
    %v4030 = vmul.f32 %v3919, %v3958
    %v4031 = vmul.f32 %v3918, %v3962
    %v4032 = vmul.f32 %v3917, %v3966
    %v4033 = vmul.f32 %v3916, %v3970
    %v4034 = vmul.f32 %v3915, %v3974
    %v4035 = vmul.f32 %v3914, %v3978
    %v4036 = vmul.f32 %v3913, %v3982
    %v4037 = vmul.f32 %v3912, %v3986
    %v4038 = vmul.f32 %v3911, %v3990
    %v4039 = vmul.f32 %v3910, %v3994
    %v4040 = vmul.f32 %v3909, %v3998
    %v4041 = vmul.f32 %v3908, %v4002
    %v4042 = vmul.f32 %v3907, %v4006
    %v4043 = vmul.f32 %v3906, %v4010
    %v4044 = vmul.f32 %v3905, %v4014
    %v4045 = vmul.f32 %v3904, %v4018
    %v4046 = vmul.f32 %v3903, %v4022
    %v4071 = vcombine.low %v4023, %v4024
    %v4072 = vcombine.low %v4025, %v4026
    %v4074 = vunpack.c.l.s4 1983009808
    %v4075 = vunpack.c.0.s8 %v4074
    %v4076 = vlaneseq
    %v4077 = vshrl.u32 %v4076, 7
    %v4078 = vsub.s32 %v4075, %v4077
    %v4079 = vrot.slane %v4071, %v4078
    %v4081 = vunpack.c.l.s4 1983009808
    %v4082 = vunpack.c.0.s8 %v4081
    %v4083 = vlaneseq
    %v4084 = vshrl.u32 %v4083, 7
    %v4085 = vsub.s32 %v4082, %v4084
    %v4086 = vrot.slane %v4072, %v4085
    %v4087 = vcombine.low %v4079, %v4086
    %v4088 = vcombine.low %v4027, %v4028
    %v4089 = vcombine.low %v4029, %v4030
    %v4091 = vunpack.c.l.s4 1983009808
    %v4092 = vunpack.c.0.s8 %v4091
    %v4093 = vlaneseq
    %v4094 = vshrl.u32 %v4093, 7
    %v4095 = vsub.s32 %v4092, %v4094
    %v4096 = vrot.slane %v4088, %v4095
    %v4098 = vunpack.c.l.s4 1983009808
    %v4099 = vunpack.c.0.s8 %v4098
    %v4100 = vlaneseq
    %v4101 = vshrl.u32 %v4100, 7
    %v4102 = vsub.s32 %v4099, %v4101
    %v4103 = vrot.slane %v4089, %v4102
    %v4104 = vcombine.low %v4096, %v4103
    %v4105 = vcombine.low %v4031, %v4032
    %v4106 = vcombine.low %v4033, %v4034
    %v4108 = vunpack.c.l.s4 1983009808
    %v4109 = vunpack.c.0.s8 %v4108
    %v4110 = vlaneseq
    %v4111 = vshrl.u32 %v4110, 7
    %v4112 = vsub.s32 %v4109, %v4111
    %v4113 = vrot.slane %v4105, %v4112
    %v4115 = vunpack.c.l.s4 1983009808
    %v4116 = vunpack.c.0.s8 %v4115
    %v4117 = vlaneseq
    %v4118 = vshrl.u32 %v4117, 7
    %v4119 = vsub.s32 %v4116, %v4118
    %v4120 = vrot.slane %v4106, %v4119
    %v4121 = vcombine.low %v4113, %v4120
    %v4122 = vcombine.low %v4035, %v4036
    %v4123 = vcombine.low %v4037, %v4038
    %v4125 = vunpack.c.l.s4 1983009808
    %v4126 = vunpack.c.0.s8 %v4125
    %v4127 = vlaneseq
    %v4128 = vshrl.u32 %v4127, 7
    %v4129 = vsub.s32 %v4126, %v4128
    %v4130 = vrot.slane %v4122, %v4129
    %v4132 = vunpack.c.l.s4 1983009808
    %v4133 = vunpack.c.0.s8 %v4132
    %v4134 = vlaneseq
    %v4135 = vshrl.u32 %v4134, 7
    %v4136 = vsub.s32 %v4133, %v4135
    %v4137 = vrot.slane %v4123, %v4136
    %v4138 = vcombine.low %v4130, %v4137
    %v4139 = vcombine.low %v4039, %v4040
    %v4140 = vcombine.low %v4041, %v4042
    %v4142 = vunpack.c.l.s4 1983009808
    %v4143 = vunpack.c.0.s8 %v4142
    %v4144 = vlaneseq
    %v4145 = vshrl.u32 %v4144, 7
    %v4146 = vsub.s32 %v4143, %v4145
    %v4147 = vrot.slane %v4139, %v4146
    %v4149 = vunpack.c.l.s4 1983009808
    %v4150 = vunpack.c.0.s8 %v4149
    %v4151 = vlaneseq
    %v4152 = vshrl.u32 %v4151, 7
    %v4153 = vsub.s32 %v4150, %v4152
    %v4154 = vrot.slane %v4140, %v4153
    %v4155 = vcombine.low %v4147, %v4154
    %v4156 = vcombine.low %v4043, %v4044
    %v4157 = vcombine.low %v4045, %v4046
    %v4159 = vunpack.c.l.s4 1983009808
    %v4160 = vunpack.c.0.s8 %v4159
    %v4161 = vlaneseq
    %v4162 = vshrl.u32 %v4161, 7
    %v4163 = vsub.s32 %v4160, %v4162
    %v4164 = vrot.slane %v4156, %v4163
    %v4166 = vunpack.c.l.s4 1983009808
    %v4167 = vunpack.c.0.s8 %v4166
    %v4168 = vlaneseq
    %v4169 = vshrl.u32 %v4168, 7
    %v4170 = vsub.s32 %v4167, %v4169
    %v4171 = vrot.slane %v4157, %v4170
    %v4172 = vcombine.low %v4164, %v4171
    %v4179 = vadd.f32 %v3712, %v4087
    %v4180 = vadd.f32 %v3714, %v4104
    %v4181 = vadd.f32 %v3716, %v4121
    %v4182 = vadd.f32 %v3718, %v4138
    %v4183 = vadd.f32 %v3720, %v4155
    %v4184 = vadd.f32 %v3722, %v4172
    %4185 = vrot.lane.b32.xlu0 %v3736, 127
    %v4186 = vpop.permute.xlu0 %4185
    %4187 = vrot.lane.b32.xlu0 %v3744, 127
    %v4188 = vpop.permute.xlu0 %4187
    %4189 = vrot.lane.b32.xlu0 %v3743, 127
    %v4190 = vpop.permute.xlu0 %4189
    %4191 = vrot.lane.b32.xlu0 %v3745, 127
    %v4192 = vpop.permute.xlu0 %4191
    %4193 = vrot.lane.b32.xlu0 %v3753, 127
    %v4194 = vpop.permute.xlu0 %4193
    %4195 = vrot.lane.b32.xlu0 %v3761, 127
    %v4196 = vpop.permute.xlu0 %4195
    %4197 = vrot.lane.b32.xlu0 %v3760, 127
    %v4198 = vpop.permute.xlu0 %4197
    %4199 = vrot.lane.b32.xlu0 %v3762, 127
    %v4200 = vpop.permute.xlu0 %4199
    %4201 = vrot.lane.b32.xlu0 %v3770, 127
    %v4202 = vpop.permute.xlu0 %4201
    %4203 = vrot.lane.b32.xlu0 %v3778, 127
    %v4204 = vpop.permute.xlu0 %4203
    %4205 = vrot.lane.b32.xlu0 %v3777, 127
    %v4206 = vpop.permute.xlu0 %4205
    %4207 = vrot.lane.b32.xlu0 %v3779, 127
    %v4208 = vpop.permute.xlu0 %4207
    %4209 = vrot.lane.b32.xlu0 %v3787, 127
    %v4210 = vpop.permute.xlu0 %4209
    %4211 = vrot.lane.b32.xlu0 %v3795, 127
    %v4212 = vpop.permute.xlu0 %4211
    %4213 = vrot.lane.b32.xlu0 %v3794, 127
    %v4214 = vpop.permute.xlu0 %4213
    %4215 = vrot.lane.b32.xlu0 %v3796, 127
    %v4216 = vpop.permute.xlu0 %4215
    %4217 = vrot.lane.b32.xlu0 %v3804, 127
    %v4218 = vpop.permute.xlu0 %4217
    %4219 = vrot.lane.b32.xlu0 %v3812, 127
    %v4220 = vpop.permute.xlu0 %4219
    %4221 = vrot.lane.b32.xlu0 %v3811, 127
    %v4222 = vpop.permute.xlu0 %4221
    %4223 = vrot.lane.b32.xlu0 %v3813, 127
    %v4224 = vpop.permute.xlu0 %4223
    %4225 = vrot.lane.b32.xlu0 %v3821, 127
    %v4226 = vpop.permute.xlu0 %4225
    %4227 = vrot.lane.b32.xlu0 %v3829, 127
    %v4228 = vpop.permute.xlu0 %4227
    %4229 = vrot.lane.b32.xlu0 %v3828, 127
    %v4230 = vpop.permute.xlu0 %4229
    %4231 = vrot.lane.b32.xlu0 %v3830, 127
    %v4232 = vpop.permute.xlu0 %4231
    %v4233 = vsel %vm638, %v4230, %v4232
    %v4234 = vsel %vm638, %v4228, %v4230
    %v4235 = vsel %vm638, %v4226, %v4228
    %v4236 = vsel %vm638, %v4224, %v4226
    %v4237 = vsel %vm638, %v4222, %v4224
    %v4238 = vsel %vm638, %v4220, %v4222
    %v4239 = vsel %vm638, %v4218, %v4220
    %v4240 = vsel %vm638, %v4216, %v4218
    %v4241 = vsel %vm638, %v4214, %v4216
    %v4242 = vsel %vm638, %v4212, %v4214
    %v4243 = vsel %vm638, %v4210, %v4212
    %v4244 = vsel %vm638, %v4208, %v4210
    %v4245 = vsel %vm638, %v4206, %v4208
    %v4246 = vsel %vm638, %v4204, %v4206
    %v4247 = vsel %vm638, %v4202, %v4204
    %v4248 = vsel %vm638, %v4200, %v4202
    %v4249 = vsel %vm638, %v4198, %v4200
    %v4250 = vsel %vm638, %v4196, %v4198
    %v4251 = vsel %vm638, %v4194, %v4196
    %v4252 = vsel %vm638, %v4192, %v4194
    %v4253 = vsel %vm638, %v4190, %v4192
    %v4254 = vsel %vm638, %v4188, %v4190
    %v4255 = vsel %vm638, %v4186, %v4188
    %v4256 = vsel %vm638, %v4232, %v4186
    %v4257 = vlaneseq
    %v4258 = vshrl.u32 %v4257, 7
    %v4259 = vsub.s32 4, %v4258
    %v4260 = vrot.slane %v101, %v4259
    %v4261 = vlaneseq
    %v4262 = vshrl.u32 %v4261, 7
    %v4263 = vsub.s32 4, %v4262
    %v4264 = vrot.slane %v102, %v4263
    %v4265 = vlaneseq
    %v4266 = vshrl.u32 %v4265, 7
    %v4267 = vsub.s32 4, %v4266
    %v4268 = vrot.slane %v103, %v4267
    %v4269 = vlaneseq
    %v4270 = vshrl.u32 %v4269, 7
    %v4271 = vsub.s32 4, %v4270
    %v4272 = vrot.slane %v104, %v4271
    %v4273 = vlaneseq
    %v4274 = vshrl.u32 %v4273, 7
    %v4275 = vsub.s32 4, %v4274
    %v4276 = vrot.slane %v105, %v4275
    %v4277 = vlaneseq
    %v4278 = vshrl.u32 %v4277, 7
    %v4279 = vsub.s32 4, %v4278
    %v4280 = vrot.slane %v106, %v4279
    %v4281 = vlaneseq
    %v4282 = vshrl.u32 %v4281, 7
    %v4283 = vsub.s32 4, %v4282
    %v4284 = vrot.slane %v107, %v4283
    %v4285 = vlaneseq
    %v4286 = vshrl.u32 %v4285, 7
    %v4287 = vsub.s32 4, %v4286
    %v4288 = vrot.slane %v108, %v4287
    %v4289 = vlaneseq
    %v4290 = vshrl.u32 %v4289, 7
    %v4291 = vsub.s32 4, %v4290
    %v4292 = vrot.slane %v109, %v4291
    %v4293 = vlaneseq
    %v4294 = vshrl.u32 %v4293, 7
    %v4295 = vsub.s32 4, %v4294
    %v4296 = vrot.slane %v110, %v4295
    %v4297 = vlaneseq
    %v4298 = vshrl.u32 %v4297, 7
    %v4299 = vsub.s32 4, %v4298
    %v4300 = vrot.slane %v111, %v4299
    %v4301 = vlaneseq
    %v4302 = vshrl.u32 %v4301, 7
    %v4303 = vsub.s32 4, %v4302
    %v4304 = vrot.slane %v112, %v4303
    %v4305 = vlaneseq
    %v4306 = vshrl.u32 %v4305, 7
    %v4307 = vsub.s32 4, %v4306
    %v4308 = vrot.slane %v113, %v4307
    %v4309 = vlaneseq
    %v4310 = vshrl.u32 %v4309, 7
    %v4311 = vsub.s32 4, %v4310
    %v4312 = vrot.slane %v114, %v4311
    %v4313 = vlaneseq
    %v4314 = vshrl.u32 %v4313, 7
    %v4315 = vsub.s32 4, %v4314
    %v4316 = vrot.slane %v115, %v4315
    %v4317 = vlaneseq
    %v4318 = vshrl.u32 %v4317, 7
    %v4319 = vsub.s32 4, %v4318
    %v4320 = vrot.slane %v116, %v4319
    %v4321 = vlaneseq
    %v4322 = vshrl.u32 %v4321, 7
    %v4323 = vsub.s32 4, %v4322
    %v4324 = vrot.slane %v117, %v4323
    %v4325 = vlaneseq
    %v4326 = vshrl.u32 %v4325, 7
    %v4327 = vsub.s32 4, %v4326
    %v4328 = vrot.slane %v118, %v4327
    %v4329 = vlaneseq
    %v4330 = vshrl.u32 %v4329, 7
    %v4331 = vsub.s32 4, %v4330
    %v4332 = vrot.slane %v119, %v4331
    %v4333 = vlaneseq
    %v4334 = vshrl.u32 %v4333, 7
    %v4335 = vsub.s32 4, %v4334
    %v4336 = vrot.slane %v120, %v4335
    %v4337 = vlaneseq
    %v4338 = vshrl.u32 %v4337, 7
    %v4339 = vsub.s32 4, %v4338
    %v4340 = vrot.slane %v121, %v4339
    %v4341 = vlaneseq
    %v4342 = vshrl.u32 %v4341, 7
    %v4343 = vsub.s32 4, %v4342
    %v4344 = vrot.slane %v122, %v4343
    %v4345 = vlaneseq
    %v4346 = vshrl.u32 %v4345, 7
    %v4347 = vsub.s32 4, %v4346
    %v4348 = vrot.slane %v123, %v4347
    %v4349 = vlaneseq
    %v4350 = vshrl.u32 %v4349, 7
    %v4351 = vsub.s32 4, %v4350
    %v4352 = vrot.slane %v124, %v4351
    %v4353 = vmul.f32 %v4255, %v4260
    %v4354 = vmul.f32 %v4254, %v4264
    %v4355 = vmul.f32 %v4253, %v4268
    %v4356 = vmul.f32 %v4252, %v4272
    %v4357 = vmul.f32 %v4251, %v4276
    %v4358 = vmul.f32 %v4250, %v4280
    %v4359 = vmul.f32 %v4249, %v4284
    %v4360 = vmul.f32 %v4248, %v4288
    %v4361 = vmul.f32 %v4247, %v4292
    %v4362 = vmul.f32 %v4246, %v4296
    %v4363 = vmul.f32 %v4245, %v4300
    %v4364 = vmul.f32 %v4244, %v4304
    %v4365 = vmul.f32 %v4243, %v4308
    %v4366 = vmul.f32 %v4242, %v4312
    %v4367 = vmul.f32 %v4241, %v4316
    %v4368 = vmul.f32 %v4240, %v4320
    %v4369 = vmul.f32 %v4239, %v4324
    %v4370 = vmul.f32 %v4238, %v4328
    %v4371 = vmul.f32 %v4237, %v4332
    %v4372 = vmul.f32 %v4236, %v4336
    %v4373 = vmul.f32 %v4235, %v4340
    %v4374 = vmul.f32 %v4234, %v4344
    %v4375 = vmul.f32 %v4233, %v4348
    %v4376 = vmul.f32 %v4256, %v4352
    %v4401 = vcombine.low %v4353, %v4354
    %v4402 = vcombine.low %v4355, %v4356
    %v4404 = vunpack.c.l.s4 1983009808
    %v4405 = vunpack.c.0.s8 %v4404
    %v4406 = vlaneseq
    %v4407 = vshrl.u32 %v4406, 7
    %v4408 = vsub.s32 %v4405, %v4407
    %v4409 = vrot.slane %v4401, %v4408
    %v4411 = vunpack.c.l.s4 1983009808
    %v4412 = vunpack.c.0.s8 %v4411
    %v4413 = vlaneseq
    %v4414 = vshrl.u32 %v4413, 7
    %v4415 = vsub.s32 %v4412, %v4414
    %v4416 = vrot.slane %v4402, %v4415
    %v4417 = vcombine.low %v4409, %v4416
    %v4418 = vcombine.low %v4357, %v4358
    %v4419 = vcombine.low %v4359, %v4360
    %v4421 = vunpack.c.l.s4 1983009808
    %v4422 = vunpack.c.0.s8 %v4421
    %v4423 = vlaneseq
    %v4424 = vshrl.u32 %v4423, 7
    %v4425 = vsub.s32 %v4422, %v4424
    %v4426 = vrot.slane %v4418, %v4425
    %v4428 = vunpack.c.l.s4 1983009808
    %v4429 = vunpack.c.0.s8 %v4428
    %v4430 = vlaneseq
    %v4431 = vshrl.u32 %v4430, 7
    %v4432 = vsub.s32 %v4429, %v4431
    %v4433 = vrot.slane %v4419, %v4432
    %v4434 = vcombine.low %v4426, %v4433
    %v4435 = vcombine.low %v4361, %v4362
    %v4436 = vcombine.low %v4363, %v4364
    %v4438 = vunpack.c.l.s4 1983009808
    %v4439 = vunpack.c.0.s8 %v4438
    %v4440 = vlaneseq
    %v4441 = vshrl.u32 %v4440, 7
    %v4442 = vsub.s32 %v4439, %v4441
    %v4443 = vrot.slane %v4435, %v4442
    %v4445 = vunpack.c.l.s4 1983009808
    %v4446 = vunpack.c.0.s8 %v4445
    %v4447 = vlaneseq
    %v4448 = vshrl.u32 %v4447, 7
    %v4449 = vsub.s32 %v4446, %v4448
    %v4450 = vrot.slane %v4436, %v4449
    %v4451 = vcombine.low %v4443, %v4450
    %v4452 = vcombine.low %v4365, %v4366
    %v4453 = vcombine.low %v4367, %v4368
    %v4455 = vunpack.c.l.s4 1983009808
    %v4456 = vunpack.c.0.s8 %v4455
    %v4457 = vlaneseq
    %v4458 = vshrl.u32 %v4457, 7
    %v4459 = vsub.s32 %v4456, %v4458
    %v4460 = vrot.slane %v4452, %v4459
    %v4462 = vunpack.c.l.s4 1983009808
    %v4463 = vunpack.c.0.s8 %v4462
    %v4464 = vlaneseq
    %v4465 = vshrl.u32 %v4464, 7
    %v4466 = vsub.s32 %v4463, %v4465
    %v4467 = vrot.slane %v4453, %v4466
    %v4468 = vcombine.low %v4460, %v4467
    %v4469 = vcombine.low %v4369, %v4370
    %v4470 = vcombine.low %v4371, %v4372
    %v4472 = vunpack.c.l.s4 1983009808
    %v4473 = vunpack.c.0.s8 %v4472
    %v4474 = vlaneseq
    %v4475 = vshrl.u32 %v4474, 7
    %v4476 = vsub.s32 %v4473, %v4475
    %v4477 = vrot.slane %v4469, %v4476
    %v4479 = vunpack.c.l.s4 1983009808
    %v4480 = vunpack.c.0.s8 %v4479
    %v4481 = vlaneseq
    %v4482 = vshrl.u32 %v4481, 7
    %v4483 = vsub.s32 %v4480, %v4482
    %v4484 = vrot.slane %v4470, %v4483
    %v4485 = vcombine.low %v4477, %v4484
    %v4486 = vcombine.low %v4373, %v4374
    %v4487 = vcombine.low %v4375, %v4376
    %v4489 = vunpack.c.l.s4 1983009808
    %v4490 = vunpack.c.0.s8 %v4489
    %v4491 = vlaneseq
    %v4492 = vshrl.u32 %v4491, 7
    %v4493 = vsub.s32 %v4490, %v4492
    %v4494 = vrot.slane %v4486, %v4493
    %v4496 = vunpack.c.l.s4 1983009808
    %v4497 = vunpack.c.0.s8 %v4496
    %v4498 = vlaneseq
    %v4499 = vshrl.u32 %v4498, 7
    %v4500 = vsub.s32 %v4497, %v4499
    %v4501 = vrot.slane %v4487, %v4500
    %v4502 = vcombine.low %v4494, %v4501
    %v4509 = vadd.f32 %v3712, %v4417
    %v4510 = vadd.f32 %v3714, %v4434
    %v4511 = vadd.f32 %v3716, %v4451
    %v4512 = vadd.f32 %v3718, %v4468
    %v4513 = vadd.f32 %v3720, %v4485
    %v4514 = vadd.f32 %v3722, %v4502
    %v4521 = vcombine.high %v4179, %v4179
    %v4523 = vunpack.c.l.s4 1983009808
    %v4524 = vunpack.c.0.s8 %v4523
    %v4525 = vlaneseq
    %v4526 = vshrl.u32 %v4525, 7
    %v4527 = vsub.s32 %v4524, %v4526
    %v4528 = vrot.slane %v4179, %v4527
    %v4530 = vunpack.c.l.s4 1983009808
    %v4531 = vunpack.c.0.s8 %v4530
    %v4532 = vlaneseq
    %v4533 = vshrl.u32 %v4532, 7
    %v4534 = vsub.s32 %v4531, %v4533
    %v4535 = vrot.slane %v4521, %v4534
    %v4536 = vcombine.high %v4528, %v4528
    %v4537 = vcombine.high %v4535, %v4535
    %v4538 = vcombine.high %v4180, %v4180
    %v4540 = vunpack.c.l.s4 1983009808
    %v4541 = vunpack.c.0.s8 %v4540
    %v4542 = vlaneseq
    %v4543 = vshrl.u32 %v4542, 7
    %v4544 = vsub.s32 %v4541, %v4543
    %v4545 = vrot.slane %v4180, %v4544
    %v4547 = vunpack.c.l.s4 1983009808
    %v4548 = vunpack.c.0.s8 %v4547
    %v4549 = vlaneseq
    %v4550 = vshrl.u32 %v4549, 7
    %v4551 = vsub.s32 %v4548, %v4550
    %v4552 = vrot.slane %v4538, %v4551
    %v4553 = vcombine.high %v4545, %v4545
    %v4554 = vcombine.high %v4552, %v4552
    %v4555 = vcombine.high %v4181, %v4181
    %v4557 = vunpack.c.l.s4 1983009808
    %v4558 = vunpack.c.0.s8 %v4557
    %v4559 = vlaneseq
    %v4560 = vshrl.u32 %v4559, 7
    %v4561 = vsub.s32 %v4558, %v4560
    %v4562 = vrot.slane %v4181, %v4561
    %v4564 = vunpack.c.l.s4 1983009808
    %v4565 = vunpack.c.0.s8 %v4564
    %v4566 = vlaneseq
    %v4567 = vshrl.u32 %v4566, 7
    %v4568 = vsub.s32 %v4565, %v4567
    %v4569 = vrot.slane %v4555, %v4568
    %v4570 = vcombine.high %v4562, %v4562
    %v4571 = vcombine.high %v4569, %v4569
    %v4572 = vcombine.high %v4182, %v4182
    %v4574 = vunpack.c.l.s4 1983009808
    %v4575 = vunpack.c.0.s8 %v4574
    %v4576 = vlaneseq
    %v4577 = vshrl.u32 %v4576, 7
    %v4578 = vsub.s32 %v4575, %v4577
    %v4579 = vrot.slane %v4182, %v4578
    %v4581 = vunpack.c.l.s4 1983009808
    %v4582 = vunpack.c.0.s8 %v4581
    %v4583 = vlaneseq
    %v4584 = vshrl.u32 %v4583, 7
    %v4585 = vsub.s32 %v4582, %v4584
    %v4586 = vrot.slane %v4572, %v4585
    %v4587 = vcombine.high %v4579, %v4579
    %v4588 = vcombine.high %v4586, %v4586
    %v4589 = vcombine.high %v4183, %v4183
    %v4591 = vunpack.c.l.s4 1983009808
    %v4592 = vunpack.c.0.s8 %v4591
    %v4593 = vlaneseq
    %v4594 = vshrl.u32 %v4593, 7
    %v4595 = vsub.s32 %v4592, %v4594
    %v4596 = vrot.slane %v4183, %v4595
    %v4598 = vunpack.c.l.s4 1983009808
    %v4599 = vunpack.c.0.s8 %v4598
    %v4600 = vlaneseq
    %v4601 = vshrl.u32 %v4600, 7
    %v4602 = vsub.s32 %v4599, %v4601
    %v4603 = vrot.slane %v4589, %v4602
    %v4604 = vcombine.high %v4596, %v4596
    %v4605 = vcombine.high %v4603, %v4603
    %v4606 = vcombine.high %v4184, %v4184
    %v4608 = vunpack.c.l.s4 1983009808
    %v4609 = vunpack.c.0.s8 %v4608
    %v4610 = vlaneseq
    %v4611 = vshrl.u32 %v4610, 7
    %v4612 = vsub.s32 %v4609, %v4611
    %v4613 = vrot.slane %v4184, %v4612
    %v4615 = vunpack.c.l.s4 1983009808
    %v4616 = vunpack.c.0.s8 %v4615
    %v4617 = vlaneseq
    %v4618 = vshrl.u32 %v4617, 7
    %v4619 = vsub.s32 %v4616, %v4618
    %v4620 = vrot.slane %v4606, %v4619
    %v4621 = vcombine.high %v4613, %v4613
    %v4622 = vcombine.high %v4620, %v4620
    %4647 = vrot.lane.b32.xlu0 %v4528, 2
    %v4648 = vpop.permute.xlu0 %4647
    %4649 = vrot.lane.b32.xlu0 %v4536, 2
    %v4650 = vpop.permute.xlu0 %4649
    %4651 = vrot.lane.b32.xlu0 %v4535, 2
    %v4652 = vpop.permute.xlu0 %4651
    %4653 = vrot.lane.b32.xlu0 %v4537, 2
    %v4654 = vpop.permute.xlu0 %4653
    %4655 = vrot.lane.b32.xlu0 %v4545, 2
    %v4656 = vpop.permute.xlu0 %4655
    %4657 = vrot.lane.b32.xlu0 %v4553, 2
    %v4658 = vpop.permute.xlu0 %4657
    %4659 = vrot.lane.b32.xlu0 %v4552, 2
    %v4660 = vpop.permute.xlu0 %4659
    %4661 = vrot.lane.b32.xlu0 %v4554, 2
    %v4662 = vpop.permute.xlu0 %4661
    %4663 = vrot.lane.b32.xlu0 %v4562, 2
    %v4664 = vpop.permute.xlu0 %4663
    %4665 = vrot.lane.b32.xlu0 %v4570, 2
    %v4666 = vpop.permute.xlu0 %4665
    %4667 = vrot.lane.b32.xlu0 %v4569, 2
    %v4668 = vpop.permute.xlu0 %4667
    %4669 = vrot.lane.b32.xlu0 %v4571, 2
    %v4670 = vpop.permute.xlu0 %4669
    %4671 = vrot.lane.b32.xlu0 %v4579, 2
    %v4672 = vpop.permute.xlu0 %4671
    %4673 = vrot.lane.b32.xlu0 %v4587, 2
    %v4674 = vpop.permute.xlu0 %4673
    %4675 = vrot.lane.b32.xlu0 %v4586, 2
    %v4676 = vpop.permute.xlu0 %4675
    %4677 = vrot.lane.b32.xlu0 %v4588, 2
    %v4678 = vpop.permute.xlu0 %4677
    %4679 = vrot.lane.b32.xlu0 %v4596, 2
    %v4680 = vpop.permute.xlu0 %4679
    %4681 = vrot.lane.b32.xlu0 %v4604, 2
    %v4682 = vpop.permute.xlu0 %4681
    %4683 = vrot.lane.b32.xlu0 %v4603, 2
    %v4684 = vpop.permute.xlu0 %4683
    %4685 = vrot.lane.b32.xlu0 %v4605, 2
    %v4686 = vpop.permute.xlu0 %4685
    %4687 = vrot.lane.b32.xlu0 %v4613, 2
    %v4688 = vpop.permute.xlu0 %4687
    %4689 = vrot.lane.b32.xlu0 %v4621, 2
    %v4690 = vpop.permute.xlu0 %4689
    %4691 = vrot.lane.b32.xlu0 %v4620, 2
    %v4692 = vpop.permute.xlu0 %4691
    %4693 = vrot.lane.b32.xlu0 %v4622, 2
    %v4694 = vpop.permute.xlu0 %4693
    %v4695 = vsel %vm1101, %v4692, %v4694
    %v4696 = vsel %vm1101, %v4690, %v4692
    %v4697 = vsel %vm1101, %v4688, %v4690
    %v4698 = vsel %vm1101, %v4686, %v4688
    %v4699 = vsel %vm1101, %v4684, %v4686
    %v4700 = vsel %vm1101, %v4682, %v4684
    %v4701 = vsel %vm1101, %v4680, %v4682
    %v4702 = vsel %vm1101, %v4678, %v4680
    %v4703 = vsel %vm1101, %v4676, %v4678
    %v4704 = vsel %vm1101, %v4674, %v4676
    %v4705 = vsel %vm1101, %v4672, %v4674
    %v4706 = vsel %vm1101, %v4670, %v4672
    %v4707 = vsel %vm1101, %v4668, %v4670
    %v4708 = vsel %vm1101, %v4666, %v4668
    %v4709 = vsel %vm1101, %v4664, %v4666
    %v4710 = vsel %vm1101, %v4662, %v4664
    %v4711 = vsel %vm1101, %v4660, %v4662
    %v4712 = vsel %vm1101, %v4658, %v4660
    %v4713 = vsel %vm1101, %v4656, %v4658
    %v4714 = vsel %vm1101, %v4654, %v4656
    %v4715 = vsel %vm1101, %v4652, %v4654
    %v4716 = vsel %vm1101, %v4650, %v4652
    %v4717 = vsel %vm1101, %v4648, %v4650
    %v4718 = vsel %vm1101, %v4694, %v4648
    %v4719 = vlaneseq
    %v4720 = vshrl.u32 %v4719, 7
    %v4721 = vsub.s32 1, %v4720
    %v4722 = vrot.slane %v101, %v4721
    %v4723 = vlaneseq
    %v4724 = vshrl.u32 %v4723, 7
    %v4725 = vsub.s32 1, %v4724
    %v4726 = vrot.slane %v102, %v4725
    %v4727 = vlaneseq
    %v4728 = vshrl.u32 %v4727, 7
    %v4729 = vsub.s32 1, %v4728
    %v4730 = vrot.slane %v103, %v4729
    %v4731 = vlaneseq
    %v4732 = vshrl.u32 %v4731, 7
    %v4733 = vsub.s32 1, %v4732
    %v4734 = vrot.slane %v104, %v4733
    %v4735 = vlaneseq
    %v4736 = vshrl.u32 %v4735, 7
    %v4737 = vsub.s32 1, %v4736
    %v4738 = vrot.slane %v105, %v4737
    %v4739 = vlaneseq
    %v4740 = vshrl.u32 %v4739, 7
    %v4741 = vsub.s32 1, %v4740
    %v4742 = vrot.slane %v106, %v4741
    %v4743 = vlaneseq
    %v4744 = vshrl.u32 %v4743, 7
    %v4745 = vsub.s32 1, %v4744
    %v4746 = vrot.slane %v107, %v4745
    %v4747 = vlaneseq
    %v4748 = vshrl.u32 %v4747, 7
    %v4749 = vsub.s32 1, %v4748
    %v4750 = vrot.slane %v108, %v4749
    %v4751 = vlaneseq
    %v4752 = vshrl.u32 %v4751, 7
    %v4753 = vsub.s32 1, %v4752
    %v4754 = vrot.slane %v109, %v4753
    %v4755 = vlaneseq
    %v4756 = vshrl.u32 %v4755, 7
    %v4757 = vsub.s32 1, %v4756
    %v4758 = vrot.slane %v110, %v4757
    %v4759 = vlaneseq
    %v4760 = vshrl.u32 %v4759, 7
    %v4761 = vsub.s32 1, %v4760
    %v4762 = vrot.slane %v111, %v4761
    %v4763 = vlaneseq
    %v4764 = vshrl.u32 %v4763, 7
    %v4765 = vsub.s32 1, %v4764
    %v4766 = vrot.slane %v112, %v4765
    %v4767 = vlaneseq
    %v4768 = vshrl.u32 %v4767, 7
    %v4769 = vsub.s32 1, %v4768
    %v4770 = vrot.slane %v113, %v4769
    %v4771 = vlaneseq
    %v4772 = vshrl.u32 %v4771, 7
    %v4773 = vsub.s32 1, %v4772
    %v4774 = vrot.slane %v114, %v4773
    %v4775 = vlaneseq
    %v4776 = vshrl.u32 %v4775, 7
    %v4777 = vsub.s32 1, %v4776
    %v4778 = vrot.slane %v115, %v4777
    %v4779 = vlaneseq
    %v4780 = vshrl.u32 %v4779, 7
    %v4781 = vsub.s32 1, %v4780
    %v4782 = vrot.slane %v116, %v4781
    %v4783 = vlaneseq
    %v4784 = vshrl.u32 %v4783, 7
    %v4785 = vsub.s32 1, %v4784
    %v4786 = vrot.slane %v117, %v4785
    %v4787 = vlaneseq
    %v4788 = vshrl.u32 %v4787, 7
    %v4789 = vsub.s32 1, %v4788
    %v4790 = vrot.slane %v118, %v4789
    %v4791 = vlaneseq
    %v4792 = vshrl.u32 %v4791, 7
    %v4793 = vsub.s32 1, %v4792
    %v4794 = vrot.slane %v119, %v4793
    %v4795 = vlaneseq
    %v4796 = vshrl.u32 %v4795, 7
    %v4797 = vsub.s32 1, %v4796
    %v4798 = vrot.slane %v120, %v4797
    %v4799 = vlaneseq
    %v4800 = vshrl.u32 %v4799, 7
    %v4801 = vsub.s32 1, %v4800
    %v4802 = vrot.slane %v121, %v4801
    %v4803 = vlaneseq
    %v4804 = vshrl.u32 %v4803, 7
    %v4805 = vsub.s32 1, %v4804
    %v4806 = vrot.slane %v122, %v4805
    %v4807 = vlaneseq
    %v4808 = vshrl.u32 %v4807, 7
    %v4809 = vsub.s32 1, %v4808
    %v4810 = vrot.slane %v123, %v4809
    %v4811 = vlaneseq
    %v4812 = vshrl.u32 %v4811, 7
    %v4813 = vsub.s32 1, %v4812
    %v4814 = vrot.slane %v124, %v4813
    %v4815 = vmul.f32 %v4718, %v4722
    %v4816 = vmul.f32 %v4717, %v4726
    %v4817 = vmul.f32 %v4716, %v4730
    %v4818 = vmul.f32 %v4715, %v4734
    %v4819 = vmul.f32 %v4714, %v4738
    %v4820 = vmul.f32 %v4713, %v4742
    %v4821 = vmul.f32 %v4712, %v4746
    %v4822 = vmul.f32 %v4711, %v4750
    %v4823 = vmul.f32 %v4710, %v4754
    %v4824 = vmul.f32 %v4709, %v4758
    %v4825 = vmul.f32 %v4708, %v4762
    %v4826 = vmul.f32 %v4707, %v4766
    %v4827 = vmul.f32 %v4706, %v4770
    %v4828 = vmul.f32 %v4705, %v4774
    %v4829 = vmul.f32 %v4704, %v4778
    %v4830 = vmul.f32 %v4703, %v4782
    %v4831 = vmul.f32 %v4702, %v4786
    %v4832 = vmul.f32 %v4701, %v4790
    %v4833 = vmul.f32 %v4700, %v4794
    %v4834 = vmul.f32 %v4699, %v4798
    %v4835 = vmul.f32 %v4698, %v4802
    %v4836 = vmul.f32 %v4697, %v4806
    %v4837 = vmul.f32 %v4696, %v4810
    %v4838 = vmul.f32 %v4695, %v4814
    %v4863 = vcombine.low %v4815, %v4816
    %v4864 = vcombine.low %v4817, %v4818
    %v4866 = vunpack.c.l.s4 1983009808
    %v4867 = vunpack.c.0.s8 %v4866
    %v4868 = vlaneseq
    %v4869 = vshrl.u32 %v4868, 7
    %v4870 = vsub.s32 %v4867, %v4869
    %v4871 = vrot.slane %v4863, %v4870
    %v4873 = vunpack.c.l.s4 1983009808
    %v4874 = vunpack.c.0.s8 %v4873
    %v4875 = vlaneseq
    %v4876 = vshrl.u32 %v4875, 7
    %v4877 = vsub.s32 %v4874, %v4876
    %v4878 = vrot.slane %v4864, %v4877
    %v4879 = vcombine.low %v4871, %v4878
    %v4880 = vcombine.low %v4819, %v4820
    %v4881 = vcombine.low %v4821, %v4822
    %v4883 = vunpack.c.l.s4 1983009808
    %v4884 = vunpack.c.0.s8 %v4883
    %v4885 = vlaneseq
    %v4886 = vshrl.u32 %v4885, 7
    %v4887 = vsub.s32 %v4884, %v4886
    %v4888 = vrot.slane %v4880, %v4887
    %v4890 = vunpack.c.l.s4 1983009808
    %v4891 = vunpack.c.0.s8 %v4890
    %v4892 = vlaneseq
    %v4893 = vshrl.u32 %v4892, 7
    %v4894 = vsub.s32 %v4891, %v4893
    %v4895 = vrot.slane %v4881, %v4894
    %v4896 = vcombine.low %v4888, %v4895
    %v4897 = vcombine.low %v4823, %v4824
    %v4898 = vcombine.low %v4825, %v4826
    %v4900 = vunpack.c.l.s4 1983009808
    %v4901 = vunpack.c.0.s8 %v4900
    %v4902 = vlaneseq
    %v4903 = vshrl.u32 %v4902, 7
    %v4904 = vsub.s32 %v4901, %v4903
    %v4905 = vrot.slane %v4897, %v4904
    %v4907 = vunpack.c.l.s4 1983009808
    %v4908 = vunpack.c.0.s8 %v4907
    %v4909 = vlaneseq
    %v4910 = vshrl.u32 %v4909, 7
    %v4911 = vsub.s32 %v4908, %v4910
    %v4912 = vrot.slane %v4898, %v4911
    %v4913 = vcombine.low %v4905, %v4912
    %v4914 = vcombine.low %v4827, %v4828
    %v4915 = vcombine.low %v4829, %v4830
    %v4917 = vunpack.c.l.s4 1983009808
    %v4918 = vunpack.c.0.s8 %v4917
    %v4919 = vlaneseq
    %v4920 = vshrl.u32 %v4919, 7
    %v4921 = vsub.s32 %v4918, %v4920
    %v4922 = vrot.slane %v4914, %v4921
    %v4924 = vunpack.c.l.s4 1983009808
    %v4925 = vunpack.c.0.s8 %v4924
    %v4926 = vlaneseq
    %v4927 = vshrl.u32 %v4926, 7
    %v4928 = vsub.s32 %v4925, %v4927
    %v4929 = vrot.slane %v4915, %v4928
    %v4930 = vcombine.low %v4922, %v4929
    %v4931 = vcombine.low %v4831, %v4832
    %v4932 = vcombine.low %v4833, %v4834
    %v4934 = vunpack.c.l.s4 1983009808
    %v4935 = vunpack.c.0.s8 %v4934
    %v4936 = vlaneseq
    %v4937 = vshrl.u32 %v4936, 7
    %v4938 = vsub.s32 %v4935, %v4937
    %v4939 = vrot.slane %v4931, %v4938
    %v4941 = vunpack.c.l.s4 1983009808
    %v4942 = vunpack.c.0.s8 %v4941
    %v4943 = vlaneseq
    %v4944 = vshrl.u32 %v4943, 7
    %v4945 = vsub.s32 %v4942, %v4944
    %v4946 = vrot.slane %v4932, %v4945
    %v4947 = vcombine.low %v4939, %v4946
    %v4948 = vcombine.low %v4835, %v4836
    %v4949 = vcombine.low %v4837, %v4838
    %v4951 = vunpack.c.l.s4 1983009808
    %v4952 = vunpack.c.0.s8 %v4951
    %v4953 = vlaneseq
    %v4954 = vshrl.u32 %v4953, 7
    %v4955 = vsub.s32 %v4952, %v4954
    %v4956 = vrot.slane %v4948, %v4955
    %v4958 = vunpack.c.l.s4 1983009808
    %v4959 = vunpack.c.0.s8 %v4958
    %v4960 = vlaneseq
    %v4961 = vshrl.u32 %v4960, 7
    %v4962 = vsub.s32 %v4959, %v4961
    %v4963 = vrot.slane %v4949, %v4962
    %v4964 = vcombine.low %v4956, %v4963
    %v4971 = vadd.f32 %v4179, %v4879
    %v4972 = vadd.f32 %v4180, %v4896
    %v4973 = vadd.f32 %v4181, %v4913
    %v4974 = vadd.f32 %v4182, %v4930
    %v4975 = vadd.f32 %v4183, %v4947
    %v4976 = vadd.f32 %v4184, %v4964
    %v4983 = vcombine.high %v4509, %v4509
    %v4985 = vunpack.c.l.s4 1983009808
    %v4986 = vunpack.c.0.s8 %v4985
    %v4987 = vlaneseq
    %v4988 = vshrl.u32 %v4987, 7
    %v4989 = vsub.s32 %v4986, %v4988
    %v4990 = vrot.slane %v4509, %v4989
    %v4992 = vunpack.c.l.s4 1983009808
    %v4993 = vunpack.c.0.s8 %v4992
    %v4994 = vlaneseq
    %v4995 = vshrl.u32 %v4994, 7
    %v4996 = vsub.s32 %v4993, %v4995
    %v4997 = vrot.slane %v4983, %v4996
    %v4998 = vcombine.high %v4990, %v4990
    %v4999 = vcombine.high %v4997, %v4997
    %v5000 = vcombine.high %v4510, %v4510
    %v5002 = vunpack.c.l.s4 1983009808
    %v5003 = vunpack.c.0.s8 %v5002
    %v5004 = vlaneseq
    %v5005 = vshrl.u32 %v5004, 7
    %v5006 = vsub.s32 %v5003, %v5005
    %v5007 = vrot.slane %v4510, %v5006
    %v5009 = vunpack.c.l.s4 1983009808
    %v5010 = vunpack.c.0.s8 %v5009
    %v5011 = vlaneseq
    %v5012 = vshrl.u32 %v5011, 7
    %v5013 = vsub.s32 %v5010, %v5012
    %v5014 = vrot.slane %v5000, %v5013
    %v5015 = vcombine.high %v5007, %v5007
    %v5016 = vcombine.high %v5014, %v5014
    %v5017 = vcombine.high %v4511, %v4511
    %v5019 = vunpack.c.l.s4 1983009808
    %v5020 = vunpack.c.0.s8 %v5019
    %v5021 = vlaneseq
    %v5022 = vshrl.u32 %v5021, 7
    %v5023 = vsub.s32 %v5020, %v5022
    %v5024 = vrot.slane %v4511, %v5023
    %v5026 = vunpack.c.l.s4 1983009808
    %v5027 = vunpack.c.0.s8 %v5026
    %v5028 = vlaneseq
    %v5029 = vshrl.u32 %v5028, 7
    %v5030 = vsub.s32 %v5027, %v5029
    %v5031 = vrot.slane %v5017, %v5030
    %v5032 = vcombine.high %v5024, %v5024
    %v5033 = vcombine.high %v5031, %v5031
    %v5034 = vcombine.high %v4512, %v4512
    %v5036 = vunpack.c.l.s4 1983009808
    %v5037 = vunpack.c.0.s8 %v5036
    %v5038 = vlaneseq
    %v5039 = vshrl.u32 %v5038, 7
    %v5040 = vsub.s32 %v5037, %v5039
    %v5041 = vrot.slane %v4512, %v5040
    %v5043 = vunpack.c.l.s4 1983009808
    %v5044 = vunpack.c.0.s8 %v5043
    %v5045 = vlaneseq
    %v5046 = vshrl.u32 %v5045, 7
    %v5047 = vsub.s32 %v5044, %v5046
    %v5048 = vrot.slane %v5034, %v5047
    %v5049 = vcombine.high %v5041, %v5041
    %v5050 = vcombine.high %v5048, %v5048
    %v5051 = vcombine.high %v4513, %v4513
    %v5053 = vunpack.c.l.s4 1983009808
    %v5054 = vunpack.c.0.s8 %v5053
    %v5055 = vlaneseq
    %v5056 = vshrl.u32 %v5055, 7
    %v5057 = vsub.s32 %v5054, %v5056
    %v5058 = vrot.slane %v4513, %v5057
    %v5060 = vunpack.c.l.s4 1983009808
    %v5061 = vunpack.c.0.s8 %v5060
    %v5062 = vlaneseq
    %v5063 = vshrl.u32 %v5062, 7
    %v5064 = vsub.s32 %v5061, %v5063
    %v5065 = vrot.slane %v5051, %v5064
    %v5066 = vcombine.high %v5058, %v5058
    %v5067 = vcombine.high %v5065, %v5065
    %v5068 = vcombine.high %v4514, %v4514
    %v5070 = vunpack.c.l.s4 1983009808
    %v5071 = vunpack.c.0.s8 %v5070
    %v5072 = vlaneseq
    %v5073 = vshrl.u32 %v5072, 7
    %v5074 = vsub.s32 %v5071, %v5073
    %v5075 = vrot.slane %v4514, %v5074
    %v5077 = vunpack.c.l.s4 1983009808
    %v5078 = vunpack.c.0.s8 %v5077
    %v5079 = vlaneseq
    %v5080 = vshrl.u32 %v5079, 7
    %v5081 = vsub.s32 %v5078, %v5080
    %v5082 = vrot.slane %v5068, %v5081
    %v5083 = vcombine.high %v5075, %v5075
    %v5084 = vcombine.high %v5082, %v5082
    %5109 = vrot.lane.b32.xlu0 %v4990, 126
    %v5110 = vpop.permute.xlu0 %5109
    %5111 = vrot.lane.b32.xlu0 %v4998, 126
    %v5112 = vpop.permute.xlu0 %5111
    %5113 = vrot.lane.b32.xlu0 %v4997, 126
    %v5114 = vpop.permute.xlu0 %5113
    %5115 = vrot.lane.b32.xlu0 %v4999, 126
    %v5116 = vpop.permute.xlu0 %5115
    %5117 = vrot.lane.b32.xlu0 %v5007, 126
    %v5118 = vpop.permute.xlu0 %5117
    %5119 = vrot.lane.b32.xlu0 %v5015, 126
    %v5120 = vpop.permute.xlu0 %5119
    %5121 = vrot.lane.b32.xlu0 %v5014, 126
    %v5122 = vpop.permute.xlu0 %5121
    %5123 = vrot.lane.b32.xlu0 %v5016, 126
    %v5124 = vpop.permute.xlu0 %5123
    %5125 = vrot.lane.b32.xlu0 %v5024, 126
    %v5126 = vpop.permute.xlu0 %5125
    %5127 = vrot.lane.b32.xlu0 %v5032, 126
    %v5128 = vpop.permute.xlu0 %5127
    %5129 = vrot.lane.b32.xlu0 %v5031, 126
    %v5130 = vpop.permute.xlu0 %5129
    %5131 = vrot.lane.b32.xlu0 %v5033, 126
    %v5132 = vpop.permute.xlu0 %5131
    %5133 = vrot.lane.b32.xlu0 %v5041, 126
    %v5134 = vpop.permute.xlu0 %5133
    %5135 = vrot.lane.b32.xlu0 %v5049, 126
    %v5136 = vpop.permute.xlu0 %5135
    %5137 = vrot.lane.b32.xlu0 %v5048, 126
    %v5138 = vpop.permute.xlu0 %5137
    %5139 = vrot.lane.b32.xlu0 %v5050, 126
    %v5140 = vpop.permute.xlu0 %5139
    %5141 = vrot.lane.b32.xlu0 %v5058, 126
    %v5142 = vpop.permute.xlu0 %5141
    %5143 = vrot.lane.b32.xlu0 %v5066, 126
    %v5144 = vpop.permute.xlu0 %5143
    %5145 = vrot.lane.b32.xlu0 %v5065, 126
    %v5146 = vpop.permute.xlu0 %5145
    %5147 = vrot.lane.b32.xlu0 %v5067, 126
    %v5148 = vpop.permute.xlu0 %5147
    %5149 = vrot.lane.b32.xlu0 %v5075, 126
    %v5150 = vpop.permute.xlu0 %5149
    %5151 = vrot.lane.b32.xlu0 %v5083, 126
    %v5152 = vpop.permute.xlu0 %5151
    %5153 = vrot.lane.b32.xlu0 %v5082, 126
    %v5154 = vpop.permute.xlu0 %5153
    %5155 = vrot.lane.b32.xlu0 %v5084, 126
    %v5156 = vpop.permute.xlu0 %5155
    %v5157 = vsel %vm1564, %v5154, %v5156
    %v5158 = vsel %vm1564, %v5152, %v5154
    %v5159 = vsel %vm1564, %v5150, %v5152
    %v5160 = vsel %vm1564, %v5148, %v5150
    %v5161 = vsel %vm1564, %v5146, %v5148
    %v5162 = vsel %vm1564, %v5144, %v5146
    %v5163 = vsel %vm1564, %v5142, %v5144
    %v5164 = vsel %vm1564, %v5140, %v5142
    %v5165 = vsel %vm1564, %v5138, %v5140
    %v5166 = vsel %vm1564, %v5136, %v5138
    %v5167 = vsel %vm1564, %v5134, %v5136
    %v5168 = vsel %vm1564, %v5132, %v5134
    %v5169 = vsel %vm1564, %v5130, %v5132
    %v5170 = vsel %vm1564, %v5128, %v5130
    %v5171 = vsel %vm1564, %v5126, %v5128
    %v5172 = vsel %vm1564, %v5124, %v5126
    %v5173 = vsel %vm1564, %v5122, %v5124
    %v5174 = vsel %vm1564, %v5120, %v5122
    %v5175 = vsel %vm1564, %v5118, %v5120
    %v5176 = vsel %vm1564, %v5116, %v5118
    %v5177 = vsel %vm1564, %v5114, %v5116
    %v5178 = vsel %vm1564, %v5112, %v5114
    %v5179 = vsel %vm1564, %v5110, %v5112
    %v5180 = vsel %vm1564, %v5156, %v5110
    %v5181 = vlaneseq
    %v5182 = vshrl.u32 %v5181, 7
    %v5183 = vsub.s32 5, %v5182
    %v5184 = vrot.slane %v101, %v5183
    %v5185 = vlaneseq
    %v5186 = vshrl.u32 %v5185, 7
    %v5187 = vsub.s32 5, %v5186
    %v5188 = vrot.slane %v102, %v5187
    %v5189 = vlaneseq
    %v5190 = vshrl.u32 %v5189, 7
    %v5191 = vsub.s32 5, %v5190
    %v5192 = vrot.slane %v103, %v5191
    %v5193 = vlaneseq
    %v5194 = vshrl.u32 %v5193, 7
    %v5195 = vsub.s32 5, %v5194
    %v5196 = vrot.slane %v104, %v5195
    %v5197 = vlaneseq
    %v5198 = vshrl.u32 %v5197, 7
    %v5199 = vsub.s32 5, %v5198
    %v5200 = vrot.slane %v105, %v5199
    %v5201 = vlaneseq
    %v5202 = vshrl.u32 %v5201, 7
    %v5203 = vsub.s32 5, %v5202
    %v5204 = vrot.slane %v106, %v5203
    %v5205 = vlaneseq
    %v5206 = vshrl.u32 %v5205, 7
    %v5207 = vsub.s32 5, %v5206
    %v5208 = vrot.slane %v107, %v5207
    %v5209 = vlaneseq
    %v5210 = vshrl.u32 %v5209, 7
    %v5211 = vsub.s32 5, %v5210
    %v5212 = vrot.slane %v108, %v5211
    %v5213 = vlaneseq
    %v5214 = vshrl.u32 %v5213, 7
    %v5215 = vsub.s32 5, %v5214
    %v5216 = vrot.slane %v109, %v5215
    %v5217 = vlaneseq
    %v5218 = vshrl.u32 %v5217, 7
    %v5219 = vsub.s32 5, %v5218
    %v5220 = vrot.slane %v110, %v5219
    %v5221 = vlaneseq
    %v5222 = vshrl.u32 %v5221, 7
    %v5223 = vsub.s32 5, %v5222
    %v5224 = vrot.slane %v111, %v5223
    %v5225 = vlaneseq
    %v5226 = vshrl.u32 %v5225, 7
    %v5227 = vsub.s32 5, %v5226
    %v5228 = vrot.slane %v112, %v5227
    %v5229 = vlaneseq
    %v5230 = vshrl.u32 %v5229, 7
    %v5231 = vsub.s32 5, %v5230
    %v5232 = vrot.slane %v113, %v5231
    %v5233 = vlaneseq
    %v5234 = vshrl.u32 %v5233, 7
    %v5235 = vsub.s32 5, %v5234
    %v5236 = vrot.slane %v114, %v5235
    %v5237 = vlaneseq
    %v5238 = vshrl.u32 %v5237, 7
    %v5239 = vsub.s32 5, %v5238
    %v5240 = vrot.slane %v115, %v5239
    %v5241 = vlaneseq
    %v5242 = vshrl.u32 %v5241, 7
    %v5243 = vsub.s32 5, %v5242
    %v5244 = vrot.slane %v116, %v5243
    %v5245 = vlaneseq
    %v5246 = vshrl.u32 %v5245, 7
    %v5247 = vsub.s32 5, %v5246
    %v5248 = vrot.slane %v117, %v5247
    %v5249 = vlaneseq
    %v5250 = vshrl.u32 %v5249, 7
    %v5251 = vsub.s32 5, %v5250
    %v5252 = vrot.slane %v118, %v5251
    %v5253 = vlaneseq
    %v5254 = vshrl.u32 %v5253, 7
    %v5255 = vsub.s32 5, %v5254
    %v5256 = vrot.slane %v119, %v5255
    %v5257 = vlaneseq
    %v5258 = vshrl.u32 %v5257, 7
    %v5259 = vsub.s32 5, %v5258
    %v5260 = vrot.slane %v120, %v5259
    %v5261 = vlaneseq
    %v5262 = vshrl.u32 %v5261, 7
    %v5263 = vsub.s32 5, %v5262
    %v5264 = vrot.slane %v121, %v5263
    %v5265 = vlaneseq
    %v5266 = vshrl.u32 %v5265, 7
    %v5267 = vsub.s32 5, %v5266
    %v5268 = vrot.slane %v122, %v5267
    %v5269 = vlaneseq
    %v5270 = vshrl.u32 %v5269, 7
    %v5271 = vsub.s32 5, %v5270
    %v5272 = vrot.slane %v123, %v5271
    %v5273 = vlaneseq
    %v5274 = vshrl.u32 %v5273, 7
    %v5275 = vsub.s32 5, %v5274
    %v5276 = vrot.slane %v124, %v5275
    %v5277 = vmul.f32 %v5179, %v5184
    %v5278 = vmul.f32 %v5178, %v5188
    %v5279 = vmul.f32 %v5177, %v5192
    %v5280 = vmul.f32 %v5176, %v5196
    %v5281 = vmul.f32 %v5175, %v5200
    %v5282 = vmul.f32 %v5174, %v5204
    %v5283 = vmul.f32 %v5173, %v5208
    %v5284 = vmul.f32 %v5172, %v5212
    %v5285 = vmul.f32 %v5171, %v5216
    %v5286 = vmul.f32 %v5170, %v5220
    %v5287 = vmul.f32 %v5169, %v5224
    %v5288 = vmul.f32 %v5168, %v5228
    %v5289 = vmul.f32 %v5167, %v5232
    %v5290 = vmul.f32 %v5166, %v5236
    %v5291 = vmul.f32 %v5165, %v5240
    %v5292 = vmul.f32 %v5164, %v5244
    %v5293 = vmul.f32 %v5163, %v5248
    %v5294 = vmul.f32 %v5162, %v5252
    %v5295 = vmul.f32 %v5161, %v5256
    %v5296 = vmul.f32 %v5160, %v5260
    %v5297 = vmul.f32 %v5159, %v5264
    %v5298 = vmul.f32 %v5158, %v5268
    %v5299 = vmul.f32 %v5157, %v5272
    %v5300 = vmul.f32 %v5180, %v5276
    %v5325 = vcombine.low %v5277, %v5278
    %v5326 = vcombine.low %v5279, %v5280
    %v5328 = vunpack.c.l.s4 1983009808
    %v5329 = vunpack.c.0.s8 %v5328
    %v5330 = vlaneseq
    %v5331 = vshrl.u32 %v5330, 7
    %v5332 = vsub.s32 %v5329, %v5331
    %v5333 = vrot.slane %v5325, %v5332
    %v5335 = vunpack.c.l.s4 1983009808
    %v5336 = vunpack.c.0.s8 %v5335
    %v5337 = vlaneseq
    %v5338 = vshrl.u32 %v5337, 7
    %v5339 = vsub.s32 %v5336, %v5338
    %v5340 = vrot.slane %v5326, %v5339
    %v5341 = vcombine.low %v5333, %v5340
    %v5342 = vcombine.low %v5281, %v5282
    %v5343 = vcombine.low %v5283, %v5284
    %v5345 = vunpack.c.l.s4 1983009808
    %v5346 = vunpack.c.0.s8 %v5345
    %v5347 = vlaneseq
    %v5348 = vshrl.u32 %v5347, 7
    %v5349 = vsub.s32 %v5346, %v5348
    %v5350 = vrot.slane %v5342, %v5349
    %v5352 = vunpack.c.l.s4 1983009808
    %v5353 = vunpack.c.0.s8 %v5352
    %v5354 = vlaneseq
    %v5355 = vshrl.u32 %v5354, 7
    %v5356 = vsub.s32 %v5353, %v5355
    %v5357 = vrot.slane %v5343, %v5356
    %v5358 = vcombine.low %v5350, %v5357
    %v5359 = vcombine.low %v5285, %v5286
    %v5360 = vcombine.low %v5287, %v5288
    %v5362 = vunpack.c.l.s4 1983009808
    %v5363 = vunpack.c.0.s8 %v5362
    %v5364 = vlaneseq
    %v5365 = vshrl.u32 %v5364, 7
    %v5366 = vsub.s32 %v5363, %v5365
    %v5367 = vrot.slane %v5359, %v5366
    %v5369 = vunpack.c.l.s4 1983009808
    %v5370 = vunpack.c.0.s8 %v5369
    %v5371 = vlaneseq
    %v5372 = vshrl.u32 %v5371, 7
    %v5373 = vsub.s32 %v5370, %v5372
    %v5374 = vrot.slane %v5360, %v5373
    %v5375 = vcombine.low %v5367, %v5374
    %v5376 = vcombine.low %v5289, %v5290
    %v5377 = vcombine.low %v5291, %v5292
    %v5379 = vunpack.c.l.s4 1983009808
    %v5380 = vunpack.c.0.s8 %v5379
    %v5381 = vlaneseq
    %v5382 = vshrl.u32 %v5381, 7
    %v5383 = vsub.s32 %v5380, %v5382
    %v5384 = vrot.slane %v5376, %v5383
    %v5386 = vunpack.c.l.s4 1983009808
    %v5387 = vunpack.c.0.s8 %v5386
    %v5388 = vlaneseq
    %v5389 = vshrl.u32 %v5388, 7
    %v5390 = vsub.s32 %v5387, %v5389
    %v5391 = vrot.slane %v5377, %v5390
    %v5392 = vcombine.low %v5384, %v5391
    %v5393 = vcombine.low %v5293, %v5294
    %v5394 = vcombine.low %v5295, %v5296
    %v5396 = vunpack.c.l.s4 1983009808
    %v5397 = vunpack.c.0.s8 %v5396
    %v5398 = vlaneseq
    %v5399 = vshrl.u32 %v5398, 7
    %v5400 = vsub.s32 %v5397, %v5399
    %v5401 = vrot.slane %v5393, %v5400
    %v5403 = vunpack.c.l.s4 1983009808
    %v5404 = vunpack.c.0.s8 %v5403
    %v5405 = vlaneseq
    %v5406 = vshrl.u32 %v5405, 7
    %v5407 = vsub.s32 %v5404, %v5406
    %v5408 = vrot.slane %v5394, %v5407
    %v5409 = vcombine.low %v5401, %v5408
    %v5410 = vcombine.low %v5297, %v5298
    %v5411 = vcombine.low %v5299, %v5300
    %v5413 = vunpack.c.l.s4 1983009808
    %v5414 = vunpack.c.0.s8 %v5413
    %v5415 = vlaneseq
    %v5416 = vshrl.u32 %v5415, 7
    %v5417 = vsub.s32 %v5414, %v5416
    %v5418 = vrot.slane %v5410, %v5417
    %v5420 = vunpack.c.l.s4 1983009808
    %v5421 = vunpack.c.0.s8 %v5420
    %v5422 = vlaneseq
    %v5423 = vshrl.u32 %v5422, 7
    %v5424 = vsub.s32 %v5421, %v5423
    %v5425 = vrot.slane %v5411, %v5424
    %v5426 = vcombine.low %v5418, %v5425
    %v5433 = vadd.f32 %v4509, %v5341
    %v5434 = vadd.f32 %v4510, %v5358
    %v5435 = vadd.f32 %v4511, %v5375
    %v5436 = vadd.f32 %v4512, %v5392
    %v5437 = vadd.f32 %v4513, %v5409
    %v5438 = vadd.f32 %v4514, %v5426
    %v5445 = vcombine.high %v4971, %v4971
    %v5447 = vunpack.c.l.s4 1983009808
    %v5448 = vunpack.c.0.s8 %v5447
    %v5449 = vlaneseq
    %v5450 = vshrl.u32 %v5449, 7
    %v5451 = vsub.s32 %v5448, %v5450
    %v5452 = vrot.slane %v4971, %v5451
    %v5454 = vunpack.c.l.s4 1983009808
    %v5455 = vunpack.c.0.s8 %v5454
    %v5456 = vlaneseq
    %v5457 = vshrl.u32 %v5456, 7
    %v5458 = vsub.s32 %v5455, %v5457
    %v5459 = vrot.slane %v5445, %v5458
    %v5460 = vcombine.high %v5452, %v5452
    %v5461 = vcombine.high %v5459, %v5459
    %v5462 = vcombine.high %v4972, %v4972
    %v5464 = vunpack.c.l.s4 1983009808
    %v5465 = vunpack.c.0.s8 %v5464
    %v5466 = vlaneseq
    %v5467 = vshrl.u32 %v5466, 7
    %v5468 = vsub.s32 %v5465, %v5467
    %v5469 = vrot.slane %v4972, %v5468
    %v5471 = vunpack.c.l.s4 1983009808
    %v5472 = vunpack.c.0.s8 %v5471
    %v5473 = vlaneseq
    %v5474 = vshrl.u32 %v5473, 7
    %v5475 = vsub.s32 %v5472, %v5474
    %v5476 = vrot.slane %v5462, %v5475
    %v5477 = vcombine.high %v5469, %v5469
    %v5478 = vcombine.high %v5476, %v5476
    %v5479 = vcombine.high %v4973, %v4973
    %v5481 = vunpack.c.l.s4 1983009808
    %v5482 = vunpack.c.0.s8 %v5481
    %v5483 = vlaneseq
    %v5484 = vshrl.u32 %v5483, 7
    %v5485 = vsub.s32 %v5482, %v5484
    %v5486 = vrot.slane %v4973, %v5485
    %v5488 = vunpack.c.l.s4 1983009808
    %v5489 = vunpack.c.0.s8 %v5488
    %v5490 = vlaneseq
    %v5491 = vshrl.u32 %v5490, 7
    %v5492 = vsub.s32 %v5489, %v5491
    %v5493 = vrot.slane %v5479, %v5492
    %v5494 = vcombine.high %v5486, %v5486
    %v5495 = vcombine.high %v5493, %v5493
    %v5496 = vcombine.high %v4974, %v4974
    %v5498 = vunpack.c.l.s4 1983009808
    %v5499 = vunpack.c.0.s8 %v5498
    %v5500 = vlaneseq
    %v5501 = vshrl.u32 %v5500, 7
    %v5502 = vsub.s32 %v5499, %v5501
    %v5503 = vrot.slane %v4974, %v5502
    %v5505 = vunpack.c.l.s4 1983009808
    %v5506 = vunpack.c.0.s8 %v5505
    %v5507 = vlaneseq
    %v5508 = vshrl.u32 %v5507, 7
    %v5509 = vsub.s32 %v5506, %v5508
    %v5510 = vrot.slane %v5496, %v5509
    %v5511 = vcombine.high %v5503, %v5503
    %v5512 = vcombine.high %v5510, %v5510
    %v5513 = vcombine.high %v4975, %v4975
    %v5515 = vunpack.c.l.s4 1983009808
    %v5516 = vunpack.c.0.s8 %v5515
    %v5517 = vlaneseq
    %v5518 = vshrl.u32 %v5517, 7
    %v5519 = vsub.s32 %v5516, %v5518
    %v5520 = vrot.slane %v4975, %v5519
    %v5522 = vunpack.c.l.s4 1983009808
    %v5523 = vunpack.c.0.s8 %v5522
    %v5524 = vlaneseq
    %v5525 = vshrl.u32 %v5524, 7
    %v5526 = vsub.s32 %v5523, %v5525
    %v5527 = vrot.slane %v5513, %v5526
    %v5528 = vcombine.high %v5520, %v5520
    %v5529 = vcombine.high %v5527, %v5527
    %v5530 = vcombine.high %v4976, %v4976
    %v5532 = vunpack.c.l.s4 1983009808
    %v5533 = vunpack.c.0.s8 %v5532
    %v5534 = vlaneseq
    %v5535 = vshrl.u32 %v5534, 7
    %v5536 = vsub.s32 %v5533, %v5535
    %v5537 = vrot.slane %v4976, %v5536
    %v5539 = vunpack.c.l.s4 1983009808
    %v5540 = vunpack.c.0.s8 %v5539
    %v5541 = vlaneseq
    %v5542 = vshrl.u32 %v5541, 7
    %v5543 = vsub.s32 %v5540, %v5542
    %v5544 = vrot.slane %v5530, %v5543
    %v5545 = vcombine.high %v5537, %v5537
    %v5546 = vcombine.high %v5544, %v5544
    %5571 = vrot.lane.b32.xlu0 %v5452, 4
    %v5572 = vpop.permute.xlu0 %5571
    %5573 = vrot.lane.b32.xlu0 %v5460, 4
    %v5574 = vpop.permute.xlu0 %5573
    %5575 = vrot.lane.b32.xlu0 %v5459, 4
    %v5576 = vpop.permute.xlu0 %5575
    %5577 = vrot.lane.b32.xlu0 %v5461, 4
    %v5578 = vpop.permute.xlu0 %5577
    %5579 = vrot.lane.b32.xlu0 %v5469, 4
    %v5580 = vpop.permute.xlu0 %5579
    %5581 = vrot.lane.b32.xlu0 %v5477, 4
    %v5582 = vpop.permute.xlu0 %5581
    %5583 = vrot.lane.b32.xlu0 %v5476, 4
    %v5584 = vpop.permute.xlu0 %5583
    %5585 = vrot.lane.b32.xlu0 %v5478, 4
    %v5586 = vpop.permute.xlu0 %5585
    %5587 = vrot.lane.b32.xlu0 %v5486, 4
    %v5588 = vpop.permute.xlu0 %5587
    %5589 = vrot.lane.b32.xlu0 %v5494, 4
    %v5590 = vpop.permute.xlu0 %5589
    %5591 = vrot.lane.b32.xlu0 %v5493, 4
    %v5592 = vpop.permute.xlu0 %5591
    %5593 = vrot.lane.b32.xlu0 %v5495, 4
    %v5594 = vpop.permute.xlu0 %5593
    %5595 = vrot.lane.b32.xlu0 %v5503, 4
    %v5596 = vpop.permute.xlu0 %5595
    %5597 = vrot.lane.b32.xlu0 %v5511, 4
    %v5598 = vpop.permute.xlu0 %5597
    %5599 = vrot.lane.b32.xlu0 %v5510, 4
    %v5600 = vpop.permute.xlu0 %5599
    %5601 = vrot.lane.b32.xlu0 %v5512, 4
    %v5602 = vpop.permute.xlu0 %5601
    %5603 = vrot.lane.b32.xlu0 %v5520, 4
    %v5604 = vpop.permute.xlu0 %5603
    %5605 = vrot.lane.b32.xlu0 %v5528, 4
    %v5606 = vpop.permute.xlu0 %5605
    %5607 = vrot.lane.b32.xlu0 %v5527, 4
    %v5608 = vpop.permute.xlu0 %5607
    %5609 = vrot.lane.b32.xlu0 %v5529, 4
    %v5610 = vpop.permute.xlu0 %5609
    %5611 = vrot.lane.b32.xlu0 %v5537, 4
    %v5612 = vpop.permute.xlu0 %5611
    %5613 = vrot.lane.b32.xlu0 %v5545, 4
    %v5614 = vpop.permute.xlu0 %5613
    %5615 = vrot.lane.b32.xlu0 %v5544, 4
    %v5616 = vpop.permute.xlu0 %5615
    %5617 = vrot.lane.b32.xlu0 %v5546, 4
    %v5618 = vpop.permute.xlu0 %5617
    %v5619 = vsel %vm2027, %v5616, %v5618
    %v5620 = vsel %vm2027, %v5614, %v5616
    %v5621 = vsel %vm2027, %v5612, %v5614
    %v5622 = vsel %vm2027, %v5610, %v5612
    %v5623 = vsel %vm2027, %v5608, %v5610
    %v5624 = vsel %vm2027, %v5606, %v5608
    %v5625 = vsel %vm2027, %v5604, %v5606
    %v5626 = vsel %vm2027, %v5602, %v5604
    %v5627 = vsel %vm2027, %v5600, %v5602
    %v5628 = vsel %vm2027, %v5598, %v5600
    %v5629 = vsel %vm2027, %v5596, %v5598
    %v5630 = vsel %vm2027, %v5594, %v5596
    %v5631 = vsel %vm2027, %v5592, %v5594
    %v5632 = vsel %vm2027, %v5590, %v5592
    %v5633 = vsel %vm2027, %v5588, %v5590
    %v5634 = vsel %vm2027, %v5586, %v5588
    %v5635 = vsel %vm2027, %v5584, %v5586
    %v5636 = vsel %vm2027, %v5582, %v5584
    %v5637 = vsel %vm2027, %v5580, %v5582
    %v5638 = vsel %vm2027, %v5578, %v5580
    %v5639 = vsel %vm2027, %v5576, %v5578
    %v5640 = vsel %vm2027, %v5574, %v5576
    %v5641 = vsel %vm2027, %v5572, %v5574
    %v5642 = vsel %vm2027, %v5618, %v5572
    %v5643 = vlaneseq
    %v5644 = vshrl.u32 %v5643, 7
    %v5645 = vsub.s32 2, %v5644
    %v5646 = vrot.slane %v101, %v5645
    %v5647 = vlaneseq
    %v5648 = vshrl.u32 %v5647, 7
    %v5649 = vsub.s32 2, %v5648
    %v5650 = vrot.slane %v102, %v5649
    %v5651 = vlaneseq
    %v5652 = vshrl.u32 %v5651, 7
    %v5653 = vsub.s32 2, %v5652
    %v5654 = vrot.slane %v103, %v5653
    %v5655 = vlaneseq
    %v5656 = vshrl.u32 %v5655, 7
    %v5657 = vsub.s32 2, %v5656
    %v5658 = vrot.slane %v104, %v5657
    %v5659 = vlaneseq
    %v5660 = vshrl.u32 %v5659, 7
    %v5661 = vsub.s32 2, %v5660
    %v5662 = vrot.slane %v105, %v5661
    %v5663 = vlaneseq
    %v5664 = vshrl.u32 %v5663, 7
    %v5665 = vsub.s32 2, %v5664
    %v5666 = vrot.slane %v106, %v5665
    %v5667 = vlaneseq
    %v5668 = vshrl.u32 %v5667, 7
    %v5669 = vsub.s32 2, %v5668
    %v5670 = vrot.slane %v107, %v5669
    %v5671 = vlaneseq
    %v5672 = vshrl.u32 %v5671, 7
    %v5673 = vsub.s32 2, %v5672
    %v5674 = vrot.slane %v108, %v5673
    %v5675 = vlaneseq
    %v5676 = vshrl.u32 %v5675, 7
    %v5677 = vsub.s32 2, %v5676
    %v5678 = vrot.slane %v109, %v5677
    %v5679 = vlaneseq
    %v5680 = vshrl.u32 %v5679, 7
    %v5681 = vsub.s32 2, %v5680
    %v5682 = vrot.slane %v110, %v5681
    %v5683 = vlaneseq
    %v5684 = vshrl.u32 %v5683, 7
    %v5685 = vsub.s32 2, %v5684
    %v5686 = vrot.slane %v111, %v5685
    %v5687 = vlaneseq
    %v5688 = vshrl.u32 %v5687, 7
    %v5689 = vsub.s32 2, %v5688
    %v5690 = vrot.slane %v112, %v5689
    %v5691 = vlaneseq
    %v5692 = vshrl.u32 %v5691, 7
    %v5693 = vsub.s32 2, %v5692
    %v5694 = vrot.slane %v113, %v5693
    %v5695 = vlaneseq
    %v5696 = vshrl.u32 %v5695, 7
    %v5697 = vsub.s32 2, %v5696
    %v5698 = vrot.slane %v114, %v5697
    %v5699 = vlaneseq
    %v5700 = vshrl.u32 %v5699, 7
    %v5701 = vsub.s32 2, %v5700
    %v5702 = vrot.slane %v115, %v5701
    %v5703 = vlaneseq
    %v5704 = vshrl.u32 %v5703, 7
    %v5705 = vsub.s32 2, %v5704
    %v5706 = vrot.slane %v116, %v5705
    %v5707 = vlaneseq
    %v5708 = vshrl.u32 %v5707, 7
    %v5709 = vsub.s32 2, %v5708
    %v5710 = vrot.slane %v117, %v5709
    %v5711 = vlaneseq
    %v5712 = vshrl.u32 %v5711, 7
    %v5713 = vsub.s32 2, %v5712
    %v5714 = vrot.slane %v118, %v5713
    %v5715 = vlaneseq
    %v5716 = vshrl.u32 %v5715, 7
    %v5717 = vsub.s32 2, %v5716
    %v5718 = vrot.slane %v119, %v5717
    %v5719 = vlaneseq
    %v5720 = vshrl.u32 %v5719, 7
    %v5721 = vsub.s32 2, %v5720
    %v5722 = vrot.slane %v120, %v5721
    %v5723 = vlaneseq
    %v5724 = vshrl.u32 %v5723, 7
    %v5725 = vsub.s32 2, %v5724
    %v5726 = vrot.slane %v121, %v5725
    %v5727 = vlaneseq
    %v5728 = vshrl.u32 %v5727, 7
    %v5729 = vsub.s32 2, %v5728
    %v5730 = vrot.slane %v122, %v5729
    %v5731 = vlaneseq
    %v5732 = vshrl.u32 %v5731, 7
    %v5733 = vsub.s32 2, %v5732
    %v5734 = vrot.slane %v123, %v5733
    %v5735 = vlaneseq
    %v5736 = vshrl.u32 %v5735, 7
    %v5737 = vsub.s32 2, %v5736
    %v5738 = vrot.slane %v124, %v5737
    %v5739 = vmul.f32 %v5642, %v5646
    %v5740 = vmul.f32 %v5641, %v5650
    %v5741 = vmul.f32 %v5640, %v5654
    %v5742 = vmul.f32 %v5639, %v5658
    %v5743 = vmul.f32 %v5638, %v5662
    %v5744 = vmul.f32 %v5637, %v5666
    %v5745 = vmul.f32 %v5636, %v5670
    %v5746 = vmul.f32 %v5635, %v5674
    %v5747 = vmul.f32 %v5634, %v5678
    %v5748 = vmul.f32 %v5633, %v5682
    %v5749 = vmul.f32 %v5632, %v5686
    %v5750 = vmul.f32 %v5631, %v5690
    %v5751 = vmul.f32 %v5630, %v5694
    %v5752 = vmul.f32 %v5629, %v5698
    %v5753 = vmul.f32 %v5628, %v5702
    %v5754 = vmul.f32 %v5627, %v5706
    %v5755 = vmul.f32 %v5626, %v5710
    %v5756 = vmul.f32 %v5625, %v5714
    %v5757 = vmul.f32 %v5624, %v5718
    %v5758 = vmul.f32 %v5623, %v5722
    %v5759 = vmul.f32 %v5622, %v5726
    %v5760 = vmul.f32 %v5621, %v5730
    %v5761 = vmul.f32 %v5620, %v5734
    %v5762 = vmul.f32 %v5619, %v5738
    %v5787 = vcombine.low %v5739, %v5740
    %v5788 = vcombine.low %v5741, %v5742
    %v5790 = vunpack.c.l.s4 1983009808
    %v5791 = vunpack.c.0.s8 %v5790
    %v5792 = vlaneseq
    %v5793 = vshrl.u32 %v5792, 7
    %v5794 = vsub.s32 %v5791, %v5793
    %v5795 = vrot.slane %v5787, %v5794
    %v5797 = vunpack.c.l.s4 1983009808
    %v5798 = vunpack.c.0.s8 %v5797
    %v5799 = vlaneseq
    %v5800 = vshrl.u32 %v5799, 7
    %v5801 = vsub.s32 %v5798, %v5800
    %v5802 = vrot.slane %v5788, %v5801
    %v5803 = vcombine.low %v5795, %v5802
    %v5804 = vcombine.low %v5743, %v5744
    %v5805 = vcombine.low %v5745, %v5746
    %v5807 = vunpack.c.l.s4 1983009808
    %v5808 = vunpack.c.0.s8 %v5807
    %v5809 = vlaneseq
    %v5810 = vshrl.u32 %v5809, 7
    %v5811 = vsub.s32 %v5808, %v5810
    %v5812 = vrot.slane %v5804, %v5811
    %v5814 = vunpack.c.l.s4 1983009808
    %v5815 = vunpack.c.0.s8 %v5814
    %v5816 = vlaneseq
    %v5817 = vshrl.u32 %v5816, 7
    %v5818 = vsub.s32 %v5815, %v5817
    %v5819 = vrot.slane %v5805, %v5818
    %v5820 = vcombine.low %v5812, %v5819
    %v5821 = vcombine.low %v5747, %v5748
    %v5822 = vcombine.low %v5749, %v5750
    %v5824 = vunpack.c.l.s4 1983009808
    %v5825 = vunpack.c.0.s8 %v5824
    %v5826 = vlaneseq
    %v5827 = vshrl.u32 %v5826, 7
    %v5828 = vsub.s32 %v5825, %v5827
    %v5829 = vrot.slane %v5821, %v5828
    %v5831 = vunpack.c.l.s4 1983009808
    %v5832 = vunpack.c.0.s8 %v5831
    %v5833 = vlaneseq
    %v5834 = vshrl.u32 %v5833, 7
    %v5835 = vsub.s32 %v5832, %v5834
    %v5836 = vrot.slane %v5822, %v5835
    %v5837 = vcombine.low %v5829, %v5836
    %v5838 = vcombine.low %v5751, %v5752
    %v5839 = vcombine.low %v5753, %v5754
    %v5841 = vunpack.c.l.s4 1983009808
    %v5842 = vunpack.c.0.s8 %v5841
    %v5843 = vlaneseq
    %v5844 = vshrl.u32 %v5843, 7
    %v5845 = vsub.s32 %v5842, %v5844
    %v5846 = vrot.slane %v5838, %v5845
    %v5848 = vunpack.c.l.s4 1983009808
    %v5849 = vunpack.c.0.s8 %v5848
    %v5850 = vlaneseq
    %v5851 = vshrl.u32 %v5850, 7
    %v5852 = vsub.s32 %v5849, %v5851
    %v5853 = vrot.slane %v5839, %v5852
    %v5854 = vcombine.low %v5846, %v5853
    %v5855 = vcombine.low %v5755, %v5756
    %v5856 = vcombine.low %v5757, %v5758
    %v5858 = vunpack.c.l.s4 1983009808
    %v5859 = vunpack.c.0.s8 %v5858
    %v5860 = vlaneseq
    %v5861 = vshrl.u32 %v5860, 7
    %v5862 = vsub.s32 %v5859, %v5861
    %v5863 = vrot.slane %v5855, %v5862
    %v5865 = vunpack.c.l.s4 1983009808
    %v5866 = vunpack.c.0.s8 %v5865
    %v5867 = vlaneseq
    %v5868 = vshrl.u32 %v5867, 7
    %v5869 = vsub.s32 %v5866, %v5868
    %v5870 = vrot.slane %v5856, %v5869
    %v5871 = vcombine.low %v5863, %v5870
    %v5872 = vcombine.low %v5759, %v5760
    %v5873 = vcombine.low %v5761, %v5762
    %v5875 = vunpack.c.l.s4 1983009808
    %v5876 = vunpack.c.0.s8 %v5875
    %v5877 = vlaneseq
    %v5878 = vshrl.u32 %v5877, 7
    %v5879 = vsub.s32 %v5876, %v5878
    %v5880 = vrot.slane %v5872, %v5879
    %v5882 = vunpack.c.l.s4 1983009808
    %v5883 = vunpack.c.0.s8 %v5882
    %v5884 = vlaneseq
    %v5885 = vshrl.u32 %v5884, 7
    %v5886 = vsub.s32 %v5883, %v5885
    %v5887 = vrot.slane %v5873, %v5886
    %v5888 = vcombine.low %v5880, %v5887
    %v5895 = vadd.f32 %v4971, %v5803
    %v5896 = vadd.f32 %v4972, %v5820
    %v5897 = vadd.f32 %v4973, %v5837
    %v5898 = vadd.f32 %v4974, %v5854
    %v5899 = vadd.f32 %v4975, %v5871
    %v5900 = vadd.f32 %v4976, %v5888
    %v5907 = vcombine.high %v5433, %v5433
    %v5909 = vunpack.c.l.s4 1983009808
    %v5910 = vunpack.c.0.s8 %v5909
    %v5911 = vlaneseq
    %v5912 = vshrl.u32 %v5911, 7
    %v5913 = vsub.s32 %v5910, %v5912
    %v5914 = vrot.slane %v5433, %v5913
    %v5916 = vunpack.c.l.s4 1983009808
    %v5917 = vunpack.c.0.s8 %v5916
    %v5918 = vlaneseq
    %v5919 = vshrl.u32 %v5918, 7
    %v5920 = vsub.s32 %v5917, %v5919
    %v5921 = vrot.slane %v5907, %v5920
    %v5922 = vcombine.high %v5914, %v5914
    %v5923 = vcombine.high %v5921, %v5921
    %v5924 = vcombine.high %v5434, %v5434
    %v5926 = vunpack.c.l.s4 1983009808
    %v5927 = vunpack.c.0.s8 %v5926
    %v5928 = vlaneseq
    %v5929 = vshrl.u32 %v5928, 7
    %v5930 = vsub.s32 %v5927, %v5929
    %v5931 = vrot.slane %v5434, %v5930
    %v5933 = vunpack.c.l.s4 1983009808
    %v5934 = vunpack.c.0.s8 %v5933
    %v5935 = vlaneseq
    %v5936 = vshrl.u32 %v5935, 7
    %v5937 = vsub.s32 %v5934, %v5936
    %v5938 = vrot.slane %v5924, %v5937
    %v5939 = vcombine.high %v5931, %v5931
    %v5940 = vcombine.high %v5938, %v5938
    %v5941 = vcombine.high %v5435, %v5435
    %v5943 = vunpack.c.l.s4 1983009808
    %v5944 = vunpack.c.0.s8 %v5943
    %v5945 = vlaneseq
    %v5946 = vshrl.u32 %v5945, 7
    %v5947 = vsub.s32 %v5944, %v5946
    %v5948 = vrot.slane %v5435, %v5947
    %v5950 = vunpack.c.l.s4 1983009808
    %v5951 = vunpack.c.0.s8 %v5950
    %v5952 = vlaneseq
    %v5953 = vshrl.u32 %v5952, 7
    %v5954 = vsub.s32 %v5951, %v5953
    %v5955 = vrot.slane %v5941, %v5954
    %v5956 = vcombine.high %v5948, %v5948
    %v5957 = vcombine.high %v5955, %v5955
    %v5958 = vcombine.high %v5436, %v5436
    %v5960 = vunpack.c.l.s4 1983009808
    %v5961 = vunpack.c.0.s8 %v5960
    %v5962 = vlaneseq
    %v5963 = vshrl.u32 %v5962, 7
    %v5964 = vsub.s32 %v5961, %v5963
    %v5965 = vrot.slane %v5436, %v5964
    %v5967 = vunpack.c.l.s4 1983009808
    %v5968 = vunpack.c.0.s8 %v5967
    %v5969 = vlaneseq
    %v5970 = vshrl.u32 %v5969, 7
    %v5971 = vsub.s32 %v5968, %v5970
    %v5972 = vrot.slane %v5958, %v5971
    %v5973 = vcombine.high %v5965, %v5965
    %v5974 = vcombine.high %v5972, %v5972
    %v5975 = vcombine.high %v5437, %v5437
    %v5977 = vunpack.c.l.s4 1983009808
    %v5978 = vunpack.c.0.s8 %v5977
    %v5979 = vlaneseq
    %v5980 = vshrl.u32 %v5979, 7
    %v5981 = vsub.s32 %v5978, %v5980
    %v5982 = vrot.slane %v5437, %v5981
    %v5984 = vunpack.c.l.s4 1983009808
    %v5985 = vunpack.c.0.s8 %v5984
    %v5986 = vlaneseq
    %v5987 = vshrl.u32 %v5986, 7
    %v5988 = vsub.s32 %v5985, %v5987
    %v5989 = vrot.slane %v5975, %v5988
    %v5990 = vcombine.high %v5982, %v5982
    %v5991 = vcombine.high %v5989, %v5989
    %v5992 = vcombine.high %v5438, %v5438
    %v5994 = vunpack.c.l.s4 1983009808
    %v5995 = vunpack.c.0.s8 %v5994
    %v5996 = vlaneseq
    %v5997 = vshrl.u32 %v5996, 7
    %v5998 = vsub.s32 %v5995, %v5997
    %v5999 = vrot.slane %v5438, %v5998
    %v6001 = vunpack.c.l.s4 1983009808
    %v6002 = vunpack.c.0.s8 %v6001
    %v6003 = vlaneseq
    %v6004 = vshrl.u32 %v6003, 7
    %v6005 = vsub.s32 %v6002, %v6004
    %v6006 = vrot.slane %v5992, %v6005
    %v6007 = vcombine.high %v5999, %v5999
    %v6008 = vcombine.high %v6006, %v6006
    %6033 = vrot.lane.b32.xlu0 %v5914, 124
    %v6034 = vpop.permute.xlu0 %6033
    %6035 = vrot.lane.b32.xlu0 %v5922, 124
    %v6036 = vpop.permute.xlu0 %6035
    %6037 = vrot.lane.b32.xlu0 %v5921, 124
    %v6038 = vpop.permute.xlu0 %6037
    %6039 = vrot.lane.b32.xlu0 %v5923, 124
    %v6040 = vpop.permute.xlu0 %6039
    %6041 = vrot.lane.b32.xlu0 %v5931, 124
    %v6042 = vpop.permute.xlu0 %6041
    %6043 = vrot.lane.b32.xlu0 %v5939, 124
    %v6044 = vpop.permute.xlu0 %6043
    %6045 = vrot.lane.b32.xlu0 %v5938, 124
    %v6046 = vpop.permute.xlu0 %6045
    %6047 = vrot.lane.b32.xlu0 %v5940, 124
    %v6048 = vpop.permute.xlu0 %6047
    %6049 = vrot.lane.b32.xlu0 %v5948, 124
    %v6050 = vpop.permute.xlu0 %6049
    %6051 = vrot.lane.b32.xlu0 %v5956, 124
    %v6052 = vpop.permute.xlu0 %6051
    %6053 = vrot.lane.b32.xlu0 %v5955, 124
    %v6054 = vpop.permute.xlu0 %6053
    %6055 = vrot.lane.b32.xlu0 %v5957, 124
    %v6056 = vpop.permute.xlu0 %6055
    %6057 = vrot.lane.b32.xlu0 %v5965, 124
    %v6058 = vpop.permute.xlu0 %6057
    %6059 = vrot.lane.b32.xlu0 %v5973, 124
    %v6060 = vpop.permute.xlu0 %6059
    %6061 = vrot.lane.b32.xlu0 %v5972, 124
    %v6062 = vpop.permute.xlu0 %6061
    %6063 = vrot.lane.b32.xlu0 %v5974, 124
    %v6064 = vpop.permute.xlu0 %6063
    %6065 = vrot.lane.b32.xlu0 %v5982, 124
    %v6066 = vpop.permute.xlu0 %6065
    %6067 = vrot.lane.b32.xlu0 %v5990, 124
    %v6068 = vpop.permute.xlu0 %6067
    %6069 = vrot.lane.b32.xlu0 %v5989, 124
    %v6070 = vpop.permute.xlu0 %6069
    %6071 = vrot.lane.b32.xlu0 %v5991, 124
    %v6072 = vpop.permute.xlu0 %6071
    %6073 = vrot.lane.b32.xlu0 %v5999, 124
    %v6074 = vpop.permute.xlu0 %6073
    %6075 = vrot.lane.b32.xlu0 %v6007, 124
    %v6076 = vpop.permute.xlu0 %6075
    %6077 = vrot.lane.b32.xlu0 %v6006, 124
    %v6078 = vpop.permute.xlu0 %6077
    %6079 = vrot.lane.b32.xlu0 %v6008, 124
    %v6080 = vpop.permute.xlu0 %6079
    %v6081 = vsel %vm2490, %v6078, %v6080
    %v6082 = vsel %vm2490, %v6076, %v6078
    %v6083 = vsel %vm2490, %v6074, %v6076
    %v6084 = vsel %vm2490, %v6072, %v6074
    %v6085 = vsel %vm2490, %v6070, %v6072
    %v6086 = vsel %vm2490, %v6068, %v6070
    %v6087 = vsel %vm2490, %v6066, %v6068
    %v6088 = vsel %vm2490, %v6064, %v6066
    %v6089 = vsel %vm2490, %v6062, %v6064
    %v6090 = vsel %vm2490, %v6060, %v6062
    %v6091 = vsel %vm2490, %v6058, %v6060
    %v6092 = vsel %vm2490, %v6056, %v6058
    %v6093 = vsel %vm2490, %v6054, %v6056
    %v6094 = vsel %vm2490, %v6052, %v6054
    %v6095 = vsel %vm2490, %v6050, %v6052
    %v6096 = vsel %vm2490, %v6048, %v6050
    %v6097 = vsel %vm2490, %v6046, %v6048
    %v6098 = vsel %vm2490, %v6044, %v6046
    %v6099 = vsel %vm2490, %v6042, %v6044
    %v6100 = vsel %vm2490, %v6040, %v6042
    %v6101 = vsel %vm2490, %v6038, %v6040
    %v6102 = vsel %vm2490, %v6036, %v6038
    %v6103 = vsel %vm2490, %v6034, %v6036
    %v6104 = vsel %vm2490, %v6080, %v6034
    %v6105 = vlaneseq
    %v6106 = vshrl.u32 %v6105, 7
    %v6107 = vsub.s32 6, %v6106
    %v6108 = vrot.slane %v101, %v6107
    %v6109 = vlaneseq
    %v6110 = vshrl.u32 %v6109, 7
    %v6111 = vsub.s32 6, %v6110
    %v6112 = vrot.slane %v102, %v6111
    %v6113 = vlaneseq
    %v6114 = vshrl.u32 %v6113, 7
    %v6115 = vsub.s32 6, %v6114
    %v6116 = vrot.slane %v103, %v6115
    %v6117 = vlaneseq
    %v6118 = vshrl.u32 %v6117, 7
    %v6119 = vsub.s32 6, %v6118
    %v6120 = vrot.slane %v104, %v6119
    %v6121 = vlaneseq
    %v6122 = vshrl.u32 %v6121, 7
    %v6123 = vsub.s32 6, %v6122
    %v6124 = vrot.slane %v105, %v6123
    %v6125 = vlaneseq
    %v6126 = vshrl.u32 %v6125, 7
    %v6127 = vsub.s32 6, %v6126
    %v6128 = vrot.slane %v106, %v6127
    %v6129 = vlaneseq
    %v6130 = vshrl.u32 %v6129, 7
    %v6131 = vsub.s32 6, %v6130
    %v6132 = vrot.slane %v107, %v6131
    %v6133 = vlaneseq
    %v6134 = vshrl.u32 %v6133, 7
    %v6135 = vsub.s32 6, %v6134
    %v6136 = vrot.slane %v108, %v6135
    %v6137 = vlaneseq
    %v6138 = vshrl.u32 %v6137, 7
    %v6139 = vsub.s32 6, %v6138
    %v6140 = vrot.slane %v109, %v6139
    %v6141 = vlaneseq
    %v6142 = vshrl.u32 %v6141, 7
    %v6143 = vsub.s32 6, %v6142
    %v6144 = vrot.slane %v110, %v6143
    %v6145 = vlaneseq
    %v6146 = vshrl.u32 %v6145, 7
    %v6147 = vsub.s32 6, %v6146
    %v6148 = vrot.slane %v111, %v6147
    %v6149 = vlaneseq
    %v6150 = vshrl.u32 %v6149, 7
    %v6151 = vsub.s32 6, %v6150
    %v6152 = vrot.slane %v112, %v6151
    %v6153 = vlaneseq
    %v6154 = vshrl.u32 %v6153, 7
    %v6155 = vsub.s32 6, %v6154
    %v6156 = vrot.slane %v113, %v6155
    %v6157 = vlaneseq
    %v6158 = vshrl.u32 %v6157, 7
    %v6159 = vsub.s32 6, %v6158
    %v6160 = vrot.slane %v114, %v6159
    %v6161 = vlaneseq
    %v6162 = vshrl.u32 %v6161, 7
    %v6163 = vsub.s32 6, %v6162
    %v6164 = vrot.slane %v115, %v6163
    %v6165 = vlaneseq
    %v6166 = vshrl.u32 %v6165, 7
    %v6167 = vsub.s32 6, %v6166
    %v6168 = vrot.slane %v116, %v6167
    %v6169 = vlaneseq
    %v6170 = vshrl.u32 %v6169, 7
    %v6171 = vsub.s32 6, %v6170
    %v6172 = vrot.slane %v117, %v6171
    %v6173 = vlaneseq
    %v6174 = vshrl.u32 %v6173, 7
    %v6175 = vsub.s32 6, %v6174
    %v6176 = vrot.slane %v118, %v6175
    %v6177 = vlaneseq
    %v6178 = vshrl.u32 %v6177, 7
    %v6179 = vsub.s32 6, %v6178
    %v6180 = vrot.slane %v119, %v6179
    %v6181 = vlaneseq
    %v6182 = vshrl.u32 %v6181, 7
    %v6183 = vsub.s32 6, %v6182
    %v6184 = vrot.slane %v120, %v6183
    %v6185 = vlaneseq
    %v6186 = vshrl.u32 %v6185, 7
    %v6187 = vsub.s32 6, %v6186
    %v6188 = vrot.slane %v121, %v6187
    %v6189 = vlaneseq
    %v6190 = vshrl.u32 %v6189, 7
    %v6191 = vsub.s32 6, %v6190
    %v6192 = vrot.slane %v122, %v6191
    %v6193 = vlaneseq
    %v6194 = vshrl.u32 %v6193, 7
    %v6195 = vsub.s32 6, %v6194
    %v6196 = vrot.slane %v123, %v6195
    %v6197 = vlaneseq
    %v6198 = vshrl.u32 %v6197, 7
    %v6199 = vsub.s32 6, %v6198
    %v6200 = vrot.slane %v124, %v6199
    %v6201 = vmul.f32 %v6103, %v6108
    %v6202 = vmul.f32 %v6102, %v6112
    %v6203 = vmul.f32 %v6101, %v6116
    %v6204 = vmul.f32 %v6100, %v6120
    %v6205 = vmul.f32 %v6099, %v6124
    %v6206 = vmul.f32 %v6098, %v6128
    %v6207 = vmul.f32 %v6097, %v6132
    %v6208 = vmul.f32 %v6096, %v6136
    %v6209 = vmul.f32 %v6095, %v6140
    %v6210 = vmul.f32 %v6094, %v6144
    %v6211 = vmul.f32 %v6093, %v6148
    %v6212 = vmul.f32 %v6092, %v6152
    %v6213 = vmul.f32 %v6091, %v6156
    %v6214 = vmul.f32 %v6090, %v6160
    %v6215 = vmul.f32 %v6089, %v6164
    %v6216 = vmul.f32 %v6088, %v6168
    %v6217 = vmul.f32 %v6087, %v6172
    %v6218 = vmul.f32 %v6086, %v6176
    %v6219 = vmul.f32 %v6085, %v6180
    %v6220 = vmul.f32 %v6084, %v6184
    %v6221 = vmul.f32 %v6083, %v6188
    %v6222 = vmul.f32 %v6082, %v6192
    %v6223 = vmul.f32 %v6081, %v6196
    %v6224 = vmul.f32 %v6104, %v6200
    %v6249 = vcombine.low %v6201, %v6202
    %v6250 = vcombine.low %v6203, %v6204
    %v6252 = vunpack.c.l.s4 1983009808
    %v6253 = vunpack.c.0.s8 %v6252
    %v6254 = vlaneseq
    %v6255 = vshrl.u32 %v6254, 7
    %v6256 = vsub.s32 %v6253, %v6255
    %v6257 = vrot.slane %v6249, %v6256
    %v6259 = vunpack.c.l.s4 1983009808
    %v6260 = vunpack.c.0.s8 %v6259
    %v6261 = vlaneseq
    %v6262 = vshrl.u32 %v6261, 7
    %v6263 = vsub.s32 %v6260, %v6262
    %v6264 = vrot.slane %v6250, %v6263
    %v6265 = vcombine.low %v6257, %v6264
    %v6266 = vcombine.low %v6205, %v6206
    %v6267 = vcombine.low %v6207, %v6208
    %v6269 = vunpack.c.l.s4 1983009808
    %v6270 = vunpack.c.0.s8 %v6269
    %v6271 = vlaneseq
    %v6272 = vshrl.u32 %v6271, 7
    %v6273 = vsub.s32 %v6270, %v6272
    %v6274 = vrot.slane %v6266, %v6273
    %v6276 = vunpack.c.l.s4 1983009808
    %v6277 = vunpack.c.0.s8 %v6276
    %v6278 = vlaneseq
    %v6279 = vshrl.u32 %v6278, 7
    %v6280 = vsub.s32 %v6277, %v6279
    %v6281 = vrot.slane %v6267, %v6280
    %v6282 = vcombine.low %v6274, %v6281
    %v6283 = vcombine.low %v6209, %v6210
    %v6284 = vcombine.low %v6211, %v6212
    %v6286 = vunpack.c.l.s4 1983009808
    %v6287 = vunpack.c.0.s8 %v6286
    %v6288 = vlaneseq
    %v6289 = vshrl.u32 %v6288, 7
    %v6290 = vsub.s32 %v6287, %v6289
    %v6291 = vrot.slane %v6283, %v6290
    %v6293 = vunpack.c.l.s4 1983009808
    %v6294 = vunpack.c.0.s8 %v6293
    %v6295 = vlaneseq
    %v6296 = vshrl.u32 %v6295, 7
    %v6297 = vsub.s32 %v6294, %v6296
    %v6298 = vrot.slane %v6284, %v6297
    %v6299 = vcombine.low %v6291, %v6298
    %v6300 = vcombine.low %v6213, %v6214
    %v6301 = vcombine.low %v6215, %v6216
    %v6303 = vunpack.c.l.s4 1983009808
    %v6304 = vunpack.c.0.s8 %v6303
    %v6305 = vlaneseq
    %v6306 = vshrl.u32 %v6305, 7
    %v6307 = vsub.s32 %v6304, %v6306
    %v6308 = vrot.slane %v6300, %v6307
    %v6310 = vunpack.c.l.s4 1983009808
    %v6311 = vunpack.c.0.s8 %v6310
    %v6312 = vlaneseq
    %v6313 = vshrl.u32 %v6312, 7
    %v6314 = vsub.s32 %v6311, %v6313
    %v6315 = vrot.slane %v6301, %v6314
    %v6316 = vcombine.low %v6308, %v6315
    %v6317 = vcombine.low %v6217, %v6218
    %v6318 = vcombine.low %v6219, %v6220
    %v6320 = vunpack.c.l.s4 1983009808
    %v6321 = vunpack.c.0.s8 %v6320
    %v6322 = vlaneseq
    %v6323 = vshrl.u32 %v6322, 7
    %v6324 = vsub.s32 %v6321, %v6323
    %v6325 = vrot.slane %v6317, %v6324
    %v6327 = vunpack.c.l.s4 1983009808
    %v6328 = vunpack.c.0.s8 %v6327
    %v6329 = vlaneseq
    %v6330 = vshrl.u32 %v6329, 7
    %v6331 = vsub.s32 %v6328, %v6330
    %v6332 = vrot.slane %v6318, %v6331
    %v6333 = vcombine.low %v6325, %v6332
    %v6334 = vcombine.low %v6221, %v6222
    %v6335 = vcombine.low %v6223, %v6224
    %v6337 = vunpack.c.l.s4 1983009808
    %v6338 = vunpack.c.0.s8 %v6337
    %v6339 = vlaneseq
    %v6340 = vshrl.u32 %v6339, 7
    %v6341 = vsub.s32 %v6338, %v6340
    %v6342 = vrot.slane %v6334, %v6341
    %v6344 = vunpack.c.l.s4 1983009808
    %v6345 = vunpack.c.0.s8 %v6344
    %v6346 = vlaneseq
    %v6347 = vshrl.u32 %v6346, 7
    %v6348 = vsub.s32 %v6345, %v6347
    %v6349 = vrot.slane %v6335, %v6348
    %v6350 = vcombine.low %v6342, %v6349
    %v6357 = vadd.f32 %v5433, %v6265
    %v6358 = vadd.f32 %v5434, %v6282
    %v6359 = vadd.f32 %v5435, %v6299
    %v6360 = vadd.f32 %v5436, %v6316
    %v6361 = vadd.f32 %v5437, %v6333
    %v6362 = vadd.f32 %v5438, %v6350
    %v6369 = vcombine.high %v5895, %v5895
    %v6371 = vunpack.c.l.s4 1983009808
    %v6372 = vunpack.c.0.s8 %v6371
    %v6373 = vlaneseq
    %v6374 = vshrl.u32 %v6373, 7
    %v6375 = vsub.s32 %v6372, %v6374
    %v6376 = vrot.slane %v5895, %v6375
    %v6378 = vunpack.c.l.s4 1983009808
    %v6379 = vunpack.c.0.s8 %v6378
    %v6380 = vlaneseq
    %v6381 = vshrl.u32 %v6380, 7
    %v6382 = vsub.s32 %v6379, %v6381
    %v6383 = vrot.slane %v6369, %v6382
    %v6384 = vcombine.high %v6376, %v6376
    %v6385 = vcombine.high %v6383, %v6383
    %v6386 = vcombine.high %v5896, %v5896
    %v6388 = vunpack.c.l.s4 1983009808
    %v6389 = vunpack.c.0.s8 %v6388
    %v6390 = vlaneseq
    %v6391 = vshrl.u32 %v6390, 7
    %v6392 = vsub.s32 %v6389, %v6391
    %v6393 = vrot.slane %v5896, %v6392
    %v6395 = vunpack.c.l.s4 1983009808
    %v6396 = vunpack.c.0.s8 %v6395
    %v6397 = vlaneseq
    %v6398 = vshrl.u32 %v6397, 7
    %v6399 = vsub.s32 %v6396, %v6398
    %v6400 = vrot.slane %v6386, %v6399
    %v6401 = vcombine.high %v6393, %v6393
    %v6402 = vcombine.high %v6400, %v6400
    %v6403 = vcombine.high %v5897, %v5897
    %v6405 = vunpack.c.l.s4 1983009808
    %v6406 = vunpack.c.0.s8 %v6405
    %v6407 = vlaneseq
    %v6408 = vshrl.u32 %v6407, 7
    %v6409 = vsub.s32 %v6406, %v6408
    %v6410 = vrot.slane %v5897, %v6409
    %v6412 = vunpack.c.l.s4 1983009808
    %v6413 = vunpack.c.0.s8 %v6412
    %v6414 = vlaneseq
    %v6415 = vshrl.u32 %v6414, 7
    %v6416 = vsub.s32 %v6413, %v6415
    %v6417 = vrot.slane %v6403, %v6416
    %v6418 = vcombine.high %v6410, %v6410
    %v6419 = vcombine.high %v6417, %v6417
    %v6420 = vcombine.high %v5898, %v5898
    %v6422 = vunpack.c.l.s4 1983009808
    %v6423 = vunpack.c.0.s8 %v6422
    %v6424 = vlaneseq
    %v6425 = vshrl.u32 %v6424, 7
    %v6426 = vsub.s32 %v6423, %v6425
    %v6427 = vrot.slane %v5898, %v6426
    %v6429 = vunpack.c.l.s4 1983009808
    %v6430 = vunpack.c.0.s8 %v6429
    %v6431 = vlaneseq
    %v6432 = vshrl.u32 %v6431, 7
    %v6433 = vsub.s32 %v6430, %v6432
    %v6434 = vrot.slane %v6420, %v6433
    %v6435 = vcombine.high %v6427, %v6427
    %v6436 = vcombine.high %v6434, %v6434
    %v6437 = vcombine.high %v5899, %v5899
    %v6439 = vunpack.c.l.s4 1983009808
    %v6440 = vunpack.c.0.s8 %v6439
    %v6441 = vlaneseq
    %v6442 = vshrl.u32 %v6441, 7
    %v6443 = vsub.s32 %v6440, %v6442
    %v6444 = vrot.slane %v5899, %v6443
    %v6446 = vunpack.c.l.s4 1983009808
    %v6447 = vunpack.c.0.s8 %v6446
    %v6448 = vlaneseq
    %v6449 = vshrl.u32 %v6448, 7
    %v6450 = vsub.s32 %v6447, %v6449
    %v6451 = vrot.slane %v6437, %v6450
    %v6452 = vcombine.high %v6444, %v6444
    %v6453 = vcombine.high %v6451, %v6451
    %v6454 = vcombine.high %v5900, %v5900
    %v6456 = vunpack.c.l.s4 1983009808
    %v6457 = vunpack.c.0.s8 %v6456
    %v6458 = vlaneseq
    %v6459 = vshrl.u32 %v6458, 7
    %v6460 = vsub.s32 %v6457, %v6459
    %v6461 = vrot.slane %v5900, %v6460
    %v6463 = vunpack.c.l.s4 1983009808
    %v6464 = vunpack.c.0.s8 %v6463
    %v6465 = vlaneseq
    %v6466 = vshrl.u32 %v6465, 7
    %v6467 = vsub.s32 %v6464, %v6466
    %v6468 = vrot.slane %v6454, %v6467
    %v6469 = vcombine.high %v6461, %v6461
    %v6470 = vcombine.high %v6468, %v6468
    %6495 = vrot.lane.b32.xlu0 %v6376, 8
    %v6496 = vpop.permute.xlu0 %6495
    %6497 = vrot.lane.b32.xlu0 %v6384, 8
    %v6498 = vpop.permute.xlu0 %6497
    %6499 = vrot.lane.b32.xlu0 %v6383, 8
    %v6500 = vpop.permute.xlu0 %6499
    %6501 = vrot.lane.b32.xlu0 %v6385, 8
    %v6502 = vpop.permute.xlu0 %6501
    %6503 = vrot.lane.b32.xlu0 %v6393, 8
    %v6504 = vpop.permute.xlu0 %6503
    %6505 = vrot.lane.b32.xlu0 %v6401, 8
    %v6506 = vpop.permute.xlu0 %6505
    %6507 = vrot.lane.b32.xlu0 %v6400, 8
    %v6508 = vpop.permute.xlu0 %6507
    %6509 = vrot.lane.b32.xlu0 %v6402, 8
    %v6510 = vpop.permute.xlu0 %6509
    %6511 = vrot.lane.b32.xlu0 %v6410, 8
    %v6512 = vpop.permute.xlu0 %6511
    %6513 = vrot.lane.b32.xlu0 %v6418, 8
    %v6514 = vpop.permute.xlu0 %6513
    %6515 = vrot.lane.b32.xlu0 %v6417, 8
    %v6516 = vpop.permute.xlu0 %6515
    %6517 = vrot.lane.b32.xlu0 %v6419, 8
    %v6518 = vpop.permute.xlu0 %6517
    %6519 = vrot.lane.b32.xlu0 %v6427, 8
    %v6520 = vpop.permute.xlu0 %6519
    %6521 = vrot.lane.b32.xlu0 %v6435, 8
    %v6522 = vpop.permute.xlu0 %6521
    %6523 = vrot.lane.b32.xlu0 %v6434, 8
    %v6524 = vpop.permute.xlu0 %6523
    %6525 = vrot.lane.b32.xlu0 %v6436, 8
    %v6526 = vpop.permute.xlu0 %6525
    %6527 = vrot.lane.b32.xlu0 %v6444, 8
    %v6528 = vpop.permute.xlu0 %6527
    %6529 = vrot.lane.b32.xlu0 %v6452, 8
    %v6530 = vpop.permute.xlu0 %6529
    %6531 = vrot.lane.b32.xlu0 %v6451, 8
    %v6532 = vpop.permute.xlu0 %6531
    %6533 = vrot.lane.b32.xlu0 %v6453, 8
    %v6534 = vpop.permute.xlu0 %6533
    %6535 = vrot.lane.b32.xlu0 %v6461, 8
    %v6536 = vpop.permute.xlu0 %6535
    %6537 = vrot.lane.b32.xlu0 %v6469, 8
    %v6538 = vpop.permute.xlu0 %6537
    %6539 = vrot.lane.b32.xlu0 %v6468, 8
    %v6540 = vpop.permute.xlu0 %6539
    %6541 = vrot.lane.b32.xlu0 %v6470, 8
    %v6542 = vpop.permute.xlu0 %6541
    %v6543 = vsel %vm2953, %v6540, %v6542
    %v6544 = vsel %vm2953, %v6538, %v6540
    %v6545 = vsel %vm2953, %v6536, %v6538
    %v6546 = vsel %vm2953, %v6534, %v6536
    %v6547 = vsel %vm2953, %v6532, %v6534
    %v6548 = vsel %vm2953, %v6530, %v6532
    %v6549 = vsel %vm2953, %v6528, %v6530
    %v6550 = vsel %vm2953, %v6526, %v6528
    %v6551 = vsel %vm2953, %v6524, %v6526
    %v6552 = vsel %vm2953, %v6522, %v6524
    %v6553 = vsel %vm2953, %v6520, %v6522
    %v6554 = vsel %vm2953, %v6518, %v6520
    %v6555 = vsel %vm2953, %v6516, %v6518
    %v6556 = vsel %vm2953, %v6514, %v6516
    %v6557 = vsel %vm2953, %v6512, %v6514
    %v6558 = vsel %vm2953, %v6510, %v6512
    %v6559 = vsel %vm2953, %v6508, %v6510
    %v6560 = vsel %vm2953, %v6506, %v6508
    %v6561 = vsel %vm2953, %v6504, %v6506
    %v6562 = vsel %vm2953, %v6502, %v6504
    %v6563 = vsel %vm2953, %v6500, %v6502
    %v6564 = vsel %vm2953, %v6498, %v6500
    %v6565 = vsel %vm2953, %v6496, %v6498
    %v6566 = vsel %vm2953, %v6542, %v6496
    %v6567 = vlaneseq
    %v6568 = vshrl.u32 %v6567, 7
    %v6569 = vsub.s32 3, %v6568
    %v6570 = vrot.slane %v101, %v6569
    %v6571 = vlaneseq
    %v6572 = vshrl.u32 %v6571, 7
    %v6573 = vsub.s32 3, %v6572
    %v6574 = vrot.slane %v102, %v6573
    %v6575 = vlaneseq
    %v6576 = vshrl.u32 %v6575, 7
    %v6577 = vsub.s32 3, %v6576
    %v6578 = vrot.slane %v103, %v6577
    %v6579 = vlaneseq
    %v6580 = vshrl.u32 %v6579, 7
    %v6581 = vsub.s32 3, %v6580
    %v6582 = vrot.slane %v104, %v6581
    %v6583 = vlaneseq
    %v6584 = vshrl.u32 %v6583, 7
    %v6585 = vsub.s32 3, %v6584
    %v6586 = vrot.slane %v105, %v6585
    %v6587 = vlaneseq
    %v6588 = vshrl.u32 %v6587, 7
    %v6589 = vsub.s32 3, %v6588
    %v6590 = vrot.slane %v106, %v6589
    %v6591 = vlaneseq
    %v6592 = vshrl.u32 %v6591, 7
    %v6593 = vsub.s32 3, %v6592
    %v6594 = vrot.slane %v107, %v6593
    %v6595 = vlaneseq
    %v6596 = vshrl.u32 %v6595, 7
    %v6597 = vsub.s32 3, %v6596
    %v6598 = vrot.slane %v108, %v6597
    %v6599 = vlaneseq
    %v6600 = vshrl.u32 %v6599, 7
    %v6601 = vsub.s32 3, %v6600
    %v6602 = vrot.slane %v109, %v6601
    %v6603 = vlaneseq
    %v6604 = vshrl.u32 %v6603, 7
    %v6605 = vsub.s32 3, %v6604
    %v6606 = vrot.slane %v110, %v6605
    %v6607 = vlaneseq
    %v6608 = vshrl.u32 %v6607, 7
    %v6609 = vsub.s32 3, %v6608
    %v6610 = vrot.slane %v111, %v6609
    %v6611 = vlaneseq
    %v6612 = vshrl.u32 %v6611, 7
    %v6613 = vsub.s32 3, %v6612
    %v6614 = vrot.slane %v112, %v6613
    %v6615 = vlaneseq
    %v6616 = vshrl.u32 %v6615, 7
    %v6617 = vsub.s32 3, %v6616
    %v6618 = vrot.slane %v113, %v6617
    %v6619 = vlaneseq
    %v6620 = vshrl.u32 %v6619, 7
    %v6621 = vsub.s32 3, %v6620
    %v6622 = vrot.slane %v114, %v6621
    %v6623 = vlaneseq
    %v6624 = vshrl.u32 %v6623, 7
    %v6625 = vsub.s32 3, %v6624
    %v6626 = vrot.slane %v115, %v6625
    %v6627 = vlaneseq
    %v6628 = vshrl.u32 %v6627, 7
    %v6629 = vsub.s32 3, %v6628
    %v6630 = vrot.slane %v116, %v6629
    %v6631 = vlaneseq
    %v6632 = vshrl.u32 %v6631, 7
    %v6633 = vsub.s32 3, %v6632
    %v6634 = vrot.slane %v117, %v6633
    %v6635 = vlaneseq
    %v6636 = vshrl.u32 %v6635, 7
    %v6637 = vsub.s32 3, %v6636
    %v6638 = vrot.slane %v118, %v6637
    %v6639 = vlaneseq
    %v6640 = vshrl.u32 %v6639, 7
    %v6641 = vsub.s32 3, %v6640
    %v6642 = vrot.slane %v119, %v6641
    %v6643 = vlaneseq
    %v6644 = vshrl.u32 %v6643, 7
    %v6645 = vsub.s32 3, %v6644
    %v6646 = vrot.slane %v120, %v6645
    %v6647 = vlaneseq
    %v6648 = vshrl.u32 %v6647, 7
    %v6649 = vsub.s32 3, %v6648
    %v6650 = vrot.slane %v121, %v6649
    %v6651 = vlaneseq
    %v6652 = vshrl.u32 %v6651, 7
    %v6653 = vsub.s32 3, %v6652
    %v6654 = vrot.slane %v122, %v6653
    %v6655 = vlaneseq
    %v6656 = vshrl.u32 %v6655, 7
    %v6657 = vsub.s32 3, %v6656
    %v6658 = vrot.slane %v123, %v6657
    %v6659 = vlaneseq
    %v6660 = vshrl.u32 %v6659, 7
    %v6661 = vsub.s32 3, %v6660
    %v6662 = vrot.slane %v124, %v6661
    %v6663 = vmul.f32 %v6566, %v6570
    %v6664 = vmul.f32 %v6565, %v6574
    %v6665 = vmul.f32 %v6564, %v6578
    %v6666 = vmul.f32 %v6563, %v6582
    %v6667 = vmul.f32 %v6562, %v6586
    %v6668 = vmul.f32 %v6561, %v6590
    %v6669 = vmul.f32 %v6560, %v6594
    %v6670 = vmul.f32 %v6559, %v6598
    %v6671 = vmul.f32 %v6558, %v6602
    %v6672 = vmul.f32 %v6557, %v6606
    %v6673 = vmul.f32 %v6556, %v6610
    %v6674 = vmul.f32 %v6555, %v6614
    %v6675 = vmul.f32 %v6554, %v6618
    %v6676 = vmul.f32 %v6553, %v6622
    %v6677 = vmul.f32 %v6552, %v6626
    %v6678 = vmul.f32 %v6551, %v6630
    %v6679 = vmul.f32 %v6550, %v6634
    %v6680 = vmul.f32 %v6549, %v6638
    %v6681 = vmul.f32 %v6548, %v6642
    %v6682 = vmul.f32 %v6547, %v6646
    %v6683 = vmul.f32 %v6546, %v6650
    %v6684 = vmul.f32 %v6545, %v6654
    %v6685 = vmul.f32 %v6544, %v6658
    %v6686 = vmul.f32 %v6543, %v6662
    %v6711 = vcombine.low %v6663, %v6664
    %v6712 = vcombine.low %v6665, %v6666
    %v6714 = vunpack.c.l.s4 1983009808
    %v6715 = vunpack.c.0.s8 %v6714
    %v6716 = vlaneseq
    %v6717 = vshrl.u32 %v6716, 7
    %v6718 = vsub.s32 %v6715, %v6717
    %v6719 = vrot.slane %v6711, %v6718
    %v6721 = vunpack.c.l.s4 1983009808
    %v6722 = vunpack.c.0.s8 %v6721
    %v6723 = vlaneseq
    %v6724 = vshrl.u32 %v6723, 7
    %v6725 = vsub.s32 %v6722, %v6724
    %v6726 = vrot.slane %v6712, %v6725
    %v6727 = vcombine.low %v6719, %v6726
    %v6728 = vcombine.low %v6667, %v6668
    %v6729 = vcombine.low %v6669, %v6670
    %v6731 = vunpack.c.l.s4 1983009808
    %v6732 = vunpack.c.0.s8 %v6731
    %v6733 = vlaneseq
    %v6734 = vshrl.u32 %v6733, 7
    %v6735 = vsub.s32 %v6732, %v6734
    %v6736 = vrot.slane %v6728, %v6735
    %v6738 = vunpack.c.l.s4 1983009808
    %v6739 = vunpack.c.0.s8 %v6738
    %v6740 = vlaneseq
    %v6741 = vshrl.u32 %v6740, 7
    %v6742 = vsub.s32 %v6739, %v6741
    %v6743 = vrot.slane %v6729, %v6742
    %v6744 = vcombine.low %v6736, %v6743
    %v6745 = vcombine.low %v6671, %v6672
    %v6746 = vcombine.low %v6673, %v6674
    %v6748 = vunpack.c.l.s4 1983009808
    %v6749 = vunpack.c.0.s8 %v6748
    %v6750 = vlaneseq
    %v6751 = vshrl.u32 %v6750, 7
    %v6752 = vsub.s32 %v6749, %v6751
    %v6753 = vrot.slane %v6745, %v6752
    %v6755 = vunpack.c.l.s4 1983009808
    %v6756 = vunpack.c.0.s8 %v6755
    %v6757 = vlaneseq
    %v6758 = vshrl.u32 %v6757, 7
    %v6759 = vsub.s32 %v6756, %v6758
    %v6760 = vrot.slane %v6746, %v6759
    %v6761 = vcombine.low %v6753, %v6760
    %v6762 = vcombine.low %v6675, %v6676
    %v6763 = vcombine.low %v6677, %v6678
    %v6765 = vunpack.c.l.s4 1983009808
    %v6766 = vunpack.c.0.s8 %v6765
    %v6767 = vlaneseq
    %v6768 = vshrl.u32 %v6767, 7
    %v6769 = vsub.s32 %v6766, %v6768
    %v6770 = vrot.slane %v6762, %v6769
    %v6772 = vunpack.c.l.s4 1983009808
    %v6773 = vunpack.c.0.s8 %v6772
    %v6774 = vlaneseq
    %v6775 = vshrl.u32 %v6774, 7
    %v6776 = vsub.s32 %v6773, %v6775
    %v6777 = vrot.slane %v6763, %v6776
    %v6778 = vcombine.low %v6770, %v6777
    %v6779 = vcombine.low %v6679, %v6680
    %v6780 = vcombine.low %v6681, %v6682
    %v6782 = vunpack.c.l.s4 1983009808
    %v6783 = vunpack.c.0.s8 %v6782
    %v6784 = vlaneseq
    %v6785 = vshrl.u32 %v6784, 7
    %v6786 = vsub.s32 %v6783, %v6785
    %v6787 = vrot.slane %v6779, %v6786
    %v6789 = vunpack.c.l.s4 1983009808
    %v6790 = vunpack.c.0.s8 %v6789
    %v6791 = vlaneseq
    %v6792 = vshrl.u32 %v6791, 7
    %v6793 = vsub.s32 %v6790, %v6792
    %v6794 = vrot.slane %v6780, %v6793
    %v6795 = vcombine.low %v6787, %v6794
    %v6796 = vcombine.low %v6683, %v6684
    %v6797 = vcombine.low %v6685, %v6686
    %v6799 = vunpack.c.l.s4 1983009808
    %v6800 = vunpack.c.0.s8 %v6799
    %v6801 = vlaneseq
    %v6802 = vshrl.u32 %v6801, 7
    %v6803 = vsub.s32 %v6800, %v6802
    %v6804 = vrot.slane %v6796, %v6803
    %v6806 = vunpack.c.l.s4 1983009808
    %v6807 = vunpack.c.0.s8 %v6806
    %v6808 = vlaneseq
    %v6809 = vshrl.u32 %v6808, 7
    %v6810 = vsub.s32 %v6807, %v6809
    %v6811 = vrot.slane %v6797, %v6810
    %v6812 = vcombine.low %v6804, %v6811
    %v6819 = vadd.f32 %v5895, %v6727
    %v6820 = vadd.f32 %v5896, %v6744
    %v6821 = vadd.f32 %v5897, %v6761
    %v6822 = vadd.f32 %v5898, %v6778
    %v6823 = vadd.f32 %v5899, %v6795
    %v6824 = vadd.f32 %v5900, %v6812
    %v6831 = vcombine.high %v6357, %v6357
    %v6833 = vunpack.c.l.s4 1983009808
    %v6834 = vunpack.c.0.s8 %v6833
    %v6835 = vlaneseq
    %v6836 = vshrl.u32 %v6835, 7
    %v6837 = vsub.s32 %v6834, %v6836
    %v6838 = vrot.slane %v6357, %v6837
    %v6840 = vunpack.c.l.s4 1983009808
    %v6841 = vunpack.c.0.s8 %v6840
    %v6842 = vlaneseq
    %v6843 = vshrl.u32 %v6842, 7
    %v6844 = vsub.s32 %v6841, %v6843
    %v6845 = vrot.slane %v6831, %v6844
    %v6846 = vcombine.high %v6838, %v6838
    %v6847 = vcombine.high %v6845, %v6845
    %v6848 = vcombine.high %v6358, %v6358
    %v6850 = vunpack.c.l.s4 1983009808
    %v6851 = vunpack.c.0.s8 %v6850
    %v6852 = vlaneseq
    %v6853 = vshrl.u32 %v6852, 7
    %v6854 = vsub.s32 %v6851, %v6853
    %v6855 = vrot.slane %v6358, %v6854
    %v6857 = vunpack.c.l.s4 1983009808
    %v6858 = vunpack.c.0.s8 %v6857
    %v6859 = vlaneseq
    %v6860 = vshrl.u32 %v6859, 7
    %v6861 = vsub.s32 %v6858, %v6860
    %v6862 = vrot.slane %v6848, %v6861
    %v6863 = vcombine.high %v6855, %v6855
    %v6864 = vcombine.high %v6862, %v6862
    %v6865 = vcombine.high %v6359, %v6359
    %v6867 = vunpack.c.l.s4 1983009808
    %v6868 = vunpack.c.0.s8 %v6867
    %v6869 = vlaneseq
    %v6870 = vshrl.u32 %v6869, 7
    %v6871 = vsub.s32 %v6868, %v6870
    %v6872 = vrot.slane %v6359, %v6871
    %v6874 = vunpack.c.l.s4 1983009808
    %v6875 = vunpack.c.0.s8 %v6874
    %v6876 = vlaneseq
    %v6877 = vshrl.u32 %v6876, 7
    %v6878 = vsub.s32 %v6875, %v6877
    %v6879 = vrot.slane %v6865, %v6878
    %v6880 = vcombine.high %v6872, %v6872
    %v6881 = vcombine.high %v6879, %v6879
    %v6882 = vcombine.high %v6360, %v6360
    %v6884 = vunpack.c.l.s4 1983009808
    %v6885 = vunpack.c.0.s8 %v6884
    %v6886 = vlaneseq
    %v6887 = vshrl.u32 %v6886, 7
    %v6888 = vsub.s32 %v6885, %v6887
    %v6889 = vrot.slane %v6360, %v6888
    %v6891 = vunpack.c.l.s4 1983009808
    %v6892 = vunpack.c.0.s8 %v6891
    %v6893 = vlaneseq
    %v6894 = vshrl.u32 %v6893, 7
    %v6895 = vsub.s32 %v6892, %v6894
    %v6896 = vrot.slane %v6882, %v6895
    %v6897 = vcombine.high %v6889, %v6889
    %v6898 = vcombine.high %v6896, %v6896
    %v6899 = vcombine.high %v6361, %v6361
    %v6901 = vunpack.c.l.s4 1983009808
    %v6902 = vunpack.c.0.s8 %v6901
    %v6903 = vlaneseq
    %v6904 = vshrl.u32 %v6903, 7
    %v6905 = vsub.s32 %v6902, %v6904
    %v6906 = vrot.slane %v6361, %v6905
    %v6908 = vunpack.c.l.s4 1983009808
    %v6909 = vunpack.c.0.s8 %v6908
    %v6910 = vlaneseq
    %v6911 = vshrl.u32 %v6910, 7
    %v6912 = vsub.s32 %v6909, %v6911
    %v6913 = vrot.slane %v6899, %v6912
    %v6914 = vcombine.high %v6906, %v6906
    %v6915 = vcombine.high %v6913, %v6913
    %v6916 = vcombine.high %v6362, %v6362
    %v6918 = vunpack.c.l.s4 1983009808
    %v6919 = vunpack.c.0.s8 %v6918
    %v6920 = vlaneseq
    %v6921 = vshrl.u32 %v6920, 7
    %v6922 = vsub.s32 %v6919, %v6921
    %v6923 = vrot.slane %v6362, %v6922
    %v6925 = vunpack.c.l.s4 1983009808
    %v6926 = vunpack.c.0.s8 %v6925
    %v6927 = vlaneseq
    %v6928 = vshrl.u32 %v6927, 7
    %v6929 = vsub.s32 %v6926, %v6928
    %v6930 = vrot.slane %v6916, %v6929
    %v6931 = vcombine.high %v6923, %v6923
    %v6932 = vcombine.high %v6930, %v6930
    %6957 = vrot.lane.b32.xlu0 %v6838, 120
    %v6958 = vpop.permute.xlu0 %6957
    %6959 = vrot.lane.b32.xlu0 %v6846, 120
    %v6960 = vpop.permute.xlu0 %6959
    %6961 = vrot.lane.b32.xlu0 %v6845, 120
    %v6962 = vpop.permute.xlu0 %6961
    %6963 = vrot.lane.b32.xlu0 %v6847, 120
    %v6964 = vpop.permute.xlu0 %6963
    %6965 = vrot.lane.b32.xlu0 %v6855, 120
    %v6966 = vpop.permute.xlu0 %6965
    %6967 = vrot.lane.b32.xlu0 %v6863, 120
    %v6968 = vpop.permute.xlu0 %6967
    %6969 = vrot.lane.b32.xlu0 %v6862, 120
    %v6970 = vpop.permute.xlu0 %6969
    %6971 = vrot.lane.b32.xlu0 %v6864, 120
    %v6972 = vpop.permute.xlu0 %6971
    %6973 = vrot.lane.b32.xlu0 %v6872, 120
    %v6974 = vpop.permute.xlu0 %6973
    %6975 = vrot.lane.b32.xlu0 %v6880, 120
    %v6976 = vpop.permute.xlu0 %6975
    %6977 = vrot.lane.b32.xlu0 %v6879, 120
    %v6978 = vpop.permute.xlu0 %6977
    %6979 = vrot.lane.b32.xlu0 %v6881, 120
    %v6980 = vpop.permute.xlu0 %6979
    %6981 = vrot.lane.b32.xlu0 %v6889, 120
    %v6982 = vpop.permute.xlu0 %6981
    %6983 = vrot.lane.b32.xlu0 %v6897, 120
    %v6984 = vpop.permute.xlu0 %6983
    %6985 = vrot.lane.b32.xlu0 %v6896, 120
    %v6986 = vpop.permute.xlu0 %6985
    %6987 = vrot.lane.b32.xlu0 %v6898, 120
    %v6988 = vpop.permute.xlu0 %6987
    %6989 = vrot.lane.b32.xlu0 %v6906, 120
    %v6990 = vpop.permute.xlu0 %6989
    %6991 = vrot.lane.b32.xlu0 %v6914, 120
    %v6992 = vpop.permute.xlu0 %6991
    %6993 = vrot.lane.b32.xlu0 %v6913, 120
    %v6994 = vpop.permute.xlu0 %6993
    %6995 = vrot.lane.b32.xlu0 %v6915, 120
    %v6996 = vpop.permute.xlu0 %6995
    %6997 = vrot.lane.b32.xlu0 %v6923, 120
    %v6998 = vpop.permute.xlu0 %6997
    %6999 = vrot.lane.b32.xlu0 %v6931, 120
    %v7000 = vpop.permute.xlu0 %6999
    %7001 = vrot.lane.b32.xlu0 %v6930, 120
    %v7002 = vpop.permute.xlu0 %7001
    %7003 = vrot.lane.b32.xlu0 %v6932, 120
    %v7004 = vpop.permute.xlu0 %7003
    %v7005 = vsel %vm3416, %v7002, %v7004
    %v7006 = vsel %vm3416, %v7000, %v7002
    %v7007 = vsel %vm3416, %v6998, %v7000
    %v7008 = vsel %vm3416, %v6996, %v6998
    %v7009 = vsel %vm3416, %v6994, %v6996
    %v7010 = vsel %vm3416, %v6992, %v6994
    %v7011 = vsel %vm3416, %v6990, %v6992
    %v7012 = vsel %vm3416, %v6988, %v6990
    %v7013 = vsel %vm3416, %v6986, %v6988
    %v7014 = vsel %vm3416, %v6984, %v6986
    %v7015 = vsel %vm3416, %v6982, %v6984
    %v7016 = vsel %vm3416, %v6980, %v6982
    %v7017 = vsel %vm3416, %v6978, %v6980
    %v7018 = vsel %vm3416, %v6976, %v6978
    %v7019 = vsel %vm3416, %v6974, %v6976
    %v7020 = vsel %vm3416, %v6972, %v6974
    %v7021 = vsel %vm3416, %v6970, %v6972
    %v7022 = vsel %vm3416, %v6968, %v6970
    %v7023 = vsel %vm3416, %v6966, %v6968
    %v7024 = vsel %vm3416, %v6964, %v6966
    %v7025 = vsel %vm3416, %v6962, %v6964
    %v7026 = vsel %vm3416, %v6960, %v6962
    %v7027 = vsel %vm3416, %v6958, %v6960
    %v7028 = vsel %vm3416, %v7004, %v6958
    %v7029 = vlaneseq
    %v7030 = vshrl.u32 %v7029, 7
    %v7031 = vsub.s32 7, %v7030
    %v7032 = vrot.slane %v101, %v7031
    %v7033 = vlaneseq
    %v7034 = vshrl.u32 %v7033, 7
    %v7035 = vsub.s32 7, %v7034
    %v7036 = vrot.slane %v102, %v7035
    %v7037 = vlaneseq
    %v7038 = vshrl.u32 %v7037, 7
    %v7039 = vsub.s32 7, %v7038
    %v7040 = vrot.slane %v103, %v7039
    %v7041 = vlaneseq
    %v7042 = vshrl.u32 %v7041, 7
    %v7043 = vsub.s32 7, %v7042
    %v7044 = vrot.slane %v104, %v7043
    %v7045 = vlaneseq
    %v7046 = vshrl.u32 %v7045, 7
    %v7047 = vsub.s32 7, %v7046
    %v7048 = vrot.slane %v105, %v7047
    %v7049 = vlaneseq
    %v7050 = vshrl.u32 %v7049, 7
    %v7051 = vsub.s32 7, %v7050
    %v7052 = vrot.slane %v106, %v7051
    %v7053 = vlaneseq
    %v7054 = vshrl.u32 %v7053, 7
    %v7055 = vsub.s32 7, %v7054
    %v7056 = vrot.slane %v107, %v7055
    %v7057 = vlaneseq
    %v7058 = vshrl.u32 %v7057, 7
    %v7059 = vsub.s32 7, %v7058
    %v7060 = vrot.slane %v108, %v7059
    %v7061 = vlaneseq
    %v7062 = vshrl.u32 %v7061, 7
    %v7063 = vsub.s32 7, %v7062
    %v7064 = vrot.slane %v109, %v7063
    %v7065 = vlaneseq
    %v7066 = vshrl.u32 %v7065, 7
    %v7067 = vsub.s32 7, %v7066
    %v7068 = vrot.slane %v110, %v7067
    %v7069 = vlaneseq
    %v7070 = vshrl.u32 %v7069, 7
    %v7071 = vsub.s32 7, %v7070
    %v7072 = vrot.slane %v111, %v7071
    %v7073 = vlaneseq
    %v7074 = vshrl.u32 %v7073, 7
    %v7075 = vsub.s32 7, %v7074
    %v7076 = vrot.slane %v112, %v7075
    %v7077 = vlaneseq
    %v7078 = vshrl.u32 %v7077, 7
    %v7079 = vsub.s32 7, %v7078
    %v7080 = vrot.slane %v113, %v7079
    %v7081 = vlaneseq
    %v7082 = vshrl.u32 %v7081, 7
    %v7083 = vsub.s32 7, %v7082
    %v7084 = vrot.slane %v114, %v7083
    %v7085 = vlaneseq
    %v7086 = vshrl.u32 %v7085, 7
    %v7087 = vsub.s32 7, %v7086
    %v7088 = vrot.slane %v115, %v7087
    %v7089 = vlaneseq
    %v7090 = vshrl.u32 %v7089, 7
    %v7091 = vsub.s32 7, %v7090
    %v7092 = vrot.slane %v116, %v7091
    %v7093 = vlaneseq
    %v7094 = vshrl.u32 %v7093, 7
    %v7095 = vsub.s32 7, %v7094
    %v7096 = vrot.slane %v117, %v7095
    %v7097 = vlaneseq
    %v7098 = vshrl.u32 %v7097, 7
    %v7099 = vsub.s32 7, %v7098
    %v7100 = vrot.slane %v118, %v7099
    %v7101 = vlaneseq
    %v7102 = vshrl.u32 %v7101, 7
    %v7103 = vsub.s32 7, %v7102
    %v7104 = vrot.slane %v119, %v7103
    %v7105 = vlaneseq
    %v7106 = vshrl.u32 %v7105, 7
    %v7107 = vsub.s32 7, %v7106
    %v7108 = vrot.slane %v120, %v7107
    %v7109 = vlaneseq
    %v7110 = vshrl.u32 %v7109, 7
    %v7111 = vsub.s32 7, %v7110
    %v7112 = vrot.slane %v121, %v7111
    %v7113 = vlaneseq
    %v7114 = vshrl.u32 %v7113, 7
    %v7115 = vsub.s32 7, %v7114
    %v7116 = vrot.slane %v122, %v7115
    %v7117 = vlaneseq
    %v7118 = vshrl.u32 %v7117, 7
    %v7119 = vsub.s32 7, %v7118
    %v7120 = vrot.slane %v123, %v7119
    %v7121 = vlaneseq
    %v7122 = vshrl.u32 %v7121, 7
    %v7123 = vsub.s32 7, %v7122
    %v7124 = vrot.slane %v124, %v7123
    %v7125 = vmul.f32 %v7027, %v7032
    %v7126 = vmul.f32 %v7026, %v7036
    %v7127 = vmul.f32 %v7025, %v7040
    %v7128 = vmul.f32 %v7024, %v7044
    %v7129 = vmul.f32 %v7023, %v7048
    %v7130 = vmul.f32 %v7022, %v7052
    %v7131 = vmul.f32 %v7021, %v7056
    %v7132 = vmul.f32 %v7020, %v7060
    %v7133 = vmul.f32 %v7019, %v7064
    %v7134 = vmul.f32 %v7018, %v7068
    %v7135 = vmul.f32 %v7017, %v7072
    %v7136 = vmul.f32 %v7016, %v7076
    %v7137 = vmul.f32 %v7015, %v7080
    %v7138 = vmul.f32 %v7014, %v7084
    %v7139 = vmul.f32 %v7013, %v7088
    %v7140 = vmul.f32 %v7012, %v7092
    %v7141 = vmul.f32 %v7011, %v7096
    %v7142 = vmul.f32 %v7010, %v7100
    %v7143 = vmul.f32 %v7009, %v7104
    %v7144 = vmul.f32 %v7008, %v7108
    %v7145 = vmul.f32 %v7007, %v7112
    %v7146 = vmul.f32 %v7006, %v7116
    %v7147 = vmul.f32 %v7005, %v7120
    %v7148 = vmul.f32 %v7028, %v7124
    %v7173 = vcombine.low %v7125, %v7126
    %v7174 = vcombine.low %v7127, %v7128
    %v7176 = vunpack.c.l.s4 1983009808
    %v7177 = vunpack.c.0.s8 %v7176
    %v7178 = vlaneseq
    %v7179 = vshrl.u32 %v7178, 7
    %v7180 = vsub.s32 %v7177, %v7179
    %v7181 = vrot.slane %v7173, %v7180
    %v7183 = vunpack.c.l.s4 1983009808
    %v7184 = vunpack.c.0.s8 %v7183
    %v7185 = vlaneseq
    %v7186 = vshrl.u32 %v7185, 7
    %v7187 = vsub.s32 %v7184, %v7186
    %v7188 = vrot.slane %v7174, %v7187
    %v7189 = vcombine.low %v7181, %v7188
    %v7190 = vcombine.low %v7129, %v7130
    %v7191 = vcombine.low %v7131, %v7132
    %v7193 = vunpack.c.l.s4 1983009808
    %v7194 = vunpack.c.0.s8 %v7193
    %v7195 = vlaneseq
    %v7196 = vshrl.u32 %v7195, 7
    %v7197 = vsub.s32 %v7194, %v7196
    %v7198 = vrot.slane %v7190, %v7197
    %v7200 = vunpack.c.l.s4 1983009808
    %v7201 = vunpack.c.0.s8 %v7200
    %v7202 = vlaneseq
    %v7203 = vshrl.u32 %v7202, 7
    %v7204 = vsub.s32 %v7201, %v7203
    %v7205 = vrot.slane %v7191, %v7204
    %v7206 = vcombine.low %v7198, %v7205
    %v7207 = vcombine.low %v7133, %v7134
    %v7208 = vcombine.low %v7135, %v7136
    %v7210 = vunpack.c.l.s4 1983009808
    %v7211 = vunpack.c.0.s8 %v7210
    %v7212 = vlaneseq
    %v7213 = vshrl.u32 %v7212, 7
    %v7214 = vsub.s32 %v7211, %v7213
    %v7215 = vrot.slane %v7207, %v7214
    %v7217 = vunpack.c.l.s4 1983009808
    %v7218 = vunpack.c.0.s8 %v7217
    %v7219 = vlaneseq
    %v7220 = vshrl.u32 %v7219, 7
    %v7221 = vsub.s32 %v7218, %v7220
    %v7222 = vrot.slane %v7208, %v7221
    %v7223 = vcombine.low %v7215, %v7222
    %v7224 = vcombine.low %v7137, %v7138
    %v7225 = vcombine.low %v7139, %v7140
    %v7227 = vunpack.c.l.s4 1983009808
    %v7228 = vunpack.c.0.s8 %v7227
    %v7229 = vlaneseq
    %v7230 = vshrl.u32 %v7229, 7
    %v7231 = vsub.s32 %v7228, %v7230
    %v7232 = vrot.slane %v7224, %v7231
    %v7234 = vunpack.c.l.s4 1983009808
    %v7235 = vunpack.c.0.s8 %v7234
    %v7236 = vlaneseq
    %v7237 = vshrl.u32 %v7236, 7
    %v7238 = vsub.s32 %v7235, %v7237
    %v7239 = vrot.slane %v7225, %v7238
    %v7240 = vcombine.low %v7232, %v7239
    %v7241 = vcombine.low %v7141, %v7142
    %v7242 = vcombine.low %v7143, %v7144
    %v7244 = vunpack.c.l.s4 1983009808
    %v7245 = vunpack.c.0.s8 %v7244
    %v7246 = vlaneseq
    %v7247 = vshrl.u32 %v7246, 7
    %v7248 = vsub.s32 %v7245, %v7247
    %v7249 = vrot.slane %v7241, %v7248
    %v7251 = vunpack.c.l.s4 1983009808
    %v7252 = vunpack.c.0.s8 %v7251
    %v7253 = vlaneseq
    %v7254 = vshrl.u32 %v7253, 7
    %v7255 = vsub.s32 %v7252, %v7254
    %v7256 = vrot.slane %v7242, %v7255
    %v7257 = vcombine.low %v7249, %v7256
    %v7258 = vcombine.low %v7145, %v7146
    %v7259 = vcombine.low %v7147, %v7148
    %v7261 = vunpack.c.l.s4 1983009808
    %v7262 = vunpack.c.0.s8 %v7261
    %v7263 = vlaneseq
    %v7264 = vshrl.u32 %v7263, 7
    %v7265 = vsub.s32 %v7262, %v7264
    %v7266 = vrot.slane %v7258, %v7265
    %v7268 = vunpack.c.l.s4 1983009808
    %v7269 = vunpack.c.0.s8 %v7268
    %v7270 = vlaneseq
    %v7271 = vshrl.u32 %v7270, 7
    %v7272 = vsub.s32 %v7269, %v7271
    %v7273 = vrot.slane %v7259, %v7272
    %v7274 = vcombine.low %v7266, %v7273
    %v7281 = vadd.f32 %v6357, %v7189
    %v7282 = vadd.f32 %v6358, %v7206
    %v7283 = vadd.f32 %v6359, %v7223
    %v7284 = vadd.f32 %v6360, %v7240
    %v7285 = vadd.f32 %v6361, %v7257
    %v7286 = vadd.f32 %v6362, %v7274
    %v7287 = vadd.f32 %v6819, %v7281
    %v7288 = vadd.f32 %v6820, %v7282
    %v7289 = vadd.f32 %v6821, %v7283
    %v7290 = vadd.f32 %v6822, %v7284
    %v7291 = vadd.f32 %v6823, %v7285
    %v7292 = vadd.f32 %v6824, %v7286
    %v7293 = vsub.f32 %v7287, %v3712
    %v7294 = vsub.f32 %v7288, %v3714
    %v7295 = vsub.f32 %v7289, %v3716
    %v7296 = vsub.f32 %v7290, %v3718
    %v7297 = vsub.f32 %v7291, %v3720
    %v7298 = vsub.f32 %v7292, %v3722
    %v7299 = vrcp.pop %v7293
    %v7300 = vmul.f32 %v3712, %v7299
    %v7301 = vrcp.pop %v7294
    %v7302 = vmul.f32 %v3714, %v7301
    %v7303 = vrcp.pop %v7295
    %v7304 = vmul.f32 %v3716, %v7303
    %v7305 = vrcp.pop %v7296
    %v7306 = vmul.f32 %v3718, %v7305
    %v7307 = vrcp.pop %v7297
    %v7308 = vmul.f32 %v3720, %v7307
    %v7309 = vrcp.pop %v7298
    %v7310 = vmul.f32 %v3722, %v7309
    %7311 = vst [vmem:[#allocation9] sm:$0xff] %v7300
    %7312 = vst [vmem:[#allocation9 + $0x8] sm:$0xff] %v7302
    %7313 = vst [vmem:[#allocation9 + $0x10] sm:$0xff] %v7304
    %7314 = vst [vmem:[#allocation9 + $0x18] sm:$0xff] %v7306
    %7315 = vst [vmem:[#allocation9 + $0x20] sm:$0xff] %v7308
    %7316 = vst.msk [vmem:[#allocation9 + $0x28] sm:$0xff] %vm67, %v7310
    // Predicated region
    $region26: #{tpu_custom_call.1} parent=1 // pred_check
      _
    $region27: #{tpu_custom_call.1} parent=1 // pred_check_branch
      %7318 = sbr.rel (0) target = $region29
    $region28: #{tpu_custom_call.1} parent=1 // pred_region
      %s7320 = ssub.s32 768, 768
      %7321 = vsyncadd [#allocation5], %s7320
      %s7323 = sshll.u32 [#allocation9], 4
      %s7324 = int_to_ptr.vmem [resolvable:$true] %s7323
      %7326 = dma.vmem_to_hbm [thread:$0]  %s7324, 768, %s3, [#allocation5]
    $region29: #{tpu_custom_call.1} parent=1 // pred_fallthru
      _
    // Predicated region
    $region30: #{tpu_custom_call.1} parent=1 // pred_check
      _
    $region31: #{tpu_custom_call.1} parent=1 // pred_check_branch
      %7328 = sbr.rel (0) target = $region33
    $region32: #{tpu_custom_call.1} parent=1 // pred_region
      %7329 = dma.done [#allocation5], 768
    $region33: #{tpu_custom_call.1} parent=1 // pred_fallthru
      _
    %7330 = vsyncpa [#allocation4], 1
    %7331 = vsyncpa [#allocation7], 1
    %7332 = vsyncpa [#allocation5], 1

</llo_original>
